<compile_context>
chip_gen: v7x
topology: tpu7x:2x2x1
jax: 0.10.0
libtpu: 0.0.40
codegen_flags: <defaults>
</compile_context>

<pallas_src>
import functools

import jax
import jax.numpy as jnp
from jax.experimental import pallas as pl
from jax.experimental.pallas import tpu as pltpu

PATCH = 8
_VMEM_LIMIT = 48 * 1024 * 1024  # safe for v7x's 64 MiB physical VMEM


def _round_up(x, m):
    return ((x + m - 1) // m) * m


def _pad_to(x, shape):
    pads = [(0, t - s) for t, s in zip(shape, x.shape)]
    if all(p == (0, 0) for p in pads):
        return x
    return jnp.pad(x, pads)


# ----------------------------------------------------------------------------
# Tiled linear (matmul + bias + optional tanh); bf16 MXU operands, f32 acc.
# ----------------------------------------------------------------------------
def _matmul_kernel(x_ref, w_ref, b_ref, o_ref, acc_ref, *, activation):
    k = pl.program_id(2)

    @pl.when(k == 0)
    def _():
        acc_ref[...] = jnp.zeros_like(acc_ref)

    acc_ref[...] += jnp.dot(x_ref[...].astype(jnp.bfloat16),
                            w_ref[...].astype(jnp.bfloat16),
                            preferred_element_type=jnp.float32)

    @pl.when(k == pl.num_programs(2) - 1)
    def _():
        y = acc_ref[...] + b_ref[...]
        if activation == "tanh":
            y = jnp.tanh(y)
        o_ref[...] = y.astype(o_ref.dtype)


def linear_pallas(x, w, b, activation=None, *, tm=256, tn=512, tk=512):
    m, k = x.shape
    k2, n = w.shape
    assert k == k2
    # Lane/sublane aligned tiles (multiples of (8, 128)); shrink for small dims.
    tm = min(tm, _round_up(m, 8))
    tn = min(tn, _round_up(n, 128))
    tk = min(tk, _round_up(k, 128))
    mp, np_, kp = _round_up(m, tm), _round_up(n, tn), _round_up(k, tk)

    x_p = _pad_to(x, (mp, kp))
    w_p = _pad_to(w, (kp, np_))
    b_p = _pad_to(b.reshape(1, n), (1, np_))

    out = pl.pallas_call(
        functools.partial(_matmul_kernel, activation=activation),
        out_shape=jax.ShapeDtypeStruct((mp, np_), jnp.float32),
        grid=(mp // tm, np_ // tn, kp // tk),
        in_specs=[
            pl.BlockSpec((tm, tk), lambda i, j, kk: (i, kk)),
            pl.BlockSpec((tk, tn), lambda i, j, kk: (kk, j)),
            pl.BlockSpec((1, tn), lambda i, j, kk: (0, j)),
        ],
        out_specs=pl.BlockSpec((tm, tn), lambda i, j, kk: (i, j)),
        scratch_shapes=[pltpu.VMEM((tm, tn), jnp.float32)],
        compiler_params=pltpu.CompilerParams(
            dimension_semantics=("parallel", "parallel", "arbitrary"),
            vmem_limit_bytes=_VMEM_LIMIT),
    )(x_p, w_p, b_p)
    return out[:m, :n]


# ----------------------------------------------------------------------------
# Fused ImageEncoder: patchify-conv matmul + Linear + tanh in one kernel.
# Single grid axis over rows -> the first matmul is computed exactly once per
# row tile (no per-output-tile recompute); "vgg" never round-trips HBM.
# ----------------------------------------------------------------------------
def _img_enc_kernel(p_ref, cw_ref, cb_ref, fw_ref, fb_ref, o_ref):
    # p: (tm, K1p), cw: (K1p, Cvp), cb: (1, Cvp), fw: (Cvp, Fp), fb: (1, Fp)
    vgg = jnp.dot(p_ref[...].astype(jnp.bfloat16),
                  cw_ref[...].astype(jnp.bfloat16),
                  preferred_element_type=jnp.float32) + cb_ref[...]
    y = jnp.dot(vgg.astype(jnp.bfloat16),
                fw_ref[...].astype(jnp.bfloat16),
                preferred_element_type=jnp.float32) + fb_ref[...]
    o_ref[...] = jnp.tanh(y).astype(o_ref.dtype)


def image_encoder_pallas(patches, conv_w, conv_b, fc_w, fc_b, *, tm=256):
    m, k1 = patches.shape
    cv = conv_w.shape[1]
    feat = fc_w.shape[1]

    k1p = _round_up(k1, 128)          # 192 -> 256: unmasked lane loads
    cvp = _round_up(cv, 128)
    fp = _round_up(feat, 128)
    tm = min(tm, _round_up(m, 8))
    mp = _round_up(m, tm)

    p_p = _pad_to(patches, (mp, k1p))
    cw_p = _pad_to(conv_w, (k1p, cvp))
    cb_p = _pad_to(conv_b.reshape(1, cv), (1, cvp))
    fw_p = _pad_to(fc_w, (cvp, fp))
    fb_p = _pad_to(fc_b.reshape(1, feat), (1, fp))

    out = pl.pallas_call(
        _img_enc_kernel,
        out_shape=jax.ShapeDtypeStruct((mp, fp), jnp.float32),
        grid=(mp // tm,),
        in_specs=[
            pl.BlockSpec((tm, k1p), lambda i: (i, 0)),
            pl.BlockSpec((k1p, cvp), lambda i: (0, 0)),
            pl.BlockSpec((1, cvp), lambda i: (0, 0)),
            pl.BlockSpec((cvp, fp), lambda i: (0, 0)),
            pl.BlockSpec((1, fp), lambda i: (0, 0)),
        ],
        out_specs=pl.BlockSpec((tm, fp), lambda i: (i, 0)),
        compiler_params=pltpu.CompilerParams(
            dimension_semantics=("parallel",),
            vmem_limit_bytes=_VMEM_LIMIT),
    )(p_p, cw_p, cb_p, fw_p, fb_p)
    return out[:m, :feat]


# ----------------------------------------------------------------------------
# LSTM recurrence.  Input projection X @ W_ih + b is precomputed by
# linear_pallas and kept in its natural (N, T*4H) layout (no host transpose).
# Batch axis is tiled ("parallel"); only a (bn, 4H) gate slice is read per
# timestep; h @ W_hh runs in bf16 on the MXU.
# ----------------------------------------------------------------------------
def _lstm_rec_kernel(g_ref, whh_ref, h_ref, *, seq_len):
    bn = g_ref.shape[0]
    h_dim, g4 = whh_ref.shape
    whh_bf16 = whh_ref[...].astype(jnp.bfloat16)

    def step(t, carry):
        h, c = carry
        off = pl.multiple_of(t * g4, 128)
        g_t = g_ref[:, pl.ds(off, g4)]                        # (bn, 4H) f32
        gates = g_t + jnp.dot(h.astype(jnp.bfloat16), whh_bf16,
                              preferred_element_type=jnp.float32)
        # PyTorch LSTM gate order: i, f, g, o
        i_g = jax.nn.sigmoid(gates[:, 0 * h_dim:1 * h_dim])
        f_g = jax.nn.sigmoid(gates[:, 1 * h_dim:2 * h_dim])
        g_g = jnp.tanh(gates[:, 2 * h_dim:3 * h_dim])
        o_g = jax.nn.sigmoid(gates[:, 3 * h_dim:4 * h_dim])
        c_new = f_g * c + i_g * g_g
        h_new = o_g * jnp.tanh(c_new)
        return h_new, c_new

    h0 = jnp.zeros((bn, h_dim), jnp.float32)
    c0 = jnp.zeros((bn, h_dim), jnp.float32)
    h_final, _ = jax.lax.fori_loop(0, seq_len, step, (h0, c0))
    h_ref[...] = h_final.astype(h_ref.dtype)


def lstm_last_hidden_pallas(gates_flat, w_hh, seq_len, *, bn=64):
    # gates_flat: (N, T*4H) ; w_hh: (H, 4H)
    n, tg4 = gates_flat.shape
    h_dim = w_hh.shape[0]
    bn = min(bn, _round_up(n, 8))
    np_ = _round_up(n, bn)
    g_p = _pad_to(gates_flat, (np_, tg4))

    out = pl.pallas_call(
        functools.partial(_lstm_rec_kernel, seq_len=seq_len),
        out_shape=jax.ShapeDtypeStruct((np_, h_dim), jnp.float32),
        grid=(np_ // bn,),
        in_specs=[
            pl.BlockSpec((bn, tg4), lambda i: (i, 0)),
            pl.BlockSpec((h_dim, 4 * h_dim), lambda i: (0, 0)),
        ],
        out_specs=pl.BlockSpec((bn, h_dim), lambda i: (i, 0)),
        compiler_params=pltpu.CompilerParams(
            dimension_semantics=("parallel",),
            vmem_limit_bytes=_VMEM_LIMIT),
    )(g_p, w_hh)
    return out[:n]


# ----------------------------------------------------------------------------
# Fused stacked attention: all n_stacks in one kernel, img resident in VMEM,
# batch axis tiled ("parallel").  hi/hq through the MXU in bf16; scores via
# VPU multiply + lane reduce (no (M,1) matmul / relayout); region weighted
# sum via broadcast-mul + sublane reduce; softmax/tanh in f32.
# ----------------------------------------------------------------------------
def _stacked_attention_kernel(img_ref, u_ref, wi_ref, bi_ref, wq_ref, bq_ref,
                              wa_ref, ba_ref, out_ref, *, n_stacks):
    img = img_ref[...]                              # (bb, R, F) f32
    u = u_ref[...].astype(jnp.float32)              # (bb, F)
    bb, r, f = img.shape
    h = wi_ref.shape[2]
    img2_bf16 = img.reshape(bb * r, f).astype(jnp.bfloat16)

    for s in range(n_stacks):                       # static, small
        hi = jnp.dot(img2_bf16, wi_ref[s].astype(jnp.bfloat16),
                     preferred_element_type=jnp.float32)
        hi = hi.reshape(bb, r, h) + bi_ref[s]                         # (bb,R,H)
        hq = jnp.dot(u.astype(jnp.bfloat16), wq_ref[s].astype(jnp.bfloat16),
                     preferred_element_type=jnp.float32) + bq_ref[s]  # (bb,H)
        ha = jnp.tanh(hi + hq[:, None, :])                            # (bb,R,H)

        # scores: VPU mul + lane reduce, lands (bb, R) directly (no relayout)
        scores = jnp.sum(ha * wa_ref[s], axis=-1) + ba_ref[s]         # (bb,R)
        m = jnp.max(scores, axis=-1, keepdims=True)
        e = jnp.exp(scores - m)
        p = e / jnp.sum(e, axis=-1, keepdims=True)                    # softmax R

        # weighted sum over regions: broadcast mul + sublane reduce (f32)
        v = jnp.sum(p[:, :, None] * img, axis=1)                      # (bb, F)
        u = v + u

    out_ref[...] = u.astype(out_ref.dtype)


def stacked_attention_pallas(img_feat, u, wi_all, bi_all, wq_all, bq_all,
                             wa_all, ba_all, *, bb=32):
    n, r, f = img_feat.shape
    s, _, h = wi_all.shape
    bb = min(bb, _round_up(n, 8))
    np_ = _round_up(n, bb)

    img_p = _pad_to(img_feat, (np_, r, f))
    u_p = _pad_to(u, (np_, f))

    out = pl.pallas_call(
        functools.partial(_stacked_attention_kernel, n_stacks=s),
        out_shape=jax.ShapeDtypeStruct((np_, f), jnp.float32),
        grid=(np_ // bb,),
        in_specs=[
            pl.BlockSpec((bb, r, f), lambda i: (i, 0, 0)),
            pl.BlockSpec((bb, f), lambda i: (i, 0)),
            pl.BlockSpec((s, f, h), lambda i: (0, 0, 0)),
            pl.BlockSpec((s, 1, h), lambda i: (0, 0, 0)),
            pl.BlockSpec((s, f, h), lambda i: (0, 0, 0)),
            pl.BlockSpec((s, 1, h), lambda i: (0, 0, 0)),
            pl.BlockSpec((s, 1, h), lambda i: (0, 0, 0)),
            pl.BlockSpec(memory_space=pltpu.MemorySpace.SMEM),  # ba: (s,) scalars
        ],
        out_specs=pl.BlockSpec((bb, f), lambda i: (i, 0)),
        compiler_params=pltpu.CompilerParams(
            dimension_semantics=("parallel",),
            vmem_limit_bytes=_VMEM_LIMIT),
    )(img_p, u_p, wi_all, bi_all, wq_all, bq_all, wa_all, ba_all)
    return out[:n]


# ----------------------------------------------------------------------------
# SAN forward (glue around the Pallas kernels)
# ----------------------------------------------------------------------------
def san_forward(img, ques, params):
    n, c, hh, ww = img.shape
    rh, rw = hh // PATCH, ww // PATCH
    r = rh * rw

    # ---- ImageEncoder ----
    # TODO(synk): pretrained VGG16 feature backbone has no clean Pallas
    # equivalent; approximated by a single patchify conv (im2col + matmul).
    patches = img.reshape(n, c, rh, PATCH, rw, PATCH)
    patches = patches.transpose(0, 2, 4, 1, 3, 5).reshape(n * r, c * PATCH * PATCH)
    img_feat = image_encoder_pallas(patches, params["conv_w"], params["conv_b"],
                                    params["imgfc_w"], params["imgfc_b"])
    img_feat = img_feat.reshape(n, r, -1)                                 # (N, R, feat)

    # ---- QuestionEncoder ----
    emb = jnp.tanh(jnp.take(params["embed"], ques, axis=0))               # (N, T, E)
    t = emb.shape[1]
    # Input projection hoisted out of the recurrence: one big tiled matmul.
    gates_in = linear_pallas(emb.reshape(n * t, -1),
                             params["lstm_wih"], params["lstm_b"])        # (N*T, 4H)
    gates_flat = gates_in.reshape(n, -1)                                  # (N, T*4H), free reshape
    u = lstm_last_hidden_pallas(gates_flat, params["lstm_whh"], t)        # (N, feat)

    # ---- Stacked attention (fused across stacks) ----
    att = params["att"]
    wi_all = jnp.stack([l["wi"] for l in att])                            # (S, F, H)
    bi_all = jnp.stack([l["bi"][None, :] for l in att])                   # (S, 1, H)
    wq_all = jnp.stack([l["wq"] for l in att])                            # (S, F, H)
    bq_all = jnp.stack([l["bq"][None, :] for l in att])                   # (S, 1, H)
    wa_all = jnp.stack([l["wa"][None, :] for l in att])                   # (S, 1, H)
    ba_all = jnp.stack([l["ba"][0] for l in att])                         # (S,)
    u = stacked_attention_pallas(img_feat, u, wi_all, bi_all, wq_all,
                                 bq_all, wa_all, ba_all)

    # ---- Prediction ----
    return linear_pallas(u, params["pred_w"], params["pred_b"])           # (N, vocab)


def init_params(key, *, feat_dim, vocab_size, embed_size, n_stacks,
                hidden_dim_img, cvgg):
    def unif(k, shape, scale=0.1):
        return jax.random.uniform(k, shape, jnp.float32, -scale, scale)

    keys = iter(jax.random.split(key, 64))
    params = {
        "conv_w": unif(next(keys), (3 * PATCH * PATCH, cvgg)),
        "conv_b": unif(next(keys), (cvgg,)),
        "imgfc_w": unif(next(keys), (cvgg, feat_dim)),
        "imgfc_b": unif(next(keys), (feat_dim,)),
        "embed": unif(next(keys), (vocab_size, embed_size)),
        "lstm_wih": unif(next(keys), (embed_size, 4 * feat_dim)),
        "lstm_whh": unif(next(keys), (feat_dim, 4 * feat_dim)),
        "lstm_b": unif(next(keys), (4 * feat_dim,)),  # b_ih + b_hh combined
        "pred_w": unif(next(keys), (feat_dim, vocab_size)),
        "pred_b": unif(next(keys), (vocab_size,)),
        "att": [],
    }
    for _ in range(n_stacks):
        params["att"].append({
            "wi": unif(next(keys), (feat_dim, hidden_dim_img)),
            "bi": unif(next(keys), (hidden_dim_img,)),
            "wq": unif(next(keys), (feat_dim, hidden_dim_img)),
            "bq": unif(next(keys), (hidden_dim_img,)),
            "wa": unif(next(keys), (hidden_dim_img,)),
            "ba": unif(next(keys), (1,)),
        })
    return params


if __name__ == "__main__":
    # Small, deterministic, lane-aligned configuration.
    N, SEQ = 2, 8
    FEAT_DIM, VOCAB, EMBED = 128, 256, 64
    N_STACKS, HIDDEN_IMG, CVGG = 2, 128, 128
    IMG_HW = 32  # stand-in for 448; PATCH=8 -> 4x4=16 regions

    key = jax.random.PRNGKey(0)
    k_img, k_q, k_p = jax.random.split(key, 3)

    img = jax.random.normal(k_img, (N, 3, IMG_HW, IMG_HW), jnp.float32)
    ques = jax.random.randint(k_q, (N, SEQ), 0, VOCAB, jnp.int32)
    params = init_params(k_p, feat_dim=FEAT_DIM, vocab_size=VOCAB,
                         embed_size=EMBED, n_stacks=N_STACKS,
                         hidden_dim_img=HIDDEN_IMG, cvgg=CVGG)

    out = jax.jit(san_forward)(img, ques, params)
    out = jax.block_until_ready(out)
    assert out.shape == (N, VOCAB) and out.dtype == jnp.float32
    assert bool(jnp.all(jnp.isfinite(out)))
    print("KERNEL_OK")
</pallas_src>

<mosaic_0001>
module attributes {stable_mosaic.version = 11 : i64} {
  func.func @_img_enc_kernel(%arg0: i32, %arg1: memref<32x256xf32, #tpu.memory_space<vmem>>, %arg2: memref<256x128xf32, #tpu.memory_space<vmem>>, %arg3: memref<1x128xf32, #tpu.memory_space<vmem>>, %arg4: memref<128x128xf32, #tpu.memory_space<vmem>>, %arg5: memref<1x128xf32, #tpu.memory_space<vmem>>, %arg6: memref<32x128xf32, #tpu.memory_space<vmem>>) attributes {dimension_semantics = [#tpu.dimension_semantics<parallel>], iteration_bounds = array<i64: 1>, scalar_prefetch = 0 : i64, scratch_operands = 0 : i64, tpu.core_type = #tpu.core_type<tc>, window_params = [{transform_indices = @transform_0, window_bounds = array<i64: 32, 256>}, {pipeline_mode = #tpu.pipeline_mode<synchronous>, transform_indices = @transform_1, window_bounds = array<i64: 256, 128>}, {pipeline_mode = #tpu.pipeline_mode<synchronous>, transform_indices = @transform_2, window_bounds = array<i64: 1, 128>}, {pipeline_mode = #tpu.pipeline_mode<synchronous>, transform_indices = @transform_3, window_bounds = array<i64: 128, 128>}, {pipeline_mode = #tpu.pipeline_mode<synchronous>, transform_indices = @transform_4, window_bounds = array<i64: 1, 128>}, {transform_indices = @transform_5, window_bounds = array<i64: 32, 128>}]} {
    %c0 = arith.constant 0 : index
    %c0_0 = arith.constant 0 : index
    %0 = vector.load %arg1[%c0, %c0_0] : memref<32x256xf32, #tpu.memory_space<vmem>>, vector<32x256xf32>
    %1 = arith.truncf %0 : vector<32x256xf32> to vector<32x256xbf16>
    %c0_1 = arith.constant 0 : index
    %c0_2 = arith.constant 0 : index
    %2 = vector.load %arg2[%c0_1, %c0_2] : memref<256x128xf32, #tpu.memory_space<vmem>>, vector<256x128xf32>
    %3 = arith.truncf %2 : vector<256x128xf32> to vector<256x128xbf16>
    %cst = arith.constant dense<0.000000e+00> : vector<32x128xf32>
    %4 = tpu.matmul %1, %3, %cst {dimension_numbers = #tpu.dot_dimension_numbers<[1], [0], [0], [1], [0, 0, 1, 1], [], []>} : vector<32x256xbf16>, vector<256x128xbf16>, vector<32x128xf32> -> vector<32x128xf32>
    %c0_3 = arith.constant 0 : index
    %c0_4 = arith.constant 0 : index
    %5 = vector.load %arg3[%c0_3, %c0_4] : memref<1x128xf32, #tpu.memory_space<vmem>>, vector<1x128xf32>
    %6 = vector.broadcast %5 : vector<1x128xf32> to vector<32x128xf32>
    %7 = arith.addf %4, %6 : vector<32x128xf32>
    %8 = arith.truncf %7 : vector<32x128xf32> to vector<32x128xbf16>
    %c0_5 = arith.constant 0 : index
    %c0_6 = arith.constant 0 : index
    %9 = vector.load %arg4[%c0_5, %c0_6] : memref<128x128xf32, #tpu.memory_space<vmem>>, vector<128x128xf32>
    %10 = arith.truncf %9 : vector<128x128xf32> to vector<128x128xbf16>
    %cst_7 = arith.constant dense<0.000000e+00> : vector<32x128xf32>
    %11 = tpu.matmul %8, %10, %cst_7 {dimension_numbers = #tpu.dot_dimension_numbers<[1], [0], [0], [1], [0, 0, 1, 1], [], []>} : vector<32x128xbf16>, vector<128x128xbf16>, vector<32x128xf32> -> vector<32x128xf32>
    %c0_8 = arith.constant 0 : index
    %c0_9 = arith.constant 0 : index
    %12 = vector.load %arg5[%c0_8, %c0_9] : memref<1x128xf32, #tpu.memory_space<vmem>>, vector<1x128xf32>
    %13 = vector.broadcast %12 : vector<1x128xf32> to vector<32x128xf32>
    %14 = arith.addf %11, %13 : vector<32x128xf32>
    %15 = math.tanh %14 : vector<32x128xf32>
    %c0_10 = arith.constant 0 : index
    %c0_11 = arith.constant 0 : index
    %16 = vector.load %arg6[%c0_10, %c0_11] : memref<32x128xf32, #tpu.memory_space<vmem>>, vector<32x128xf32>
    tpu.vector_store %arg6[%c0_10, %c0_11], %15 {strides = array<i32>} : memref<32x128xf32, #tpu.memory_space<vmem>>, vector<32x128xf32>,
    return
  }
  func.func @transform_0(%arg0: i32) -> (i32, i32) {
    %c0_i32 = arith.constant 0 : i32
    %c0_i32_0 = arith.constant 0 : i32
    return %arg0, %c0_i32 : i32, i32
  }
  func.func @transform_1(%arg0: i32) -> (i32, i32) {
    %c0_i32 = arith.constant 0 : i32
    %c0_i32_0 = arith.constant 0 : i32
    %c0_i32_1 = arith.constant 0 : i32
    return %c0_i32, %c0_i32_0 : i32, i32
  }
  func.func @transform_2(%arg0: i32) -> (i32, i32) {
    %c0_i32 = arith.constant 0 : i32
    %c0_i32_0 = arith.constant 0 : i32
    %c0_i32_1 = arith.constant 0 : i32
    return %c0_i32, %c0_i32_0 : i32, i32
  }
  func.func @transform_3(%arg0: i32) -> (i32, i32) {
    %c0_i32 = arith.constant 0 : i32
    %c0_i32_0 = arith.constant 0 : i32
    %c0_i32_1 = arith.constant 0 : i32
    return %c0_i32, %c0_i32_0 : i32, i32
  }
  func.func @transform_4(%arg0: i32) -> (i32, i32) {
    %c0_i32 = arith.constant 0 : i32
    %c0_i32_0 = arith.constant 0 : i32
    %c0_i32_1 = arith.constant 0 : i32
    return %c0_i32, %c0_i32_0 : i32, i32
  }
  func.func @transform_5(%arg0: i32) -> (i32, i32) {
    %c0_i32 = arith.constant 0 : i32
    %c0_i32_0 = arith.constant 0 : i32
    return %arg0, %c0_i32 : i32, i32
  }
}

module attributes {stable_mosaic.version = 11 : i64} {
  func.func @_matmul_kernel(%arg0: i32, %arg1: i32, %arg2: i32, %arg3: memref<16x128xf32, #tpu.memory_space<vmem>>, %arg4: memref<128x512xf32, #tpu.memory_space<vmem>>, %arg5: memref<1x512xf32, #tpu.memory_space<vmem>>, %arg6: memref<16x512xf32, #tpu.memory_space<vmem>>, %arg7: memref<16x512xf32, #tpu.memory_space<vmem>>) attributes {dimension_semantics = [#tpu.dimension_semantics<parallel>, #tpu.dimension_semantics<parallel>, #tpu.dimension_semantics<arbitrary>], iteration_bounds = array<i64: 1, 1, 1>, scalar_prefetch = 0 : i64, scratch_operands = 1 : i64, tpu.core_type = #tpu.core_type<tc>, window_params = [{transform_indices = @transform_0, window_bounds = array<i64: 16, 128>}, {transform_indices = @transform_1, window_bounds = array<i64: 128, 512>}, {transform_indices = @transform_2, window_bounds = array<i64: 1, 512>}, {transform_indices = @transform_3, window_bounds = array<i64: 16, 512>}]} {
    %c0_i32 = arith.constant 0 : i32
    %0 = arith.cmpi eq, %arg2, %c0_i32 : i32
    %1 = arith.extui %0 : i1 to i32
    %c0_i32_0 = arith.constant 0 : i32
    %2 = arith.cmpi ne, %1, %c0_i32_0 : i32
    scf.if %2 {
      %cst_10 = arith.constant 0.000000e+00 : f32
      %14 = vector.broadcast %cst_10 : f32 to vector<16x512xf32>
      %c0_11 = arith.constant 0 : index
      %c0_12 = arith.constant 0 : index
      %15 = vector.load %arg7[%c0_11, %c0_12] : memref<16x512xf32, #tpu.memory_space<vmem>>, vector<16x512xf32>
      tpu.vector_store %arg7[%c0_11, %c0_12], %14 {strides = array<i32>} : memref<16x512xf32, #tpu.memory_space<vmem>>, vector<16x512xf32>,
    } else {
    }
    %c0 = arith.constant 0 : index
    %c0_1 = arith.constant 0 : index
    %3 = vector.load %arg7[%c0, %c0_1] : memref<16x512xf32, #tpu.memory_space<vmem>>, vector<16x512xf32>
    %c0_2 = arith.constant 0 : index
    %c0_3 = arith.constant 0 : index
    %4 = vector.load %arg3[%c0_2, %c0_3] : memref<16x128xf32, #tpu.memory_space<vmem>>, vector<16x128xf32>
    %5 = arith.truncf %4 : vector<16x128xf32> to vector<16x128xbf16>
    %c0_4 = arith.constant 0 : index
    %c0_5 = arith.constant 0 : index
    %6 = vector.load %arg4[%c0_4, %c0_5] : memref<128x512xf32, #tpu.memory_space<vmem>>, vector<128x512xf32>
    %7 = arith.truncf %6 : vector<128x512xf32> to vector<128x512xbf16>
    %cst = arith.constant dense<0.000000e+00> : vector<16x512xf32>
    %8 = tpu.matmul %5, %7, %cst {dimension_numbers = #tpu.dot_dimension_numbers<[1], [0], [0], [1], [0, 0, 1, 1], [], []>} : vector<16x128xbf16>, vector<128x512xbf16>, vector<16x512xf32> -> vector<16x512xf32>
    %9 = arith.addf %3, %8 : vector<16x512xf32>
    %c0_6 = arith.constant 0 : index
    %c0_7 = arith.constant 0 : index
    %10 = vector.load %arg7[%c0_6, %c0_7] : memref<16x512xf32, #tpu.memory_space<vmem>>, vector<16x512xf32>
    tpu.vector_store %arg7[%c0_6, %c0_7], %9 {strides = array<i32>} : memref<16x512xf32, #tpu.memory_space<vmem>>, vector<16x512xf32>,
    %c0_i32_8 = arith.constant 0 : i32
    %11 = arith.cmpi eq, %arg2, %c0_i32_8 : i32
    %12 = arith.extui %11 : i1 to i32
    %c0_i32_9 = arith.constant 0 : i32
    %13 = arith.cmpi ne, %12, %c0_i32_9 : i32
    scf.if %13 {
      %c0_10 = arith.constant 0 : index
      %c0_11 = arith.constant 0 : index
      %14 = vector.load %arg7[%c0_10, %c0_11] : memref<16x512xf32, #tpu.memory_space<vmem>>, vector<16x512xf32>
      %c0_12 = arith.constant 0 : index
      %c0_13 = arith.constant 0 : index
      %15 = vector.load %arg5[%c0_12, %c0_13] : memref<1x512xf32, #tpu.memory_space<vmem>>, vector<1x512xf32>
      %16 = vector.broadcast %15 : vector<1x512xf32> to vector<16x512xf32>
      %17 = arith.addf %14, %16 : vector<16x512xf32>
      %c0_14 = arith.constant 0 : index
      %c0_15 = arith.constant 0 : index
      %18 = vector.load %arg6[%c0_14, %c0_15] : memref<16x512xf32, #tpu.memory_space<vmem>>, vector<16x512xf32>
      tpu.vector_store %arg6[%c0_14, %c0_15], %17 {strides = array<i32>} : memref<16x512xf32, #tpu.memory_space<vmem>>, vector<16x512xf32>,
    } else {
    }
    return
  }
  func.func @transform_0(%arg0: i32, %arg1: i32, %arg2: i32) -> (i32, i32) {
    %c0_i32 = arith.constant 0 : i32
    return %arg0, %arg2 : i32, i32
  }
  func.func @transform_1(%arg0: i32, %arg1: i32, %arg2: i32) -> (i32, i32) {
    %c0_i32 = arith.constant 0 : i32
    return %arg2, %arg1 : i32, i32
  }
  func.func @transform_2(%arg0: i32, %arg1: i32, %arg2: i32) -> (i32, i32) {
    %c0_i32 = arith.constant 0 : i32
    %c0_i32_0 = arith.constant 0 : i32
    return %c0_i32, %arg1 : i32, i32
  }
  func.func @transform_3(%arg0: i32, %arg1: i32, %arg2: i32) -> (i32, i32) {
    %c0_i32 = arith.constant 0 : i32
    return %arg0, %arg1 : i32, i32
  }
}

module attributes {stable_mosaic.version = 11 : i64} {
  func.func @_lstm_rec_kernel(%arg0: i32, %arg1: memref<8x4096xf32, #tpu.memory_space<vmem>>, %arg2: memref<128x512xf32, #tpu.memory_space<vmem>>, %arg3: memref<8x128xf32, #tpu.memory_space<vmem>>) attributes {dimension_semantics = [#tpu.dimension_semantics<parallel>], iteration_bounds = array<i64: 1>, scalar_prefetch = 0 : i64, scratch_operands = 0 : i64, tpu.core_type = #tpu.core_type<tc>, window_params = [{transform_indices = @transform_0, window_bounds = array<i64: 8, 4096>}, {pipeline_mode = #tpu.pipeline_mode<synchronous>, transform_indices = @transform_1, window_bounds = array<i64: 128, 512>}, {transform_indices = @transform_2, window_bounds = array<i64: 8, 128>}]} {
    %c0 = arith.constant 0 : index
    %c0_0 = arith.constant 0 : index
    %0 = vector.load %arg2[%c0, %c0_0] : memref<128x512xf32, #tpu.memory_space<vmem>>, vector<128x512xf32>
    %1 = arith.truncf %0 : vector<128x512xf32> to vector<128x512xbf16>
    %cst = arith.constant 0.000000e+00 : f32
    %2 = vector.broadcast %cst : f32 to vector<8x128xf32>
    %cst_1 = arith.constant 0.000000e+00 : f32
    %3 = vector.broadcast %cst_1 : f32 to vector<8x128xf32>
    %c0_i32 = arith.constant 0 : i32
    %c8_i32 = arith.constant 8 : i32
    %4 = arith.addi %c0_i32, %c8_i32 : i32
    %c1_i32 = arith.constant 1 : i32
    %5:2 = scf.for %arg4 = %c0_i32 to %4 step %c1_i32 iter_args(%arg5 = %2, %arg6 = %3) -> (vector<8x128xf32>, vector<8x128xf32>)  : i32 {
      %c512_i32 = arith.constant 512 : i32
      %7 = arith.muli %arg4, %c512_i32 : i32
      %8 = tpu.assume_multiple %7, 128 : i32
      %c0_5 = arith.constant 0 : index
      %9 = arith.index_cast %8 : i32 to index
      %10 = vector.load %arg1[%c0_5, %9] : memref<8x4096xf32, #tpu.memory_space<vmem>>, vector<8x512xf32>
      %11 = arith.truncf %arg5 : vector<8x128xf32> to vector<8x128xbf16>
      %cst_6 = arith.constant dense<0.000000e+00> : vector<8x512xf32>
      %12 = tpu.matmul %11, %1, %cst_6 {dimension_numbers = #tpu.dot_dimension_numbers<[1], [0], [0], [1], [0, 0, 1, 1], [], []>} : vector<8x128xbf16>, vector<128x512xbf16>, vector<8x512xf32> -> vector<8x512xf32>
      %13 = arith.addf %10, %12 : vector<8x512xf32>
      %14 = vector.extract_strided_slice %13 {offsets = [0, 0], sizes = [8, 128], strides = [1, 1]} : vector<8x512xf32> to vector<8x128xf32>
      %15 = arith.negf %14 : vector<8x128xf32>
      %16 = math.exp %15 : vector<8x128xf32>
      %cst_7 = arith.constant 1.000000e+00 : f32
      %17 = vector.broadcast %cst_7 : f32 to vector<8x128xf32>
      %18 = arith.addf %17, %16 : vector<8x128xf32>
      %19 = arith.divf %17, %18 : vector<8x128xf32>
      %20 = vector.extract_strided_slice %13 {offsets = [0, 128], sizes = [8, 128], strides = [1, 1]} : vector<8x512xf32> to vector<8x128xf32>
      %21 = arith.negf %20 : vector<8x128xf32>
      %22 = math.exp %21 : vector<8x128xf32>
      %cst_8 = arith.constant 1.000000e+00 : f32
      %23 = vector.broadcast %cst_8 : f32 to vector<8x128xf32>
      %24 = arith.addf %23, %22 : vector<8x128xf32>
      %25 = arith.divf %23, %24 : vector<8x128xf32>
      %26 = vector.extract_strided_slice %13 {offsets = [0, 256], sizes = [8, 128], strides = [1, 1]} : vector<8x512xf32> to vector<8x128xf32>
      %27 = math.tanh %26 : vector<8x128xf32>
      %28 = vector.extract_strided_slice %13 {offsets = [0, 384], sizes = [8, 128], strides = [1, 1]} : vector<8x512xf32> to vector<8x128xf32>
      %29 = arith.negf %28 : vector<8x128xf32>
      %30 = math.exp %29 : vector<8x128xf32>
      %cst_9 = arith.constant 1.000000e+00 : f32
      %31 = vector.broadcast %cst_9 : f32 to vector<8x128xf32>
      %32 = arith.addf %31, %30 : vector<8x128xf32>
      %33 = arith.divf %31, %32 : vector<8x128xf32>
      %34 = arith.mulf %25, %arg6 : vector<8x128xf32>
      %35 = arith.mulf %19, %27 : vector<8x128xf32>
      %36 = arith.addf %34, %35 : vector<8x128xf32>
      %37 = math.tanh %36 : vector<8x128xf32>
      %38 = arith.mulf %33, %37 : vector<8x128xf32>
      scf.yield %38, %36 : vector<8x128xf32>, vector<8x128xf32>
    }
    %c8_i32_2 = arith.constant 8 : i32
    %c0_3 = arith.constant 0 : index
    %c0_4 = arith.constant 0 : index
    %6 = vector.load %arg3[%c0_3, %c0_4] : memref<8x128xf32, #tpu.memory_space<vmem>>, vector<8x128xf32>
    tpu.vector_store %arg3[%c0_3, %c0_4], %5#0 {strides = array<i32>} : memref<8x128xf32, #tpu.memory_space<vmem>>, vector<8x128xf32>,
    return
  }
  func.func @transform_0(%arg0: i32) -> (i32, i32) {
    %c0_i32 = arith.constant 0 : i32
    %c0_i32_0 = arith.constant 0 : i32
    return %arg0, %c0_i32 : i32, i32
  }
  func.func @transform_1(%arg0: i32) -> (i32, i32) {
    %c0_i32 = arith.constant 0 : i32
    %c0_i32_0 = arith.constant 0 : i32
    %c0_i32_1 = arith.constant 0 : i32
    return %c0_i32, %c0_i32_0 : i32, i32
  }
  func.func @transform_2(%arg0: i32) -> (i32, i32) {
    %c0_i32 = arith.constant 0 : i32
    %c0_i32_0 = arith.constant 0 : i32
    return %arg0, %c0_i32 : i32, i32
  }
}

module attributes {stable_mosaic.version = 11 : i64} {
  func.func @_stacked_attention_kernel(%arg0: i32, %arg1: memref<8x16x128xf32, #tpu.memory_space<vmem>>, %arg2: memref<8x128xf32, #tpu.memory_space<vmem>>, %arg3: memref<2x128x128xf32, #tpu.memory_space<vmem>>, %arg4: memref<2x1x128xf32, #tpu.memory_space<vmem>>, %arg5: memref<2x128x128xf32, #tpu.memory_space<vmem>>, %arg6: memref<2x1x128xf32, #tpu.memory_space<vmem>>, %arg7: memref<2x1x128xf32, #tpu.memory_space<vmem>>, %arg8: memref<2xf32, #tpu.memory_space<smem>>, %arg9: memref<8x128xf32, #tpu.memory_space<vmem>>) attributes {dimension_semantics = [#tpu.dimension_semantics<parallel>], iteration_bounds = array<i64: 1>, scalar_prefetch = 0 : i64, scratch_operands = 0 : i64, tpu.core_type = #tpu.core_type<tc>, window_params = [{transform_indices = @transform_0, window_bounds = array<i64: 8, 16, 128>}, {transform_indices = @transform_1, window_bounds = array<i64: 8, 128>}, {pipeline_mode = #tpu.pipeline_mode<synchronous>, transform_indices = @transform_2, window_bounds = array<i64: 2, 128, 128>}, {pipeline_mode = #tpu.pipeline_mode<synchronous>, transform_indices = @transform_3, window_bounds = array<i64: 2, 1, 128>}, {pipeline_mode = #tpu.pipeline_mode<synchronous>, transform_indices = @transform_4, window_bounds = array<i64: 2, 128, 128>}, {pipeline_mode = #tpu.pipeline_mode<synchronous>, transform_indices = @transform_5, window_bounds = array<i64: 2, 1, 128>}, {pipeline_mode = #tpu.pipeline_mode<synchronous>, transform_indices = @transform_6, window_bounds = array<i64: 2, 1, 128>}, {transform_indices = @transform_7, window_bounds = array<i64: 2>}, {transform_indices = @transform_8, window_bounds = array<i64: 8, 128>}]} {
    %c0 = arith.constant 0 : index
    %c0_0 = arith.constant 0 : index
    %c0_1 = arith.constant 0 : index
    %0 = vector.load %arg1[%c0, %c0_0, %c0_1] : memref<8x16x128xf32, #tpu.memory_space<vmem>>, vector<8x16x128xf32>
    %c0_2 = arith.constant 0 : index
    %c0_3 = arith.constant 0 : index
    %1 = vector.load %arg2[%c0_2, %c0_3] : memref<8x128xf32, #tpu.memory_space<vmem>>, vector<8x128xf32>
    %2 = vector.shape_cast %0 : vector<8x16x128xf32> to vector<128x128xf32>
    %3 = arith.truncf %2 : vector<128x128xf32> to vector<128x128xbf16>
    %c0_4 = arith.constant 0 : index
    %c0_5 = arith.constant 0 : index
    %c0_6 = arith.constant 0 : index
    %4 = vector.load %arg3[%c0_4, %c0_5, %c0_6] : memref<2x128x128xf32, #tpu.memory_space<vmem>>, vector<1x128x128xf32>
    %5 = vector.shape_cast %4 : vector<1x128x128xf32> to vector<128x128xf32>
    %6 = arith.truncf %5 : vector<128x128xf32> to vector<128x128xbf16>
    %cst = arith.constant dense<0.000000e+00> : vector<128x128xf32>
    %7 = tpu.matmul %3, %6, %cst {dimension_numbers = #tpu.dot_dimension_numbers<[1], [0], [0], [1], [0, 0, 1, 1], [], []>} : vector<128x128xbf16>, vector<128x128xbf16>, vector<128x128xf32> -> vector<128x128xf32>
    %8 = vector.shape_cast %7 : vector<128x128xf32> to vector<8x16x128xf32>
    %c0_7 = arith.constant 0 : index
    %c0_8 = arith.constant 0 : index
    %c0_9 = arith.constant 0 : index
    %9 = vector.load %arg4[%c0_7, %c0_8, %c0_9] : memref<2x1x128xf32, #tpu.memory_space<vmem>>, vector<1x1x128xf32>
    %10 = vector.shape_cast %9 : vector<1x1x128xf32> to vector<1x128xf32>
    %11 = vector.shape_cast %10 : vector<1x128xf32> to vector<1x1x128xf32>
    %12 = vector.broadcast %11 : vector<1x1x128xf32> to vector<8x16x128xf32>
    %13 = arith.addf %8, %12 : vector<8x16x128xf32>
    %14 = arith.truncf %1 : vector<8x128xf32> to vector<8x128xbf16>
    %c0_10 = arith.constant 0 : index
    %c0_11 = arith.constant 0 : index
    %c0_12 = arith.constant 0 : index
    %15 = vector.load %arg5[%c0_10, %c0_11, %c0_12] : memref<2x128x128xf32, #tpu.memory_space<vmem>>, vector<1x128x128xf32>
    %16 = vector.shape_cast %15 : vector<1x128x128xf32> to vector<128x128xf32>
    %17 = arith.truncf %16 : vector<128x128xf32> to vector<128x128xbf16>
    %cst_13 = arith.constant dense<0.000000e+00> : vector<8x128xf32>
    %18 = tpu.matmul %14, %17, %cst_13 {dimension_numbers = #tpu.dot_dimension_numbers<[1], [0], [0], [1], [0, 0, 1, 1], [], []>} : vector<8x128xbf16>, vector<128x128xbf16>, vector<8x128xf32> -> vector<8x128xf32>
    %c0_14 = arith.constant 0 : index
    %c0_15 = arith.constant 0 : index
    %c0_16 = arith.constant 0 : index
    %19 = vector.load %arg6[%c0_14, %c0_15, %c0_16] : memref<2x1x128xf32, #tpu.memory_space<vmem>>, vector<1x1x128xf32>
    %20 = vector.shape_cast %19 : vector<1x1x128xf32> to vector<1x128xf32>
    %21 = vector.broadcast %20 : vector<1x128xf32> to vector<8x128xf32>
    %22 = arith.addf %18, %21 : vector<8x128xf32>
    %23 = vector.shape_cast %22 : vector<8x128xf32> to vector<8x1x128xf32>
    %24 = vector.broadcast %23 : vector<8x1x128xf32> to vector<8x16x128xf32>
    %25 = arith.addf %13, %24 : vector<8x16x128xf32>
    %26 = math.tanh %25 : vector<8x16x128xf32>
    %c0_17 = arith.constant 0 : index
    %c0_18 = arith.constant 0 : index
    %c0_19 = arith.constant 0 : index
    %27 = vector.load %arg7[%c0_17, %c0_18, %c0_19] : memref<2x1x128xf32, #tpu.memory_space<vmem>>, vector<1x1x128xf32>
    %28 = vector.shape_cast %27 : vector<1x1x128xf32> to vector<1x128xf32>
    %29 = vector.shape_cast %28 : vector<1x128xf32> to vector<1x1x128xf32>
    %30 = vector.broadcast %29 : vector<1x1x128xf32> to vector<8x16x128xf32>
    %31 = arith.mulf %26, %30 : vector<8x16x128xf32>
    %cst_20 = arith.constant dense<0.000000e+00> : vector<8x16xf32>
    %32 = vector.multi_reduction <add>, %31, %cst_20 [2] : vector<8x16x128xf32> to vector<8x16xf32>
    %c0_21 = arith.constant 0 : index
    %33 = memref.load %arg8[%c0_21] : memref<2xf32, #tpu.memory_space<smem>>
    %34 = vector.broadcast %33 : f32 to vector<8x16xf32>
    %35 = arith.addf %32, %34 : vector<8x16xf32>
    %cst_22 = arith.constant dense<0xFF800000> : vector<8xf32>
    %36 = vector.multi_reduction <maximumf>, %35, %cst_22 [1] : vector<8x16xf32> to vector<8xf32>
    %37 = vector.shape_cast %36 : vector<8xf32> to vector<8x1xf32>
    %38 = vector.broadcast %37 : vector<8x1xf32> to vector<8x16xf32>
    %39 = arith.subf %35, %38 : vector<8x16xf32>
    %40 = math.exp %39 : vector<8x16xf32>
    %cst_23 = arith.constant dense<0.000000e+00> : vector<8xf32>
    %41 = vector.multi_reduction <add>, %40, %cst_23 [1] : vector<8x16xf32> to vector<8xf32>
    %42 = vector.shape_cast %41 : vector<8xf32> to vector<8x1xf32>
    %43 = vector.broadcast %42 : vector<8x1xf32> to vector<8x16xf32>
    %44 = arith.divf %40, %43 : vector<8x16xf32>
    %45 = vector.shape_cast %44 : vector<8x16xf32> to vector<8x16x1xf32>
    %46 = vector.broadcast %45 : vector<8x16x1xf32> to vector<8x16x128xf32>
    %47 = arith.mulf %46, %0 : vector<8x16x128xf32>
    %cst_24 = arith.constant dense<0.000000e+00> : vector<8x128xf32>
    %48 = vector.multi_reduction <add>, %47, %cst_24 [1] : vector<8x16x128xf32> to vector<8x128xf32>
    %49 = arith.addf %48, %1 : vector<8x128xf32>
    %c1 = arith.constant 1 : index
    %c0_25 = arith.constant 0 : index
    %c0_26 = arith.constant 0 : index
    %50 = vector.load %arg3[%c1, %c0_25, %c0_26] : memref<2x128x128xf32, #tpu.memory_space<vmem>>, vector<1x128x128xf32>
    %51 = vector.shape_cast %50 : vector<1x128x128xf32> to vector<128x128xf32>
    %52 = arith.truncf %51 : vector<128x128xf32> to vector<128x128xbf16>
    %cst_27 = arith.constant dense<0.000000e+00> : vector<128x128xf32>
    %53 = tpu.matmul %3, %52, %cst_27 {dimension_numbers = #tpu.dot_dimension_numbers<[1], [0], [0], [1], [0, 0, 1, 1], [], []>} : vector<128x128xbf16>, vector<128x128xbf16>, vector<128x128xf32> -> vector<128x128xf32>
    %54 = vector.shape_cast %53 : vector<128x128xf32> to vector<8x16x128xf32>
    %c1_28 = arith.constant 1 : index
    %c0_29 = arith.constant 0 : index
    %c0_30 = arith.constant 0 : index
    %55 = vector.load %arg4[%c1_28, %c0_29, %c0_30] : memref<2x1x128xf32, #tpu.memory_space<vmem>>, vector<1x1x128xf32>
    %56 = vector.shape_cast %55 : vector<1x1x128xf32> to vector<1x128xf32>
    %57 = vector.shape_cast %56 : vector<1x128xf32> to vector<1x1x128xf32>
    %58 = vector.broadcast %57 : vector<1x1x128xf32> to vector<8x16x128xf32>
    %59 = arith.addf %54, %58 : vector<8x16x128xf32>
    %60 = arith.truncf %49 : vector<8x128xf32> to vector<8x128xbf16>
    %c1_31 = arith.constant 1 : index
    %c0_32 = arith.constant 0 : index
    %c0_33 = arith.constant 0 : index
    %61 = vector.load %arg5[%c1_31, %c0_32, %c0_33] : memref<2x128x128xf32, #tpu.memory_space<vmem>>, vector<1x128x128xf32>
    %62 = vector.shape_cast %61 : vector<1x128x128xf32> to vector<128x128xf32>
    %63 = arith.truncf %62 : vector<128x128xf32> to vector<128x128xbf16>
    %cst_34 = arith.constant dense<0.000000e+00> : vector<8x128xf32>
    %64 = tpu.matmul %60, %63, %cst_34 {dimension_numbers = #tpu.dot_dimension_numbers<[1], [0], [0], [1], [0, 0, 1, 1], [], []>} : vector<8x128xbf16>, vector<128x128xbf16>, vector<8x128xf32> -> vector<8x128xf32>
    %c1_35 = arith.constant 1 : index
    %c0_36 = arith.constant 0 : index
    %c0_37 = arith.constant 0 : index
    %65 = vector.load %arg6[%c1_35, %c0_36, %c0_37] : memref<2x1x128xf32, #tpu.memory_space<vmem>>, vector<1x1x128xf32>
    %66 = vector.shape_cast %65 : vector<1x1x128xf32> to vector<1x128xf32>
    %67 = vector.broadcast %66 : vector<1x128xf32> to vector<8x128xf32>
    %68 = arith.addf %64, %67 : vector<8x128xf32>
    %69 = vector.shape_cast %68 : vector<8x128xf32> to vector<8x1x128xf32>
    %70 = vector.broadcast %69 : vector<8x1x128xf32> to vector<8x16x128xf32>
    %71 = arith.addf %59, %70 : vector<8x16x128xf32>
    %72 = math.tanh %71 : vector<8x16x128xf32>
    %c1_38 = arith.constant 1 : index
    %c0_39 = arith.constant 0 : index
    %c0_40 = arith.constant 0 : index
    %73 = vector.load %arg7[%c1_38, %c0_39, %c0_40] : memref<2x1x128xf32, #tpu.memory_space<vmem>>, vector<1x1x128xf32>
    %74 = vector.shape_cast %73 : vector<1x1x128xf32> to vector<1x128xf32>
    %75 = vector.shape_cast %74 : vector<1x128xf32> to vector<1x1x128xf32>
    %76 = vector.broadcast %75 : vector<1x1x128xf32> to vector<8x16x128xf32>
    %77 = arith.mulf %72, %76 : vector<8x16x128xf32>
    %cst_41 = arith.constant dense<0.000000e+00> : vector<8x16xf32>
    %78 = vector.multi_reduction <add>, %77, %cst_41 [2] : vector<8x16x128xf32> to vector<8x16xf32>
    %c1_42 = arith.constant 1 : index
    %79 = memref.load %arg8[%c1_42] : memref<2xf32, #tpu.memory_space<smem>>
    %80 = vector.broadcast %79 : f32 to vector<8x16xf32>
    %81 = arith.addf %78, %80 : vector<8x16xf32>
    %cst_43 = arith.constant dense<0xFF800000> : vector<8xf32>
    %82 = vector.multi_reduction <maximumf>, %81, %cst_43 [1] : vector<8x16xf32> to vector<8xf32>
    %83 = vector.shape_cast %82 : vector<8xf32> to vector<8x1xf32>
    %84 = vector.broadcast %83 : vector<8x1xf32> to vector<8x16xf32>
    %85 = arith.subf %81, %84 : vector<8x16xf32>
    %86 = math.exp %85 : vector<8x16xf32>
    %cst_44 = arith.constant dense<0.000000e+00> : vector<8xf32>
    %87 = vector.multi_reduction <add>, %86, %cst_44 [1] : vector<8x16xf32> to vector<8xf32>
    %88 = vector.shape_cast %87 : vector<8xf32> to vector<8x1xf32>
    %89 = vector.broadcast %88 : vector<8x1xf32> to vector<8x16xf32>
    %90 = arith.divf %86, %89 : vector<8x16xf32>
    %91 = vector.shape_cast %90 : vector<8x16xf32> to vector<8x16x1xf32>
    %92 = vector.broadcast %91 : vector<8x16x1xf32> to vector<8x16x128xf32>
    %93 = arith.mulf %92, %0 : vector<8x16x128xf32>
    %cst_45 = arith.constant dense<0.000000e+00> : vector<8x128xf32>
    %94 = vector.multi_reduction <add>, %93, %cst_45 [1] : vector<8x16x128xf32> to vector<8x128xf32>
    %95 = arith.addf %94, %49 : vector<8x128xf32>
    %c0_46 = arith.constant 0 : index
    %c0_47 = arith.constant 0 : index
    %96 = vector.load %arg9[%c0_46, %c0_47] : memref<8x128xf32, #tpu.memory_space<vmem>>, vector<8x128xf32>
    tpu.vector_store %arg9[%c0_46, %c0_47], %95 {strides = array<i32>} : memref<8x128xf32, #tpu.memory_space<vmem>>, vector<8x128xf32>,
    return
  }
  func.func @transform_0(%arg0: i32) -> (i32, i32, i32) {
    %c0_i32 = arith.constant 0 : i32
    %c0_i32_0 = arith.constant 0 : i32
    %c0_i32_1 = arith.constant 0 : i32
    return %arg0, %c0_i32, %c0_i32_0 : i32, i32, i32
  }
  func.func @transform_1(%arg0: i32) -> (i32, i32) {
    %c0_i32 = arith.constant 0 : i32
    %c0_i32_0 = arith.constant 0 : i32
    return %arg0, %c0_i32 : i32, i32
  }
  func.func @transform_2(%arg0: i32) -> (i32, i32, i32) {
    %c0_i32 = arith.constant 0 : i32
    %c0_i32_0 = arith.constant 0 : i32
    %c0_i32_1 = arith.constant 0 : i32
    %c0_i32_2 = arith.constant 0 : i32
    return %c0_i32, %c0_i32_0, %c0_i32_1 : i32, i32, i32
  }
  func.func @transform_3(%arg0: i32) -> (i32, i32, i32) {
    %c0_i32 = arith.constant 0 : i32
    %c0_i32_0 = arith.constant 0 : i32
    %c0_i32_1 = arith.constant 0 : i32
    %c0_i32_2 = arith.constant 0 : i32
    return %c0_i32, %c0_i32_0, %c0_i32_1 : i32, i32, i32
  }
  func.func @transform_4(%arg0: i32) -> (i32, i32, i32) {
    %c0_i32 = arith.constant 0 : i32
    %c0_i32_0 = arith.constant 0 : i32
    %c0_i32_1 = arith.constant 0 : i32
    %c0_i32_2 = arith.constant 0 : i32
    return %c0_i32, %c0_i32_0, %c0_i32_1 : i32, i32, i32
  }
  func.func @transform_5(%arg0: i32) -> (i32, i32, i32) {
    %c0_i32 = arith.constant 0 : i32
    %c0_i32_0 = arith.constant 0 : i32
    %c0_i32_1 = arith.constant 0 : i32
    %c0_i32_2 = arith.constant 0 : i32
    return %c0_i32, %c0_i32_0, %c0_i32_1 : i32, i32, i32
  }
  func.func @transform_6(%arg0: i32) -> (i32, i32, i32) {
    %c0_i32 = arith.constant 0 : i32
    %c0_i32_0 = arith.constant 0 : i32
    %c0_i32_1 = arith.constant 0 : i32
    %c0_i32_2 = arith.constant 0 : i32
    return %c0_i32, %c0_i32_0, %c0_i32_1 : i32, i32, i32
  }
  func.func @transform_7(%arg0: i32) -> i32 {
    %c0_i32 = arith.constant 0 : i32
    %c0_i32_0 = arith.constant 0 : i32
    return %c0_i32 : i32
  }
  func.func @transform_8(%arg0: i32) -> (i32, i32) {
    %c0_i32 = arith.constant 0 : i32
    %c0_i32_0 = arith.constant 0 : i32
    return %arg0, %c0_i32 : i32, i32
  }
}

module attributes {stable_mosaic.version = 11 : i64} {
  func.func @_matmul_kernel(%arg0: i32, %arg1: i32, %arg2: i32, %arg3: memref<8x128xf32, #tpu.memory_space<vmem>>, %arg4: memref<128x256xf32, #tpu.memory_space<vmem>>, %arg5: memref<1x256xf32, #tpu.memory_space<vmem>>, %arg6: memref<8x256xf32, #tpu.memory_space<vmem>>, %arg7: memref<8x256xf32, #tpu.memory_space<vmem>>) attributes {dimension_semantics = [#tpu.dimension_semantics<parallel>, #tpu.dimension_semantics<parallel>, #tpu.dimension_semantics<arbitrary>], iteration_bounds = array<i64: 1, 1, 1>, scalar_prefetch = 0 : i64, scratch_operands = 1 : i64, tpu.core_type = #tpu.core_type<tc>, window_params = [{transform_indices = @transform_0, window_bounds = array<i64: 8, 128>}, {transform_indices = @transform_1, window_bounds = array<i64: 128, 256>}, {transform_indices = @transform_2, window_bounds = array<i64: 1, 256>}, {transform_indices = @transform_3, window_bounds = array<i64: 8, 256>}]} {
    %c0_i32 = arith.constant 0 : i32
    %0 = arith.cmpi eq, %arg2, %c0_i32 : i32
    %1 = arith.extui %0 : i1 to i32
    %c0_i32_0 = arith.constant 0 : i32
    %2 = arith.cmpi ne, %1, %c0_i32_0 : i32
    scf.if %2 {
      %cst_10 = arith.constant 0.000000e+00 : f32
      %14 = vector.broadcast %cst_10 : f32 to vector<8x256xf32>
      %c0_11 = arith.constant 0 : index
      %c0_12 = arith.constant 0 : index
      %15 = vector.load %arg7[%c0_11, %c0_12] : memref<8x256xf32, #tpu.memory_space<vmem>>, vector<8x256xf32>
      tpu.vector_store %arg7[%c0_11, %c0_12], %14 {strides = array<i32>} : memref<8x256xf32, #tpu.memory_space<vmem>>, vector<8x256xf32>,
    } else {
    }
    %c0 = arith.constant 0 : index
    %c0_1 = arith.constant 0 : index
    %3 = vector.load %arg7[%c0, %c0_1] : memref<8x256xf32, #tpu.memory_space<vmem>>, vector<8x256xf32>
    %c0_2 = arith.constant 0 : index
    %c0_3 = arith.constant 0 : index
    %4 = vector.load %arg3[%c0_2, %c0_3] : memref<8x128xf32, #tpu.memory_space<vmem>>, vector<8x128xf32>
    %5 = arith.truncf %4 : vector<8x128xf32> to vector<8x128xbf16>
    %c0_4 = arith.constant 0 : index
    %c0_5 = arith.constant 0 : index
    %6 = vector.load %arg4[%c0_4, %c0_5] : memref<128x256xf32, #tpu.memory_space<vmem>>, vector<128x256xf32>
    %7 = arith.truncf %6 : vector<128x256xf32> to vector<128x256xbf16>
    %cst = arith.constant dense<0.000000e+00> : vector<8x256xf32>
    %8 = tpu.matmul %5, %7, %cst {dimension_numbers = #tpu.dot_dimension_numbers<[1], [0], [0], [1], [0, 0, 1, 1], [], []>} : vector<8x128xbf16>, vector<128x256xbf16>, vector<8x256xf32> -> vector<8x256xf32>
    %9 = arith.addf %3, %8 : vector<8x256xf32>
    %c0_6 = arith.constant 0 : index
    %c0_7 = arith.constant 0 : index
    %10 = vector.load %arg7[%c0_6, %c0_7] : memref<8x256xf32, #tpu.memory_space<vmem>>, vector<8x256xf32>
    tpu.vector_store %arg7[%c0_6, %c0_7], %9 {strides = array<i32>} : memref<8x256xf32, #tpu.memory_space<vmem>>, vector<8x256xf32>,
    %c0_i32_8 = arith.constant 0 : i32
    %11 = arith.cmpi eq, %arg2, %c0_i32_8 : i32
    %12 = arith.extui %11 : i1 to i32
    %c0_i32_9 = arith.constant 0 : i32
    %13 = arith.cmpi ne, %12, %c0_i32_9 : i32
    scf.if %13 {
      %c0_10 = arith.constant 0 : index
      %c0_11 = arith.constant 0 : index
      %14 = vector.load %arg7[%c0_10, %c0_11] : memref<8x256xf32, #tpu.memory_space<vmem>>, vector<8x256xf32>
      %c0_12 = arith.constant 0 : index
      %c0_13 = arith.constant 0 : index
      %15 = vector.load %arg5[%c0_12, %c0_13] : memref<1x256xf32, #tpu.memory_space<vmem>>, vector<1x256xf32>
      %16 = vector.broadcast %15 : vector<1x256xf32> to vector<8x256xf32>
      %17 = arith.addf %14, %16 : vector<8x256xf32>
      %c0_14 = arith.constant 0 : index
      %c0_15 = arith.constant 0 : index
      %18 = vector.load %arg6[%c0_14, %c0_15] : memref<8x256xf32, #tpu.memory_space<vmem>>, vector<8x256xf32>
      tpu.vector_store %arg6[%c0_14, %c0_15], %17 {strides = array<i32>} : memref<8x256xf32, #tpu.memory_space<vmem>>, vector<8x256xf32>,
    } else {
    }
    return
  }
  func.func @transform_0(%arg0: i32, %arg1: i32, %arg2: i32) -> (i32, i32) {
    %c0_i32 = arith.constant 0 : i32
    return %arg0, %arg2 : i32, i32
  }
  func.func @transform_1(%arg0: i32, %arg1: i32, %arg2: i32) -> (i32, i32) {
    %c0_i32 = arith.constant 0 : i32
    return %arg2, %arg1 : i32, i32
  }
  func.func @transform_2(%arg0: i32, %arg1: i32, %arg2: i32) -> (i32, i32) {
    %c0_i32 = arith.constant 0 : i32
    %c0_i32_0 = arith.constant 0 : i32
    return %c0_i32, %arg1 : i32, i32
  }
  func.func @transform_3(%arg0: i32, %arg1: i32, %arg2: i32) -> (i32, i32) {
    %c0_i32 = arith.constant 0 : i32
    return %arg0, %arg1 : i32, i32
  }
}

</mosaic_0001>

<llo_original>
// kernel: san_forward.5
$region0: #{san_forward.5}
  #allocation0 [shape = 'u32[]', space=smem, size = 0x4, offset = 0x4, fixed_abs, tag = 'smem constant byte address 0x4 - core index']
  #allocation1 [shape = 'u32[144,128]{1,0:T(1,128)}', space=vmem, size = 0x12000, scoped, tag = 'internal scratch']
  %s0 = inlined_call_operand.vmem [shape: f32[32,256], index: 0, kind: input, shape index: {}]
  %s1 = inlined_call_operand.vmem [shape: f32[256,128], index: 1, kind: input, shape index: {}]
  %s2 = inlined_call_operand.vmem [shape: f32[1,128], index: 2, kind: input, shape index: {}]
  %s3 = inlined_call_operand.vmem [shape: f32[128,128], index: 3, kind: input, shape index: {}]
  %s4 = inlined_call_operand.vmem [shape: f32[1,128], index: 4, kind: input, shape index: {}]
  %s5 = inlined_call_operand.vmem [shape: f32[32,128], index: 5, kind: output, shape index: {}]
  %s6 = sld [smem:[#allocation0]]
  $region30: #{san_forward.5} parent=0
    _
  %s8 = ssub.s32 1, %s6
  %s9 = scalar_select 0, %s8, %s6
  // Predicated region
  $region2: #{san_forward.5} parent=0 // pred_check
    _
  $region3: #{san_forward.5} parent=0 // pred_check_branch
    %11 = sbr.rel (0) target = $region5
  $region4: #{san_forward.5} parent=0 // pred_region
    _
  $region5: #{san_forward.5} parent=0 // pred_fallthru
    _
  // Predicated region
  $region6: #{san_forward.5} parent=0 // pred_check
    _
  $region7: #{san_forward.5} parent=0 // pred_check_branch
    %13 = sbr.rel (0) target = $region9
  $region8: #{san_forward.5} parent=0 // pred_region
    _
  $region9: #{san_forward.5} parent=0 // pred_fallthru
    _
  // Predicated region
  $region10: #{san_forward.5} parent=0 // pred_check
    _
  $region11: #{san_forward.5} parent=0 // pred_check_branch
    %15 = sbr.rel (0) target = $region13
  $region12: #{san_forward.5} parent=0 // pred_region
    _
  $region13: #{san_forward.5} parent=0 // pred_fallthru
    _
  // Predicated region
  $region14: #{san_forward.5} parent=0 // pred_check
    _
  $region15: #{san_forward.5} parent=0 // pred_check_branch
    %17 = sbr.rel (0) target = $region17
  $region16: #{san_forward.5} parent=0 // pred_region
    _
  $region17: #{san_forward.5} parent=0 // pred_fallthru
    _
  // Predicated region
  $region18: #{san_forward.5} parent=0 // pred_check
    _
  $region19: #{san_forward.5} parent=0 // pred_check_branch
    %19 = sbr.rel (0) target = $region21
  $region20: #{san_forward.5} parent=0 // pred_region
    _
  $region21: #{san_forward.5} parent=0 // pred_fallthru
    _
  %v21 = vld [vmem:[%s0] sm:$0xff]
  %v22 = vld [vmem:[%s0 + $0x8] sm:$0xff]
  %v23 = vld [vmem:[%s0 + $0x10] sm:$0xff]
  %v24 = vld [vmem:[%s0 + $0x18] sm:$0xff]
  %v25 = vld [vmem:[%s0 + $0x20] sm:$0xff]
  %v26 = vld [vmem:[%s0 + $0x28] sm:$0xff]
  %v27 = vld [vmem:[%s0 + $0x30] sm:$0xff]
  %v28 = vld [vmem:[%s0 + $0x38] sm:$0xff]
  %v29 = vpack.c.bf16 %v23, %v21
  %v30 = vpack.c.bf16 %v24, %v22
  %v31 = vpack.c.bf16 %v27, %v25
  %v32 = vpack.c.bf16 %v28, %v26
  %v33 = vld [vmem:[%s1] sm:$0xff]
  %v34 = vld [vmem:[%s1 + $0x8] sm:$0xff]
  %v35 = vld [vmem:[%s1 + $0x10] sm:$0xff]
  %v36 = vld [vmem:[%s1 + $0x18] sm:$0xff]
  %v37 = vld [vmem:[%s1 + $0x20] sm:$0xff]
  %v38 = vld [vmem:[%s1 + $0x28] sm:$0xff]
  %v39 = vld [vmem:[%s1 + $0x30] sm:$0xff]
  %v40 = vld [vmem:[%s1 + $0x38] sm:$0xff]
  %v41 = vld [vmem:[%s1 + $0x40] sm:$0xff]
  %v42 = vld [vmem:[%s1 + $0x48] sm:$0xff]
  %v43 = vld [vmem:[%s1 + $0x50] sm:$0xff]
  %v44 = vld [vmem:[%s1 + $0x58] sm:$0xff]
  %v45 = vld [vmem:[%s1 + $0x60] sm:$0xff]
  %v46 = vld [vmem:[%s1 + $0x68] sm:$0xff]
  %v47 = vld [vmem:[%s1 + $0x70] sm:$0xff]
  %v48 = vld [vmem:[%s1 + $0x78] sm:$0xff]
  %v49 = vld [vmem:[%s1 + $0x80] sm:$0xff]
  %v50 = vld [vmem:[%s1 + $0x88] sm:$0xff]
  %v51 = vld [vmem:[%s1 + $0x90] sm:$0xff]
  %v52 = vld [vmem:[%s1 + $0x98] sm:$0xff]
  %v53 = vld [vmem:[%s1 + $0xa0] sm:$0xff]
  %v54 = vld [vmem:[%s1 + $0xa8] sm:$0xff]
  %v55 = vld [vmem:[%s1 + $0xb0] sm:$0xff]
  %v56 = vld [vmem:[%s1 + $0xb8] sm:$0xff]
  %v57 = vld [vmem:[%s1 + $0xc0] sm:$0xff]
  %v58 = vld [vmem:[%s1 + $0xc8] sm:$0xff]
  %v59 = vld [vmem:[%s1 + $0xd0] sm:$0xff]
  %v60 = vld [vmem:[%s1 + $0xd8] sm:$0xff]
  %v61 = vld [vmem:[%s1 + $0xe0] sm:$0xff]
  %v62 = vld [vmem:[%s1 + $0xe8] sm:$0xff]
  %v63 = vld [vmem:[%s1 + $0xf0] sm:$0xff]
  %v64 = vld [vmem:[%s1 + $0xf8] sm:$0xff]
  %v65 = vpack.c.bf16 %v34, %v33
  %v66 = vpack.c.bf16 %v36, %v35
  %v67 = vpack.c.bf16 %v38, %v37
  %v68 = vpack.c.bf16 %v40, %v39
  %v69 = vpack.c.bf16 %v42, %v41
  %v70 = vpack.c.bf16 %v44, %v43
  %v71 = vpack.c.bf16 %v46, %v45
  %v72 = vpack.c.bf16 %v48, %v47
  %v73 = vpack.c.bf16 %v50, %v49
  %v74 = vpack.c.bf16 %v52, %v51
  %v75 = vpack.c.bf16 %v54, %v53
  %v76 = vpack.c.bf16 %v56, %v55
  %v77 = vpack.c.bf16 %v58, %v57
  %v78 = vpack.c.bf16 %v60, %v59
  %v79 = vpack.c.bf16 %v62, %v61
  %v80 = vpack.c.bf16 %v64, %v63
  %v81 = vld [vmem:[%s2] sm:$0x1]
  %v83 = vlaneseq
  %v84 = vshrl.u32 %v83, 7
  %v85 = vsub.s32 0, %v84
  %v86 = vrot.slane %v81, %v85
  %88 = vmatprep.subr.bf16.mxu0 0
  %89 = vmatpush1.bf16.msra.mxu0 %v65
  %90 = vmatprep.subr.bf16.mxu0 0
  %91 = vmatpush1.bf16.msra.mxu0 %v66
  %92 = vmatprep.subr.bf16.mxu0 0
  %93 = vmatpush1.bf16.msra.mxu0 %v67
  %94 = vmatprep.subr.bf16.mxu0 0
  %95 = vmatpush1.bf16.msra.mxu0 %v68
  %96 = vmatprep.subr.bf16.mxu0 0
  %97 = vmatpush1.bf16.msra.mxu0 %v69
  %98 = vmatprep.subr.bf16.mxu0 0
  %99 = vmatpush1.bf16.msra.mxu0 %v70
  %100 = vmatprep.subr.bf16.mxu0 0
  %101 = vmatpush1.bf16.msra.mxu0 %v71
  %102 = vmatprep.subr.bf16.mxu0 0
  %103 = vmatpush1.bf16.msra.mxu0 %v72
  %104 = vmatprep.subr.bf16.mxu0 0
  %105 = vmatpush1.bf16.msra.mxu0 %v73
  %106 = vmatprep.subr.bf16.mxu0 0
  %107 = vmatpush1.bf16.msra.mxu0 %v74
  %108 = vmatprep.subr.bf16.mxu0 0
  %109 = vmatpush1.bf16.msra.mxu0 %v75
  %110 = vmatprep.subr.bf16.mxu0 0
  %111 = vmatpush1.bf16.msra.mxu0 %v76
  %112 = vmatprep.subr.bf16.mxu0 0
  %113 = vmatpush1.bf16.msra.mxu0 %v77
  %114 = vmatprep.subr.bf16.mxu0 0
  %115 = vmatpush1.bf16.msra.mxu0 %v78
  %116 = vmatprep.subr.bf16.mxu0 0
  %117 = vmatpush1.bf16.msra.mxu0 %v79
  %118 = vmatprep.subr.bf16.mxu0 0
  %119 = vmatpush1.bf16.msra.mxu0 %v80
  %120 = vmatprep.mubr.bf16.mxu0 %v30
  %121 = vmatmul.mubr.bf16.gmra.mrb[0].mxu0 %v29
  %v122 = vpop.f32.mrb[0].mxu0
  %v123 = vadd.f32 %v86, %v122
  %v124 = vpop.f32.mrb[0].mxu0
  %v125 = vpop.f32.mrb[0].mxu0
  %v126 = vadd.f32 %v86, %v125
  %v127 = vpop.f32.mrb[0].mxu0
  %128 = vmatprep.mubr.bf16.mxu0 %v32
  %129 = vmatmul.mubr.bf16.gmra.mrb[0].mxu0 %v31
  %v130 = vpop.f32.mrb[0].mxu0
  %v131 = vadd.f32 %v86, %v130
  %v132 = vpop.f32.mrb[0].mxu0
  %v133 = vpop.f32.mrb[0].mxu0
  %v134 = vadd.f32 %v86, %v133
  %v135 = vpop.f32.mrb[0].mxu0
  %136 = vdwg.mxu0
  %v137 = vpack.c.bf16 %v126, %v123
  %v138 = vpack.c.bf16 %v134, %v131
  %v139 = vld [vmem:[%s3] sm:$0xff]
  %v140 = vld [vmem:[%s3 + $0x8] sm:$0xff]
  %v141 = vld [vmem:[%s3 + $0x10] sm:$0xff]
  %v142 = vld [vmem:[%s3 + $0x18] sm:$0xff]
  %v143 = vld [vmem:[%s3 + $0x20] sm:$0xff]
  %v144 = vld [vmem:[%s3 + $0x28] sm:$0xff]
  %v145 = vld [vmem:[%s3 + $0x30] sm:$0xff]
  %v146 = vld [vmem:[%s3 + $0x38] sm:$0xff]
  %v147 = vld [vmem:[%s3 + $0x40] sm:$0xff]
  %v148 = vld [vmem:[%s3 + $0x48] sm:$0xff]
  %v149 = vld [vmem:[%s3 + $0x50] sm:$0xff]
  %v150 = vld [vmem:[%s3 + $0x58] sm:$0xff]
  %v151 = vld [vmem:[%s3 + $0x60] sm:$0xff]
  %v152 = vld [vmem:[%s3 + $0x68] sm:$0xff]
  %v153 = vld [vmem:[%s3 + $0x70] sm:$0xff]
  %v154 = vld [vmem:[%s3 + $0x78] sm:$0xff]
  %v155 = vpack.c.bf16 %v140, %v139
  %v156 = vpack.c.bf16 %v142, %v141
  %v157 = vpack.c.bf16 %v144, %v143
  %v158 = vpack.c.bf16 %v146, %v145
  %v159 = vpack.c.bf16 %v148, %v147
  %v160 = vpack.c.bf16 %v150, %v149
  %v161 = vpack.c.bf16 %v152, %v151
  %v162 = vpack.c.bf16 %v154, %v153
  %v163 = vld [vmem:[%s4] sm:$0x1]
  %v165 = vlaneseq
  %v166 = vshrl.u32 %v165, 7
  %v167 = vsub.s32 0, %v166
  %v168 = vrot.slane %v163, %v167
  %170 = vmatprep.subr.bf16.mxu0 0
  %171 = vmatpush1.bf16.msra.mxu0 %v155
  %172 = vmatprep.subr.bf16.mxu0 0
  %173 = vmatpush1.bf16.msra.mxu0 %v156
  %174 = vmatprep.subr.bf16.mxu0 0
  %175 = vmatpush1.bf16.msra.mxu0 %v157
  %176 = vmatprep.subr.bf16.mxu0 0
  %177 = vmatpush1.bf16.msra.mxu0 %v158
  %178 = vmatprep.subr.bf16.mxu0 0
  %179 = vmatpush1.bf16.msra.mxu0 %v159
  %180 = vmatprep.subr.bf16.mxu0 0
  %181 = vmatpush1.bf16.msra.mxu0 %v160
  %182 = vmatprep.subr.bf16.mxu0 0
  %183 = vmatpush1.bf16.msra.mxu0 %v161
  %184 = vmatprep.subr.bf16.mxu0 0
  %185 = vmatpush1.bf16.msra.mxu0 %v162
  %186 = vmatprep.subr.bf16.mxu0 0
  %187 = vmatpush1.bf16.msra.mxu0 0
  %188 = vmatprep.subr.bf16.mxu0 0
  %189 = vmatpush1.bf16.msra.mxu0 0
  %190 = vmatprep.subr.bf16.mxu0 0
  %191 = vmatpush1.bf16.msra.mxu0 0
  %192 = vmatprep.subr.bf16.mxu0 0
  %193 = vmatpush1.bf16.msra.mxu0 0
  %194 = vmatprep.subr.bf16.mxu0 0
  %195 = vmatpush1.bf16.msra.mxu0 0
  %196 = vmatprep.subr.bf16.mxu0 0
  %197 = vmatpush1.bf16.msra.mxu0 0
  %198 = vmatprep.subr.bf16.mxu0 0
  %199 = vmatpush1.bf16.msra.mxu0 0
  %200 = vmatprep.subr.bf16.mxu0 0
  %201 = vmatpush1.bf16.msra.mxu0 0
  %202 = vmatprep.mubr.bf16.mxu0 0
  %203 = vmatmul.mubr.bf16.gmra.mrb[0].mxu0 %v137
  %v204 = vpop.f32.mrb[0].mxu0
  %v205 = vadd.f32 %v168, %v204
  %v206 = vpop.f32.mrb[0].mxu0
  %v207 = vpop.f32.mrb[0].mxu0
  %v208 = vadd.f32 %v168, %v207
  %v209 = vpop.f32.mrb[0].mxu0
  %210 = vmatprep.mubr.bf16.mxu0 0
  %211 = vmatmul.mubr.bf16.gmra.mrb[0].mxu0 %v138
  %v212 = vpop.f32.mrb[0].mxu0
  %v213 = vadd.f32 %v168, %v212
  %v214 = vpop.f32.mrb[0].mxu0
  %v215 = vpop.f32.mrb[0].mxu0
  %v216 = vadd.f32 %v168, %v215
  %v217 = vpop.f32.mrb[0].mxu0
  %218 = vdwg.mxu0
  %v219 = vtanh.pop %v205
  %v220 = vtanh.pop %v208
  %v221 = vtanh.pop %v213
  %v222 = vtanh.pop %v216
  %223 = vst [vmem:[%s5] sm:$0xff] %v219
  %224 = vst [vmem:[%s5 + $0x8] sm:$0xff] %v220
  %225 = vst [vmem:[%s5 + $0x10] sm:$0xff] %v221
  %226 = vst [vmem:[%s5 + $0x18] sm:$0xff] %v222
  // Predicated region
  $region22: #{san_forward.5} parent=0 // pred_check
    _
  $region23: #{san_forward.5} parent=0 // pred_check_branch
    %228 = sbr.rel (0) target = $region25
  $region24: #{san_forward.5} parent=0 // pred_region
    _
  $region25: #{san_forward.5} parent=0 // pred_fallthru
    _
  // Predicated region
  $region26: #{san_forward.5} parent=0 // pred_check
    _
  $region27: #{san_forward.5} parent=0 // pred_check_branch
    %230 = sbr.rel (0) target = $region29
  $region28: #{san_forward.5} parent=0 // pred_region
    _
  $region29: #{san_forward.5} parent=0 // pred_fallthru
    _

// kernel: san_forward.6
$region0: #{san_forward.6}
  #allocation0 [shape = 'u32[]', space=smem, size = 0x4, offset = 0x4, fixed_abs, tag = 'smem constant byte address 0x4 - core index']
  #allocation1 [shape = 'u32[144,128]{1,0:T(1,128)}', space=vmem, size = 0x12000, scoped, tag = 'internal scratch']
  #allocation2 [shape = 'f32[16,512]{1,0:T(8,128)}', space=vmem, size = 0x8000, scoped, tag = 'scratch operand']
  %s0 = inlined_call_operand.vmem [shape: f32[16,128], index: 0, kind: input, shape index: {}]
  %s1 = inlined_call_operand.vmem [shape: f32[128,512], index: 1, kind: input, shape index: {}]
  %s2 = inlined_call_operand.vmem [shape: f32[1,512], index: 2, kind: input, shape index: {}]
  %s3 = inlined_call_operand.vmem [shape: f32[16,512], index: 3, kind: output, shape index: {}]
  %s4 = sld [smem:[#allocation0]]
  $region30: #{san_forward.6} parent=0
    _
  %s6 = ssub.s32 1, %s4
  %s7 = scalar_select 0, %s6, %s4
  // Predicated region
  $region2: #{san_forward.6} parent=0 // pred_check
    _
  $region3: #{san_forward.6} parent=0 // pred_check_branch
    %9 = sbr.rel (0) target = $region5
  $region4: #{san_forward.6} parent=0 // pred_region
    _
  $region5: #{san_forward.6} parent=0 // pred_fallthru
    _
  // Predicated region
  $region6: #{san_forward.6} parent=0 // pred_check
    _
  $region7: #{san_forward.6} parent=0 // pred_check_branch
    %11 = sbr.rel (0) target = $region9
  $region8: #{san_forward.6} parent=0 // pred_region
    _
  $region9: #{san_forward.6} parent=0 // pred_fallthru
    _
  // Predicated region
  $region10: #{san_forward.6} parent=0 // pred_check
    _
  $region11: #{san_forward.6} parent=0 // pred_check_branch
    %13 = sbr.rel (0) target = $region13
  $region12: #{san_forward.6} parent=0 // pred_region
    _
  $region13: #{san_forward.6} parent=0 // pred_fallthru
    _
  %p15 = scmp.eq.s32.totalorder 0, 0
  // Predicated region
  $region14: #{san_forward.6} parent=0 // pred_check
    %p16 = pneg %p15
  $region15: #{san_forward.6} parent=0 // pred_check_branch
    %18 = sbr.rel (%p16) target = $region17
  $region16: #{san_forward.6} parent=0 // pred_region
    %19 = vst [vmem:[#allocation2] sm:$0xff] 0.0
    %20 = vst [vmem:[#allocation2 + $0x8] sm:$0xff] 0.0
    %21 = vst [vmem:[#allocation2 + $0x10] sm:$0xff] 0.0
    %22 = vst [vmem:[#allocation2 + $0x18] sm:$0xff] 0.0
    %23 = vst [vmem:[#allocation2 + $0x20] sm:$0xff] 0.0
    %24 = vst [vmem:[#allocation2 + $0x28] sm:$0xff] 0.0
    %25 = vst [vmem:[#allocation2 + $0x30] sm:$0xff] 0.0
    %26 = vst [vmem:[#allocation2 + $0x38] sm:$0xff] 0.0
  $region17: #{san_forward.6} parent=0 // pred_fallthru
    _
  %v27 = vld [vmem:[#allocation2] sm:$0xff]
  %v28 = vld [vmem:[#allocation2 + $0x8] sm:$0xff]
  %v29 = vld [vmem:[#allocation2 + $0x10] sm:$0xff]
  %v30 = vld [vmem:[#allocation2 + $0x18] sm:$0xff]
  %v31 = vld [vmem:[#allocation2 + $0x20] sm:$0xff]
  %v32 = vld [vmem:[#allocation2 + $0x28] sm:$0xff]
  %v33 = vld [vmem:[#allocation2 + $0x30] sm:$0xff]
  %v34 = vld [vmem:[#allocation2 + $0x38] sm:$0xff]
  %v35 = vld [vmem:[%s0] sm:$0xff]
  %v36 = vld [vmem:[%s0 + $0x8] sm:$0xff]
  %v37 = vpack.c.bf16 %v36, %v35
  %v38 = vld [vmem:[%s1] sm:$0xff]
  %v39 = vld [vmem:[%s1 + $0x8] sm:$0xff]
  %v40 = vld [vmem:[%s1 + $0x10] sm:$0xff]
  %v41 = vld [vmem:[%s1 + $0x18] sm:$0xff]
  %v42 = vld [vmem:[%s1 + $0x20] sm:$0xff]
  %v43 = vld [vmem:[%s1 + $0x28] sm:$0xff]
  %v44 = vld [vmem:[%s1 + $0x30] sm:$0xff]
  %v45 = vld [vmem:[%s1 + $0x38] sm:$0xff]
  %v46 = vld [vmem:[%s1 + $0x40] sm:$0xff]
  %v47 = vld [vmem:[%s1 + $0x48] sm:$0xff]
  %v48 = vld [vmem:[%s1 + $0x50] sm:$0xff]
  %v49 = vld [vmem:[%s1 + $0x58] sm:$0xff]
  %v50 = vld [vmem:[%s1 + $0x60] sm:$0xff]
  %v51 = vld [vmem:[%s1 + $0x68] sm:$0xff]
  %v52 = vld [vmem:[%s1 + $0x70] sm:$0xff]
  %v53 = vld [vmem:[%s1 + $0x78] sm:$0xff]
  %v54 = vld [vmem:[%s1 + $0x80] sm:$0xff]
  %v55 = vld [vmem:[%s1 + $0x88] sm:$0xff]
  %v56 = vld [vmem:[%s1 + $0x90] sm:$0xff]
  %v57 = vld [vmem:[%s1 + $0x98] sm:$0xff]
  %v58 = vld [vmem:[%s1 + $0xa0] sm:$0xff]
  %v59 = vld [vmem:[%s1 + $0xa8] sm:$0xff]
  %v60 = vld [vmem:[%s1 + $0xb0] sm:$0xff]
  %v61 = vld [vmem:[%s1 + $0xb8] sm:$0xff]
  %v62 = vld [vmem:[%s1 + $0xc0] sm:$0xff]
  %v63 = vld [vmem:[%s1 + $0xc8] sm:$0xff]
  %v64 = vld [vmem:[%s1 + $0xd0] sm:$0xff]
  %v65 = vld [vmem:[%s1 + $0xd8] sm:$0xff]
  %v66 = vld [vmem:[%s1 + $0xe0] sm:$0xff]
  %v67 = vld [vmem:[%s1 + $0xe8] sm:$0xff]
  %v68 = vld [vmem:[%s1 + $0xf0] sm:$0xff]
  %v69 = vld [vmem:[%s1 + $0xf8] sm:$0xff]
  %v70 = vld [vmem:[%s1 + $0x100] sm:$0xff]
  %v71 = vld [vmem:[%s1 + $0x108] sm:$0xff]
  %v72 = vld [vmem:[%s1 + $0x110] sm:$0xff]
  %v73 = vld [vmem:[%s1 + $0x118] sm:$0xff]
  %v74 = vld [vmem:[%s1 + $0x120] sm:$0xff]
  %v75 = vld [vmem:[%s1 + $0x128] sm:$0xff]
  %v76 = vld [vmem:[%s1 + $0x130] sm:$0xff]
  %v77 = vld [vmem:[%s1 + $0x138] sm:$0xff]
  %v78 = vld [vmem:[%s1 + $0x140] sm:$0xff]
  %v79 = vld [vmem:[%s1 + $0x148] sm:$0xff]
  %v80 = vld [vmem:[%s1 + $0x150] sm:$0xff]
  %v81 = vld [vmem:[%s1 + $0x158] sm:$0xff]
  %v82 = vld [vmem:[%s1 + $0x160] sm:$0xff]
  %v83 = vld [vmem:[%s1 + $0x168] sm:$0xff]
  %v84 = vld [vmem:[%s1 + $0x170] sm:$0xff]
  %v85 = vld [vmem:[%s1 + $0x178] sm:$0xff]
  %v86 = vld [vmem:[%s1 + $0x180] sm:$0xff]
  %v87 = vld [vmem:[%s1 + $0x188] sm:$0xff]
  %v88 = vld [vmem:[%s1 + $0x190] sm:$0xff]
  %v89 = vld [vmem:[%s1 + $0x198] sm:$0xff]
  %v90 = vld [vmem:[%s1 + $0x1a0] sm:$0xff]
  %v91 = vld [vmem:[%s1 + $0x1a8] sm:$0xff]
  %v92 = vld [vmem:[%s1 + $0x1b0] sm:$0xff]
  %v93 = vld [vmem:[%s1 + $0x1b8] sm:$0xff]
  %v94 = vld [vmem:[%s1 + $0x1c0] sm:$0xff]
  %v95 = vld [vmem:[%s1 + $0x1c8] sm:$0xff]
  %v96 = vld [vmem:[%s1 + $0x1d0] sm:$0xff]
  %v97 = vld [vmem:[%s1 + $0x1d8] sm:$0xff]
  %v98 = vld [vmem:[%s1 + $0x1e0] sm:$0xff]
  %v99 = vld [vmem:[%s1 + $0x1e8] sm:$0xff]
  %v100 = vld [vmem:[%s1 + $0x1f0] sm:$0xff]
  %v101 = vld [vmem:[%s1 + $0x1f8] sm:$0xff]
  %v102 = vpack.c.bf16 %v42, %v38
  %v103 = vpack.c.bf16 %v43, %v39
  %v104 = vpack.c.bf16 %v44, %v40
  %v105 = vpack.c.bf16 %v45, %v41
  %v106 = vpack.c.bf16 %v50, %v46
  %v107 = vpack.c.bf16 %v51, %v47
  %v108 = vpack.c.bf16 %v52, %v48
  %v109 = vpack.c.bf16 %v53, %v49
  %v110 = vpack.c.bf16 %v58, %v54
  %v111 = vpack.c.bf16 %v59, %v55
  %v112 = vpack.c.bf16 %v60, %v56
  %v113 = vpack.c.bf16 %v61, %v57
  %v114 = vpack.c.bf16 %v66, %v62
  %v115 = vpack.c.bf16 %v67, %v63
  %v116 = vpack.c.bf16 %v68, %v64
  %v117 = vpack.c.bf16 %v69, %v65
  %v118 = vpack.c.bf16 %v74, %v70
  %v119 = vpack.c.bf16 %v75, %v71
  %v120 = vpack.c.bf16 %v76, %v72
  %v121 = vpack.c.bf16 %v77, %v73
  %v122 = vpack.c.bf16 %v82, %v78
  %v123 = vpack.c.bf16 %v83, %v79
  %v124 = vpack.c.bf16 %v84, %v80
  %v125 = vpack.c.bf16 %v85, %v81
  %v126 = vpack.c.bf16 %v90, %v86
  %v127 = vpack.c.bf16 %v91, %v87
  %v128 = vpack.c.bf16 %v92, %v88
  %v129 = vpack.c.bf16 %v93, %v89
  %v130 = vpack.c.bf16 %v98, %v94
  %v131 = vpack.c.bf16 %v99, %v95
  %v132 = vpack.c.bf16 %v100, %v96
  %v133 = vpack.c.bf16 %v101, %v97
  %134 = vmatprep.subr.bf16.mxu0 %v103
  %135 = vmatpush1.bf16.msra.mxu0 %v102
  %136 = vmatprep.subr.bf16.mxu0 %v107
  %137 = vmatpush1.bf16.msra.mxu0 %v106
  %138 = vmatprep.subr.bf16.mxu0 %v111
  %139 = vmatpush1.bf16.msra.mxu0 %v110
  %140 = vmatprep.subr.bf16.mxu0 %v115
  %141 = vmatpush1.bf16.msra.mxu0 %v114
  %142 = vmatprep.subr.bf16.mxu0 %v119
  %143 = vmatpush1.bf16.msra.mxu0 %v118
  %144 = vmatprep.subr.bf16.mxu0 %v123
  %145 = vmatpush1.bf16.msra.mxu0 %v122
  %146 = vmatprep.subr.bf16.mxu0 %v127
  %147 = vmatpush1.bf16.msra.mxu0 %v126
  %148 = vmatprep.subr.bf16.mxu0 %v131
  %149 = vmatpush1.bf16.msra.mxu0 %v130
  %150 = vmatprep.subr.bf16.mxu0 0
  %151 = vmatpush1.bf16.msra.mxu0 0
  %152 = vmatprep.subr.bf16.mxu0 0
  %153 = vmatpush1.bf16.msra.mxu0 0
  %154 = vmatprep.subr.bf16.mxu0 0
  %155 = vmatpush1.bf16.msra.mxu0 0
  %156 = vmatprep.subr.bf16.mxu0 0
  %157 = vmatpush1.bf16.msra.mxu0 0
  %158 = vmatprep.subr.bf16.mxu0 0
  %159 = vmatpush1.bf16.msra.mxu0 0
  %160 = vmatprep.subr.bf16.mxu0 0
  %161 = vmatpush1.bf16.msra.mxu0 0
  %162 = vmatprep.subr.bf16.mxu0 0
  %163 = vmatpush1.bf16.msra.mxu0 0
  %164 = vmatprep.subr.bf16.mxu0 0
  %165 = vmatpush1.bf16.msra.mxu0 0
  %166 = vmatprep.mubr.bf16.mxu0 0
  %167 = vmatmul.mubr.bf16.gmra.mrb[0].mxu0 %v37
  %v168 = vpop.f32.mrb[0].mxu0
  %v169 = vadd.f32 0.0, %v168
  %v170 = vpop.f32.mrb[0].mxu0
  %v171 = vadd.f32 0.0, %v170
  %v172 = vpop.f32.mrb[0].mxu0
  %v173 = vadd.f32 0.0, %v172
  %v174 = vpop.f32.mrb[0].mxu0
  %v175 = vadd.f32 0.0, %v174
  %176 = vdwg.mxu0
  %177 = vmatprep.subr.bf16.mxu0 %v105
  %178 = vmatpush1.bf16.msra.mxu0 %v104
  %179 = vmatprep.subr.bf16.mxu0 %v109
  %180 = vmatpush1.bf16.msra.mxu0 %v108
  %181 = vmatprep.subr.bf16.mxu0 %v113
  %182 = vmatpush1.bf16.msra.mxu0 %v112
  %183 = vmatprep.subr.bf16.mxu0 %v117
  %184 = vmatpush1.bf16.msra.mxu0 %v116
  %185 = vmatprep.subr.bf16.mxu0 %v121
  %186 = vmatpush1.bf16.msra.mxu0 %v120
  %187 = vmatprep.subr.bf16.mxu0 %v125
  %188 = vmatpush1.bf16.msra.mxu0 %v124
  %189 = vmatprep.subr.bf16.mxu0 %v129
  %190 = vmatpush1.bf16.msra.mxu0 %v128
  %191 = vmatprep.subr.bf16.mxu0 %v133
  %192 = vmatpush1.bf16.msra.mxu0 %v132
  %193 = vmatprep.subr.bf16.mxu0 0
  %194 = vmatpush1.bf16.msra.mxu0 0
  %195 = vmatprep.subr.bf16.mxu0 0
  %196 = vmatpush1.bf16.msra.mxu0 0
  %197 = vmatprep.subr.bf16.mxu0 0
  %198 = vmatpush1.bf16.msra.mxu0 0
  %199 = vmatprep.subr.bf16.mxu0 0
  %200 = vmatpush1.bf16.msra.mxu0 0
  %201 = vmatprep.subr.bf16.mxu0 0
  %202 = vmatpush1.bf16.msra.mxu0 0
  %203 = vmatprep.subr.bf16.mxu0 0
  %204 = vmatpush1.bf16.msra.mxu0 0
  %205 = vmatprep.subr.bf16.mxu0 0
  %206 = vmatpush1.bf16.msra.mxu0 0
  %207 = vmatprep.subr.bf16.mxu0 0
  %208 = vmatpush1.bf16.msra.mxu0 0
  %209 = vmatprep.mubr.bf16.mxu0 0
  %210 = vmatmul.mubr.bf16.gmra.mrb[0].mxu0 %v37
  %v211 = vpop.f32.mrb[0].mxu0
  %v212 = vadd.f32 0.0, %v211
  %v213 = vpop.f32.mrb[0].mxu0
  %v214 = vadd.f32 0.0, %v213
  %v215 = vpop.f32.mrb[0].mxu0
  %v216 = vadd.f32 0.0, %v215
  %v217 = vpop.f32.mrb[0].mxu0
  %v218 = vadd.f32 0.0, %v217
  %219 = vdwg.mxu0
  %v220 = vadd.f32 %v27, %v169
  %v221 = vadd.f32 %v28, %v171
  %v222 = vadd.f32 %v29, %v212
  %v223 = vadd.f32 %v30, %v214
  %v224 = vadd.f32 %v31, %v173
  %v225 = vadd.f32 %v32, %v175
  %v226 = vadd.f32 %v33, %v216
  %v227 = vadd.f32 %v34, %v218
  %228 = vst [vmem:[#allocation2] sm:$0xff] %v220
  %229 = vst [vmem:[#allocation2 + $0x8] sm:$0xff] %v221
  %230 = vst [vmem:[#allocation2 + $0x10] sm:$0xff] %v222
  %231 = vst [vmem:[#allocation2 + $0x18] sm:$0xff] %v223
  %232 = vst [vmem:[#allocation2 + $0x20] sm:$0xff] %v224
  %233 = vst [vmem:[#allocation2 + $0x28] sm:$0xff] %v225
  %234 = vst [vmem:[#allocation2 + $0x30] sm:$0xff] %v226
  %235 = vst [vmem:[#allocation2 + $0x38] sm:$0xff] %v227
  // Predicated region
  $region18: #{san_forward.6} parent=0 // pred_check
    %p236 = pneg %p15
  $region19: #{san_forward.6} parent=0 // pred_check_branch
    %238 = sbr.rel (%p236) target = $region21
  $region20: #{san_forward.6} parent=0 // pred_region
    %v239 = vld [vmem:[#allocation2] sm:$0xff]
    %v240 = vld [vmem:[#allocation2 + $0x8] sm:$0xff]
    %v241 = vld [vmem:[#allocation2 + $0x10] sm:$0xff]
    %v242 = vld [vmem:[#allocation2 + $0x18] sm:$0xff]
    %v243 = vld [vmem:[#allocation2 + $0x20] sm:$0xff]
    %v244 = vld [vmem:[#allocation2 + $0x28] sm:$0xff]
    %v245 = vld [vmem:[#allocation2 + $0x30] sm:$0xff]
    %v246 = vld [vmem:[#allocation2 + $0x38] sm:$0xff]
    %v247 = vld [vmem:[%s2] sm:$0xf]
    %v249 = vlaneseq
    %v250 = vshrl.u32 %v249, 7
    %v251 = vsub.s32 0, %v250
    %v252 = vrot.slane %v247, %v251
    %v253 = vlaneseq
    %v254 = vshrl.u32 %v253, 7
    %v255 = vsub.s32 1, %v254
    %v256 = vrot.slane %v247, %v255
    %v257 = vlaneseq
    %v258 = vshrl.u32 %v257, 7
    %v259 = vsub.s32 2, %v258
    %v260 = vrot.slane %v247, %v259
    %v261 = vlaneseq
    %v262 = vshrl.u32 %v261, 7
    %v263 = vsub.s32 3, %v262
    %v264 = vrot.slane %v247, %v263
    %v269 = vadd.f32 %v239, %v252
    %v270 = vadd.f32 %v240, %v256
    %v271 = vadd.f32 %v241, %v260
    %v272 = vadd.f32 %v242, %v264
    %v273 = vadd.f32 %v243, %v252
    %v274 = vadd.f32 %v244, %v256
    %v275 = vadd.f32 %v245, %v260
    %v276 = vadd.f32 %v246, %v264
    %277 = vst [vmem:[%s3] sm:$0xff] %v269
    %278 = vst [vmem:[%s3 + $0x8] sm:$0xff] %v270
    %279 = vst [vmem:[%s3 + $0x10] sm:$0xff] %v271
    %280 = vst [vmem:[%s3 + $0x18] sm:$0xff] %v272
    %281 = vst [vmem:[%s3 + $0x20] sm:$0xff] %v273
    %282 = vst [vmem:[%s3 + $0x28] sm:$0xff] %v274
    %283 = vst [vmem:[%s3 + $0x30] sm:$0xff] %v275
    %284 = vst [vmem:[%s3 + $0x38] sm:$0xff] %v276
  $region21: #{san_forward.6} parent=0 // pred_fallthru
    _
  // Predicated region
  $region22: #{san_forward.6} parent=0 // pred_check
    _
  $region23: #{san_forward.6} parent=0 // pred_check_branch
    %286 = sbr.rel (0) target = $region25
  $region24: #{san_forward.6} parent=0 // pred_region
    _
  $region25: #{san_forward.6} parent=0 // pred_fallthru
    _
  // Predicated region
  $region26: #{san_forward.6} parent=0 // pred_check
    _
  $region27: #{san_forward.6} parent=0 // pred_check_branch
    %288 = sbr.rel (0) target = $region29
  $region28: #{san_forward.6} parent=0 // pred_region
    _
  $region29: #{san_forward.6} parent=0 // pred_fallthru
    _

// kernel: san_forward.7
$region0: #{san_forward.7}
  #allocation0 [shape = 'u32[]', space=smem, size = 0x4, offset = 0x4, fixed_abs, tag = 'smem constant byte address 0x4 - core index']
  #allocation1 [shape = 'u32[144,128]{1,0:T(1,128)}', space=vmem, size = 0x12000, scoped, tag = 'internal scratch']
  %s0 = inlined_call_operand.vmem [shape: f32[8,4096], index: 0, kind: input, shape index: {}]
  %s1 = inlined_call_operand.vmem [shape: f32[128,512], index: 1, kind: input, shape index: {}]
  %s2 = inlined_call_operand.vmem [shape: f32[8,128], index: 2, kind: output, shape index: {}]
  %s3 = sld [smem:[#allocation0]]
  $region25: #{san_forward.7} parent=0
    _
  %s5 = ssub.s32 1, %s3
  %s6 = scalar_select 0, %s5, %s3
  // Predicated region
  $region2: #{san_forward.7} parent=0 // pred_check
    _
  $region3: #{san_forward.7} parent=0 // pred_check_branch
    %8 = sbr.rel (0) target = $region5
  $region4: #{san_forward.7} parent=0 // pred_region
    _
  $region5: #{san_forward.7} parent=0 // pred_fallthru
    _
  // Predicated region
  $region6: #{san_forward.7} parent=0 // pred_check
    _
  $region7: #{san_forward.7} parent=0 // pred_check_branch
    %10 = sbr.rel (0) target = $region9
  $region8: #{san_forward.7} parent=0 // pred_region
    _
  $region9: #{san_forward.7} parent=0 // pred_fallthru
    _
  %v12 = vld [vmem:[%s1] sm:$0xff]
  %v13 = vld [vmem:[%s1 + $0x8] sm:$0xff]
  %v14 = vld [vmem:[%s1 + $0x10] sm:$0xff]
  %v15 = vld [vmem:[%s1 + $0x18] sm:$0xff]
  %v16 = vld [vmem:[%s1 + $0x20] sm:$0xff]
  %v17 = vld [vmem:[%s1 + $0x28] sm:$0xff]
  %v18 = vld [vmem:[%s1 + $0x30] sm:$0xff]
  %v19 = vld [vmem:[%s1 + $0x38] sm:$0xff]
  %v20 = vld [vmem:[%s1 + $0x40] sm:$0xff]
  %v21 = vld [vmem:[%s1 + $0x48] sm:$0xff]
  %v22 = vld [vmem:[%s1 + $0x50] sm:$0xff]
  %v23 = vld [vmem:[%s1 + $0x58] sm:$0xff]
  %v24 = vld [vmem:[%s1 + $0x60] sm:$0xff]
  %v25 = vld [vmem:[%s1 + $0x68] sm:$0xff]
  %v26 = vld [vmem:[%s1 + $0x70] sm:$0xff]
  %v27 = vld [vmem:[%s1 + $0x78] sm:$0xff]
  %v28 = vld [vmem:[%s1 + $0x80] sm:$0xff]
  %v29 = vld [vmem:[%s1 + $0x88] sm:$0xff]
  %v30 = vld [vmem:[%s1 + $0x90] sm:$0xff]
  %v31 = vld [vmem:[%s1 + $0x98] sm:$0xff]
  %v32 = vld [vmem:[%s1 + $0xa0] sm:$0xff]
  %v33 = vld [vmem:[%s1 + $0xa8] sm:$0xff]
  %v34 = vld [vmem:[%s1 + $0xb0] sm:$0xff]
  %v35 = vld [vmem:[%s1 + $0xb8] sm:$0xff]
  %v36 = vld [vmem:[%s1 + $0xc0] sm:$0xff]
  %v37 = vld [vmem:[%s1 + $0xc8] sm:$0xff]
  %v38 = vld [vmem:[%s1 + $0xd0] sm:$0xff]
  %v39 = vld [vmem:[%s1 + $0xd8] sm:$0xff]
  %v40 = vld [vmem:[%s1 + $0xe0] sm:$0xff]
  %v41 = vld [vmem:[%s1 + $0xe8] sm:$0xff]
  %v42 = vld [vmem:[%s1 + $0xf0] sm:$0xff]
  %v43 = vld [vmem:[%s1 + $0xf8] sm:$0xff]
  %v44 = vld [vmem:[%s1 + $0x100] sm:$0xff]
  %v45 = vld [vmem:[%s1 + $0x108] sm:$0xff]
  %v46 = vld [vmem:[%s1 + $0x110] sm:$0xff]
  %v47 = vld [vmem:[%s1 + $0x118] sm:$0xff]
  %v48 = vld [vmem:[%s1 + $0x120] sm:$0xff]
  %v49 = vld [vmem:[%s1 + $0x128] sm:$0xff]
  %v50 = vld [vmem:[%s1 + $0x130] sm:$0xff]
  %v51 = vld [vmem:[%s1 + $0x138] sm:$0xff]
  %v52 = vld [vmem:[%s1 + $0x140] sm:$0xff]
  %v53 = vld [vmem:[%s1 + $0x148] sm:$0xff]
  %v54 = vld [vmem:[%s1 + $0x150] sm:$0xff]
  %v55 = vld [vmem:[%s1 + $0x158] sm:$0xff]
  %v56 = vld [vmem:[%s1 + $0x160] sm:$0xff]
  %v57 = vld [vmem:[%s1 + $0x168] sm:$0xff]
  %v58 = vld [vmem:[%s1 + $0x170] sm:$0xff]
  %v59 = vld [vmem:[%s1 + $0x178] sm:$0xff]
  %v60 = vld [vmem:[%s1 + $0x180] sm:$0xff]
  %v61 = vld [vmem:[%s1 + $0x188] sm:$0xff]
  %v62 = vld [vmem:[%s1 + $0x190] sm:$0xff]
  %v63 = vld [vmem:[%s1 + $0x198] sm:$0xff]
  %v64 = vld [vmem:[%s1 + $0x1a0] sm:$0xff]
  %v65 = vld [vmem:[%s1 + $0x1a8] sm:$0xff]
  %v66 = vld [vmem:[%s1 + $0x1b0] sm:$0xff]
  %v67 = vld [vmem:[%s1 + $0x1b8] sm:$0xff]
  %v68 = vld [vmem:[%s1 + $0x1c0] sm:$0xff]
  %v69 = vld [vmem:[%s1 + $0x1c8] sm:$0xff]
  %v70 = vld [vmem:[%s1 + $0x1d0] sm:$0xff]
  %v71 = vld [vmem:[%s1 + $0x1d8] sm:$0xff]
  %v72 = vld [vmem:[%s1 + $0x1e0] sm:$0xff]
  %v73 = vld [vmem:[%s1 + $0x1e8] sm:$0xff]
  %v74 = vld [vmem:[%s1 + $0x1f0] sm:$0xff]
  %v75 = vld [vmem:[%s1 + $0x1f8] sm:$0xff]
  %v76 = vpack.c.bf16 %v16, %v12
  %v77 = vpack.c.bf16 %v17, %v13
  %v78 = vpack.c.bf16 %v18, %v14
  %v79 = vpack.c.bf16 %v19, %v15
  %v80 = vpack.c.bf16 %v24, %v20
  %v81 = vpack.c.bf16 %v25, %v21
  %v82 = vpack.c.bf16 %v26, %v22
  %v83 = vpack.c.bf16 %v27, %v23
  %v84 = vpack.c.bf16 %v32, %v28
  %v85 = vpack.c.bf16 %v33, %v29
  %v86 = vpack.c.bf16 %v34, %v30
  %v87 = vpack.c.bf16 %v35, %v31
  %v88 = vpack.c.bf16 %v40, %v36
  %v89 = vpack.c.bf16 %v41, %v37
  %v90 = vpack.c.bf16 %v42, %v38
  %v91 = vpack.c.bf16 %v43, %v39
  %v92 = vpack.c.bf16 %v48, %v44
  %v93 = vpack.c.bf16 %v49, %v45
  %v94 = vpack.c.bf16 %v50, %v46
  %v95 = vpack.c.bf16 %v51, %v47
  %v96 = vpack.c.bf16 %v56, %v52
  %v97 = vpack.c.bf16 %v57, %v53
  %v98 = vpack.c.bf16 %v58, %v54
  %v99 = vpack.c.bf16 %v59, %v55
  %v100 = vpack.c.bf16 %v64, %v60
  %v101 = vpack.c.bf16 %v65, %v61
  %v102 = vpack.c.bf16 %v66, %v62
  %v103 = vpack.c.bf16 %v67, %v63
  %v104 = vpack.c.bf16 %v72, %v68
  %v105 = vpack.c.bf16 %v73, %v69
  %v106 = vpack.c.bf16 %v74, %v70
  %v107 = vpack.c.bf16 %v75, %v71
  loop: start=0, step=1, limit=8
  $region10: #{san_forward.7} parent=0 // loop_pre_header
    _
  $region11: #{san_forward.7} parent=0 // loop_header
    %s109 = sphi 0, %s113
    %p110 = scmp.ge.s32.totalorder %s109, 8
    %v114 = vphi 0.0, %v235
    %v115 = vphi 0.0, %v233
  $region12: #{san_forward.7} parent=0 // loop_header_branch
    %112 = sbr.rel (%p110) target = $region16
  $region13: #{san_forward.7} parent=0 // loop_body
    %s116 = smul.u32 %s109, 512
    %s117 = sshra.s32 %s116, 7
    %s118 = sand.u32 %s116, 127
    %s119 = smul.addr %s117, 8
    %s120 = scalar_lea.vmem %s0, %s119
    %v121 = vld [vmem:[%s120] sm:$0xff]
    %v122 = vld [vmem:[%s120 + $0x8] sm:$0xff]
    %v123 = vld [vmem:[%s120 + $0x10] sm:$0xff]
    %v124 = vld [vmem:[%s120 + $0x18] sm:$0xff]
    %v125 = vpack.c.bf16 %v114, %v114
    %126 = vmatprep.subr.bf16.mxu0 %v77
    %127 = vmatpush1.bf16.msra.mxu0 %v76
    %128 = vmatprep.subr.bf16.mxu0 %v81
    %129 = vmatpush1.bf16.msra.mxu0 %v80
    %130 = vmatprep.subr.bf16.mxu0 %v85
    %131 = vmatpush1.bf16.msra.mxu0 %v84
    %132 = vmatprep.subr.bf16.mxu0 %v89
    %133 = vmatpush1.bf16.msra.mxu0 %v88
    %134 = vmatprep.subr.bf16.mxu0 %v93
    %135 = vmatpush1.bf16.msra.mxu0 %v92
    %136 = vmatprep.subr.bf16.mxu0 %v97
    %137 = vmatpush1.bf16.msra.mxu0 %v96
    %138 = vmatprep.subr.bf16.mxu0 %v101
    %139 = vmatpush1.bf16.msra.mxu0 %v100
    %140 = vmatprep.subr.bf16.mxu0 %v105
    %141 = vmatpush1.bf16.msra.mxu0 %v104
    %142 = vmatprep.subr.bf16.mxu0 0
    %143 = vmatpush1.bf16.msra.mxu0 0
    %144 = vmatprep.subr.bf16.mxu0 0
    %145 = vmatpush1.bf16.msra.mxu0 0
    %146 = vmatprep.subr.bf16.mxu0 0
    %147 = vmatpush1.bf16.msra.mxu0 0
    %148 = vmatprep.subr.bf16.mxu0 0
    %149 = vmatpush1.bf16.msra.mxu0 0
    %150 = vmatprep.subr.bf16.mxu0 0
    %151 = vmatpush1.bf16.msra.mxu0 0
    %152 = vmatprep.subr.bf16.mxu0 0
    %153 = vmatpush1.bf16.msra.mxu0 0
    %154 = vmatprep.subr.bf16.mxu0 0
    %155 = vmatpush1.bf16.msra.mxu0 0
    %156 = vmatprep.subr.bf16.mxu0 0
    %157 = vmatpush1.bf16.msra.mxu0 0
    %158 = vmatprep.mubr.bf16.mxu0 0
    %159 = vmatmul.mubr.bf16.gmra.mrb[0].mxu0 %v125
    %v160 = vpop.f32.mrb[0].mxu0
    %v161 = vadd.f32 0.0, %v160
    %v162 = vpop.f32.mrb[0].mxu0
    %v163 = vadd.f32 0.0, %v162
    %v164 = vpop.f32.mrb[0].mxu0
    %v165 = vpop.f32.mrb[0].mxu0
    %166 = vdwg.mxu0
    %167 = vmatprep.subr.bf16.mxu0 %v79
    %168 = vmatpush1.bf16.msra.mxu0 %v78
    %169 = vmatprep.subr.bf16.mxu0 %v83
    %170 = vmatpush1.bf16.msra.mxu0 %v82
    %171 = vmatprep.subr.bf16.mxu0 %v87
    %172 = vmatpush1.bf16.msra.mxu0 %v86
    %173 = vmatprep.subr.bf16.mxu0 %v91
    %174 = vmatpush1.bf16.msra.mxu0 %v90
    %175 = vmatprep.subr.bf16.mxu0 %v95
    %176 = vmatpush1.bf16.msra.mxu0 %v94
    %177 = vmatprep.subr.bf16.mxu0 %v99
    %178 = vmatpush1.bf16.msra.mxu0 %v98
    %179 = vmatprep.subr.bf16.mxu0 %v103
    %180 = vmatpush1.bf16.msra.mxu0 %v102
    %181 = vmatprep.subr.bf16.mxu0 %v107
    %182 = vmatpush1.bf16.msra.mxu0 %v106
    %183 = vmatprep.subr.bf16.mxu0 0
    %184 = vmatpush1.bf16.msra.mxu0 0
    %185 = vmatprep.subr.bf16.mxu0 0
    %186 = vmatpush1.bf16.msra.mxu0 0
    %187 = vmatprep.subr.bf16.mxu0 0
    %188 = vmatpush1.bf16.msra.mxu0 0
    %189 = vmatprep.subr.bf16.mxu0 0
    %190 = vmatpush1.bf16.msra.mxu0 0
    %191 = vmatprep.subr.bf16.mxu0 0
    %192 = vmatpush1.bf16.msra.mxu0 0
    %193 = vmatprep.subr.bf16.mxu0 0
    %194 = vmatpush1.bf16.msra.mxu0 0
    %195 = vmatprep.subr.bf16.mxu0 0
    %196 = vmatpush1.bf16.msra.mxu0 0
    %197 = vmatprep.subr.bf16.mxu0 0
    %198 = vmatpush1.bf16.msra.mxu0 0
    %199 = vmatprep.mubr.bf16.mxu0 0
    %200 = vmatmul.mubr.bf16.gmra.mrb[0].mxu0 %v125
    %v201 = vpop.f32.mrb[0].mxu0
    %v202 = vadd.f32 0.0, %v201
    %v203 = vpop.f32.mrb[0].mxu0
    %v204 = vadd.f32 0.0, %v203
    %v205 = vpop.f32.mrb[0].mxu0
    %v206 = vpop.f32.mrb[0].mxu0
    %207 = vdwg.mxu0
    %v208 = vadd.f32 %v121, %v161
    %v209 = vadd.f32 %v122, %v163
    %v210 = vadd.f32 %v123, %v202
    %v211 = vadd.f32 %v124, %v204
    %v212 = vxor.u32 %v208, 2147483648
    %v213 = vmul.f32 %v212, 1.442695
    %v214 = vpow.pop %v213
    %v215 = vadd.f32 %v214, 1.0
    %v216 = vrcp.pop %v215
    %v217 = vmul.f32 1.0, %v216
    %v218 = vxor.u32 %v209, 2147483648
    %v219 = vmul.f32 %v218, 1.442695
    %v220 = vpow.pop %v219
    %v221 = vadd.f32 %v220, 1.0
    %v222 = vrcp.pop %v221
    %v223 = vmul.f32 1.0, %v222
    %v224 = vtanh.pop %v210
    %v225 = vxor.u32 %v211, 2147483648
    %v226 = vmul.f32 %v225, 1.442695
    %v227 = vpow.pop %v226
    %v228 = vadd.f32 %v227, 1.0
    %v229 = vrcp.pop %v228
    %v230 = vmul.f32 1.0, %v229
    %v231 = vmul.f32 %v223, %v115
    %v232 = vmul.f32 %v217, %v224
    %v233 = vadd.f32 %v231, %v232
    %v234 = vtanh.pop %v233
    %v235 = vmul.f32 %v230, %v234
  $region14: #{san_forward.7} parent=0 // loop_footer
    %s113 = sadd.s32 1, %s109
  $region15: #{san_forward.7} parent=0 // loop_footer_branch
    %108 = sbr.rel target = $region11
  $region16: #{san_forward.7} parent=0 // loop_exit
    _
  %236 = vst [vmem:[%s2] sm:$0xff] %v114
  // Predicated region
  $region17: #{san_forward.7} parent=0 // pred_check
    _
  $region18: #{san_forward.7} parent=0 // pred_check_branch
    %238 = sbr.rel (0) target = $region20
  $region19: #{san_forward.7} parent=0 // pred_region
    _
  $region20: #{san_forward.7} parent=0 // pred_fallthru
    _
  // Predicated region
  $region21: #{san_forward.7} parent=0 // pred_check
    _
  $region22: #{san_forward.7} parent=0 // pred_check_branch
    %240 = sbr.rel (0) target = $region24
  $region23: #{san_forward.7} parent=0 // pred_region
    _
  $region24: #{san_forward.7} parent=0 // pred_fallthru
    _

// kernel: san_forward.9
$region0: #{san_forward.9}
  #allocation0 [shape = 'u32[]', space=smem, size = 0x4, offset = 0x4, fixed_abs, tag = 'smem constant byte address 0x4 - core index']
  #allocation1 [shape = 'u32[144,128]{1,0:T(1,128)}', space=vmem, size = 0x12000, scoped, tag = 'internal scratch']
  #allocation2 [shape = 'f32[8,256]{1,0:T(8,128)}', space=vmem, size = 0x2000, scoped, tag = 'scratch operand']
  %s0 = inlined_call_operand.vmem [shape: f32[8,128], index: 0, kind: input, shape index: {}]
  %s1 = inlined_call_operand.vmem [shape: f32[128,256], index: 1, kind: input, shape index: {}]
  %s2 = inlined_call_operand.vmem [shape: f32[1,256], index: 2, kind: input, shape index: {}]
  %s3 = inlined_call_operand.vmem [shape: f32[8,256], index: 3, kind: output, shape index: {}]
  %s4 = sld [smem:[#allocation0]]
  $region30: #{san_forward.9} parent=0
    _
  %s6 = ssub.s32 1, %s4
  %s7 = scalar_select 0, %s6, %s4
  // Predicated region
  $region2: #{san_forward.9} parent=0 // pred_check
    _
  $region3: #{san_forward.9} parent=0 // pred_check_branch
    %9 = sbr.rel (0) target = $region5
  $region4: #{san_forward.9} parent=0 // pred_region
    _
  $region5: #{san_forward.9} parent=0 // pred_fallthru
    _
  // Predicated region
  $region6: #{san_forward.9} parent=0 // pred_check
    _
  $region7: #{san_forward.9} parent=0 // pred_check_branch
    %11 = sbr.rel (0) target = $region9
  $region8: #{san_forward.9} parent=0 // pred_region
    _
  $region9: #{san_forward.9} parent=0 // pred_fallthru
    _
  // Predicated region
  $region10: #{san_forward.9} parent=0 // pred_check
    _
  $region11: #{san_forward.9} parent=0 // pred_check_branch
    %13 = sbr.rel (0) target = $region13
  $region12: #{san_forward.9} parent=0 // pred_region
    _
  $region13: #{san_forward.9} parent=0 // pred_fallthru
    _
  %p15 = scmp.eq.s32.totalorder 0, 0
  // Predicated region
  $region14: #{san_forward.9} parent=0 // pred_check
    %p16 = pneg %p15
  $region15: #{san_forward.9} parent=0 // pred_check_branch
    %18 = sbr.rel (%p16) target = $region17
  $region16: #{san_forward.9} parent=0 // pred_region
    %19 = vst [vmem:[#allocation2] sm:$0xff] 0.0
    %20 = vst [vmem:[#allocation2 + $0x8] sm:$0xff] 0.0
  $region17: #{san_forward.9} parent=0 // pred_fallthru
    _
  %v21 = vld [vmem:[#allocation2] sm:$0xff]
  %v22 = vld [vmem:[#allocation2 + $0x8] sm:$0xff]
  %v23 = vld [vmem:[%s0] sm:$0xff]
  %v24 = vpack.c.bf16 %v23, %v23
  %v25 = vld [vmem:[%s1] sm:$0xff]
  %v26 = vld [vmem:[%s1 + $0x8] sm:$0xff]
  %v27 = vld [vmem:[%s1 + $0x10] sm:$0xff]
  %v28 = vld [vmem:[%s1 + $0x18] sm:$0xff]
  %v29 = vld [vmem:[%s1 + $0x20] sm:$0xff]
  %v30 = vld [vmem:[%s1 + $0x28] sm:$0xff]
  %v31 = vld [vmem:[%s1 + $0x30] sm:$0xff]
  %v32 = vld [vmem:[%s1 + $0x38] sm:$0xff]
  %v33 = vld [vmem:[%s1 + $0x40] sm:$0xff]
  %v34 = vld [vmem:[%s1 + $0x48] sm:$0xff]
  %v35 = vld [vmem:[%s1 + $0x50] sm:$0xff]
  %v36 = vld [vmem:[%s1 + $0x58] sm:$0xff]
  %v37 = vld [vmem:[%s1 + $0x60] sm:$0xff]
  %v38 = vld [vmem:[%s1 + $0x68] sm:$0xff]
  %v39 = vld [vmem:[%s1 + $0x70] sm:$0xff]
  %v40 = vld [vmem:[%s1 + $0x78] sm:$0xff]
  %v41 = vld [vmem:[%s1 + $0x80] sm:$0xff]
  %v42 = vld [vmem:[%s1 + $0x88] sm:$0xff]
  %v43 = vld [vmem:[%s1 + $0x90] sm:$0xff]
  %v44 = vld [vmem:[%s1 + $0x98] sm:$0xff]
  %v45 = vld [vmem:[%s1 + $0xa0] sm:$0xff]
  %v46 = vld [vmem:[%s1 + $0xa8] sm:$0xff]
  %v47 = vld [vmem:[%s1 + $0xb0] sm:$0xff]
  %v48 = vld [vmem:[%s1 + $0xb8] sm:$0xff]
  %v49 = vld [vmem:[%s1 + $0xc0] sm:$0xff]
  %v50 = vld [vmem:[%s1 + $0xc8] sm:$0xff]
  %v51 = vld [vmem:[%s1 + $0xd0] sm:$0xff]
  %v52 = vld [vmem:[%s1 + $0xd8] sm:$0xff]
  %v53 = vld [vmem:[%s1 + $0xe0] sm:$0xff]
  %v54 = vld [vmem:[%s1 + $0xe8] sm:$0xff]
  %v55 = vld [vmem:[%s1 + $0xf0] sm:$0xff]
  %v56 = vld [vmem:[%s1 + $0xf8] sm:$0xff]
  %v57 = vpack.c.bf16 %v27, %v25
  %v58 = vpack.c.bf16 %v28, %v26
  %v59 = vpack.c.bf16 %v31, %v29
  %v60 = vpack.c.bf16 %v32, %v30
  %v61 = vpack.c.bf16 %v35, %v33
  %v62 = vpack.c.bf16 %v36, %v34
  %v63 = vpack.c.bf16 %v39, %v37
  %v64 = vpack.c.bf16 %v40, %v38
  %v65 = vpack.c.bf16 %v43, %v41
  %v66 = vpack.c.bf16 %v44, %v42
  %v67 = vpack.c.bf16 %v47, %v45
  %v68 = vpack.c.bf16 %v48, %v46
  %v69 = vpack.c.bf16 %v51, %v49
  %v70 = vpack.c.bf16 %v52, %v50
  %v71 = vpack.c.bf16 %v55, %v53
  %v72 = vpack.c.bf16 %v56, %v54
  %73 = vmatprep.subr.bf16.mxu0 %v58
  %74 = vmatpush1.bf16.msra.mxu0 %v57
  %75 = vmatprep.subr.bf16.mxu0 %v60
  %76 = vmatpush1.bf16.msra.mxu0 %v59
  %77 = vmatprep.subr.bf16.mxu0 %v62
  %78 = vmatpush1.bf16.msra.mxu0 %v61
  %79 = vmatprep.subr.bf16.mxu0 %v64
  %80 = vmatpush1.bf16.msra.mxu0 %v63
  %81 = vmatprep.subr.bf16.mxu0 %v66
  %82 = vmatpush1.bf16.msra.mxu0 %v65
  %83 = vmatprep.subr.bf16.mxu0 %v68
  %84 = vmatpush1.bf16.msra.mxu0 %v67
  %85 = vmatprep.subr.bf16.mxu0 %v70
  %86 = vmatpush1.bf16.msra.mxu0 %v69
  %87 = vmatprep.subr.bf16.mxu0 %v72
  %88 = vmatpush1.bf16.msra.mxu0 %v71
  %89 = vmatprep.subr.bf16.mxu0 0
  %90 = vmatpush1.bf16.msra.mxu0 0
  %91 = vmatprep.subr.bf16.mxu0 0
  %92 = vmatpush1.bf16.msra.mxu0 0
  %93 = vmatprep.subr.bf16.mxu0 0
  %94 = vmatpush1.bf16.msra.mxu0 0
  %95 = vmatprep.subr.bf16.mxu0 0
  %96 = vmatpush1.bf16.msra.mxu0 0
  %97 = vmatprep.subr.bf16.mxu0 0
  %98 = vmatpush1.bf16.msra.mxu0 0
  %99 = vmatprep.subr.bf16.mxu0 0
  %100 = vmatpush1.bf16.msra.mxu0 0
  %101 = vmatprep.subr.bf16.mxu0 0
  %102 = vmatpush1.bf16.msra.mxu0 0
  %103 = vmatprep.subr.bf16.mxu0 0
  %104 = vmatpush1.bf16.msra.mxu0 0
  %105 = vmatprep.mubr.bf16.mxu0 0
  %106 = vmatmul.mubr.bf16.gmra.mrb[0].mxu0 %v24
  %v107 = vpop.f32.mrb[0].mxu0
  %v108 = vadd.f32 0.0, %v107
  %v109 = vpop.f32.mrb[0].mxu0
  %v110 = vadd.f32 0.0, %v109
  %v111 = vpop.f32.mrb[0].mxu0
  %v112 = vpop.f32.mrb[0].mxu0
  %113 = vdwg.mxu0
  %v114 = vadd.f32 %v21, %v108
  %v115 = vadd.f32 %v22, %v110
  %116 = vst [vmem:[#allocation2] sm:$0xff] %v114
  %117 = vst [vmem:[#allocation2 + $0x8] sm:$0xff] %v115
  // Predicated region
  $region18: #{san_forward.9} parent=0 // pred_check
    %p118 = pneg %p15
  $region19: #{san_forward.9} parent=0 // pred_check_branch
    %120 = sbr.rel (%p118) target = $region21
  $region20: #{san_forward.9} parent=0 // pred_region
    %v121 = vld [vmem:[#allocation2] sm:$0xff]
    %v122 = vld [vmem:[#allocation2 + $0x8] sm:$0xff]
    %v123 = vld [vmem:[%s2] sm:$0x3]
    %v125 = vlaneseq
    %v126 = vshrl.u32 %v125, 7
    %v127 = vsub.s32 0, %v126
    %v128 = vrot.slane %v123, %v127
    %v129 = vlaneseq
    %v130 = vshrl.u32 %v129, 7
    %v131 = vsub.s32 1, %v130
    %v132 = vrot.slane %v123, %v131
    %v135 = vadd.f32 %v121, %v128
    %v136 = vadd.f32 %v122, %v132
    %137 = vst [vmem:[%s3] sm:$0xff] %v135
    %138 = vst [vmem:[%s3 + $0x8] sm:$0xff] %v136
  $region21: #{san_forward.9} parent=0 // pred_fallthru
    _
  // Predicated region
  $region22: #{san_forward.9} parent=0 // pred_check
    _
  $region23: #{san_forward.9} parent=0 // pred_check_branch
    %140 = sbr.rel (0) target = $region25
  $region24: #{san_forward.9} parent=0 // pred_region
    _
  $region25: #{san_forward.9} parent=0 // pred_fallthru
    _
  // Predicated region
  $region26: #{san_forward.9} parent=0 // pred_check
    _
  $region27: #{san_forward.9} parent=0 // pred_check_branch
    %142 = sbr.rel (0) target = $region29
  $region28: #{san_forward.9} parent=0 // pred_region
    _
  $region29: #{san_forward.9} parent=0 // pred_fallthru
    _

// kernel: san_forward.8
$region0: #{san_forward.8}
  #allocation0 [shape = 'u32[]', space=smem, size = 0x4, offset = 0x4, fixed_abs, tag = 'smem constant byte address 0x4 - core index']
  #allocation1 [shape = 'u32[144,128]{1,0:T(1,128)}', space=vmem, size = 0x12000, scoped, tag = 'internal scratch']
  %s0 = inlined_call_operand.vmem [shape: f32[8,16,128], index: 0, kind: input, shape index: {}]
  %s1 = inlined_call_operand.vmem [shape: f32[8,128], index: 1, kind: input, shape index: {}]
  %s2 = inlined_call_operand.vmem [shape: f32[2,128,128], index: 2, kind: input, shape index: {}]
  %s3 = inlined_call_operand.vmem [shape: f32[2,1,128], index: 3, kind: input, shape index: {}]
  %s4 = inlined_call_operand.vmem [shape: f32[2,128,128], index: 4, kind: input, shape index: {}]
  %s5 = inlined_call_operand.vmem [shape: f32[2,1,128], index: 5, kind: input, shape index: {}]
  %s6 = inlined_call_operand.vmem [shape: f32[2,1,128], index: 6, kind: input, shape index: {}]
  %s7 = inlined_call_operand.vmem [shape: f32[2], index: 7, kind: input, shape index: {}]
  %s8 = inlined_call_operand.vmem [shape: f32[8,128], index: 8, kind: output, shape index: {}]
  %s9 = sld [smem:[#allocation0]]
  $region46: #{san_forward.8} parent=0
    _
  %s11 = ssub.s32 1, %s9
  %s12 = scalar_select 0, %s11, %s9
  $region1: #{san_forward.8} parent=0
    #allocation2 [shape = 'u8[512]{0}', space=smem, size = 0x200, scoped, tag = 'input window, operand 7, single buffered']
    #allocation3 [shape = 's32[1]{0}', space=sflag, size = 0x4, scoped, tag = 'scoped memory for san_forward.8']
    %13 = vsyncpa [#allocation3], 0
    // Predicated region
    $region2: #{san_forward.8} parent=1 // pred_check
      _
    $region3: #{san_forward.8} parent=1 // pred_check_branch
      %15 = sbr.rel (0) target = $region5
    $region4: #{san_forward.8} parent=1 // pred_region
      _
    $region5: #{san_forward.8} parent=1 // pred_fallthru
      _
    // Predicated region
    $region6: #{san_forward.8} parent=1 // pred_check
      _
    $region7: #{san_forward.8} parent=1 // pred_check_branch
      %17 = sbr.rel (0) target = $region9
    $region8: #{san_forward.8} parent=1 // pred_region
      _
    $region9: #{san_forward.8} parent=1 // pred_fallthru
      _
    // Predicated region
    $region10: #{san_forward.8} parent=1 // pred_check
      _
    $region11: #{san_forward.8} parent=1 // pred_check_branch
      %19 = sbr.rel (0) target = $region13
    $region12: #{san_forward.8} parent=1 // pred_region
      _
    $region13: #{san_forward.8} parent=1 // pred_fallthru
      _
    // Predicated region
    $region14: #{san_forward.8} parent=1 // pred_check
      _
    $region15: #{san_forward.8} parent=1 // pred_check_branch
      %21 = sbr.rel (0) target = $region17
    $region16: #{san_forward.8} parent=1 // pred_region
      _
    $region17: #{san_forward.8} parent=1 // pred_fallthru
      _
    // Predicated region
    $region18: #{san_forward.8} parent=1 // pred_check
      _
    $region19: #{san_forward.8} parent=1 // pred_check_branch
      %23 = sbr.rel (0) target = $region21
    $region20: #{san_forward.8} parent=1 // pred_region
      _
    $region21: #{san_forward.8} parent=1 // pred_fallthru
      _
    // Predicated region
    $region22: #{san_forward.8} parent=1 // pred_check
      _
    $region23: #{san_forward.8} parent=1 // pred_check_branch
      %25 = sbr.rel (0) target = $region25
    $region24: #{san_forward.8} parent=1 // pred_region
      _
    $region25: #{san_forward.8} parent=1 // pred_fallthru
      _
    // Predicated region
    $region26: #{san_forward.8} parent=1 // pred_check
      _
    $region27: #{san_forward.8} parent=1 // pred_check_branch
      %27 = sbr.rel (0) target = $region29
    $region28: #{san_forward.8} parent=1 // pred_region
      _
    $region29: #{san_forward.8} parent=1 // pred_fallthru
      _
    // Predicated region
    $region30: #{san_forward.8} parent=1 // pred_check
      _
    $region31: #{san_forward.8} parent=1 // pred_check_branch
      %29 = sbr.rel (0) target = $region33
    $region32: #{san_forward.8} parent=1 // pred_region
      %s31 = ssub.s32 16, 16
      %32 = vsyncadd [#allocation3], %s31
      %s34 = sshll.u32 %s7, 4
      %s35 = int_to_ptr.vmem [resolvable:$true] %s34
      %37 = dma.vmem_to_smem %s35, 16, [#allocation2], [#allocation3]
    $region33: #{san_forward.8} parent=1 // pred_fallthru
      _
    // Predicated region
    $region34: #{san_forward.8} parent=1 // pred_check
      _
    $region35: #{san_forward.8} parent=1 // pred_check_branch
      %39 = sbr.rel (0) target = $region37
    $region36: #{san_forward.8} parent=1 // pred_region
      %40 = dma.done [#allocation3], 16
    $region37: #{san_forward.8} parent=1 // pred_fallthru
      _
    %41 = sfence
    %v43 = vld [vmem:[%s0] sm:$0xff]
    %v44 = vld [vmem:[%s0 + $0x8] sm:$0xff]
    %v45 = vld [vmem:[%s0 + $0x10] sm:$0xff]
    %v46 = vld [vmem:[%s0 + $0x18] sm:$0xff]
    %v47 = vld [vmem:[%s0 + $0x20] sm:$0xff]
    %v48 = vld [vmem:[%s0 + $0x28] sm:$0xff]
    %v49 = vld [vmem:[%s0 + $0x30] sm:$0xff]
    %v50 = vld [vmem:[%s0 + $0x38] sm:$0xff]
    %v51 = vld [vmem:[%s0 + $0x40] sm:$0xff]
    %v52 = vld [vmem:[%s0 + $0x48] sm:$0xff]
    %v53 = vld [vmem:[%s0 + $0x50] sm:$0xff]
    %v54 = vld [vmem:[%s0 + $0x58] sm:$0xff]
    %v55 = vld [vmem:[%s0 + $0x60] sm:$0xff]
    %v56 = vld [vmem:[%s0 + $0x68] sm:$0xff]
    %v57 = vld [vmem:[%s0 + $0x70] sm:$0xff]
    %v58 = vld [vmem:[%s0 + $0x78] sm:$0xff]
    %v59 = vld [vmem:[%s1] sm:$0xff]
    %v60 = vpack.c.bf16 %v44, %v43
    %v61 = vpack.c.bf16 %v46, %v45
    %v62 = vpack.c.bf16 %v48, %v47
    %v63 = vpack.c.bf16 %v50, %v49
    %v64 = vpack.c.bf16 %v52, %v51
    %v65 = vpack.c.bf16 %v54, %v53
    %v66 = vpack.c.bf16 %v56, %v55
    %v67 = vpack.c.bf16 %v58, %v57
    %v68 = vld [vmem:[%s2] sm:$0xff]
    %v69 = vld [vmem:[%s2 + $0x8] sm:$0xff]
    %v70 = vld [vmem:[%s2 + $0x10] sm:$0xff]
    %v71 = vld [vmem:[%s2 + $0x18] sm:$0xff]
    %v72 = vld [vmem:[%s2 + $0x20] sm:$0xff]
    %v73 = vld [vmem:[%s2 + $0x28] sm:$0xff]
    %v74 = vld [vmem:[%s2 + $0x30] sm:$0xff]
    %v75 = vld [vmem:[%s2 + $0x38] sm:$0xff]
    %v76 = vld [vmem:[%s2 + $0x40] sm:$0xff]
    %v77 = vld [vmem:[%s2 + $0x48] sm:$0xff]
    %v78 = vld [vmem:[%s2 + $0x50] sm:$0xff]
    %v79 = vld [vmem:[%s2 + $0x58] sm:$0xff]
    %v80 = vld [vmem:[%s2 + $0x60] sm:$0xff]
    %v81 = vld [vmem:[%s2 + $0x68] sm:$0xff]
    %v82 = vld [vmem:[%s2 + $0x70] sm:$0xff]
    %v83 = vld [vmem:[%s2 + $0x78] sm:$0xff]
    %v84 = vpack.c.bf16 %v69, %v68
    %v85 = vpack.c.bf16 %v71, %v70
    %v86 = vpack.c.bf16 %v73, %v72
    %v87 = vpack.c.bf16 %v75, %v74
    %v88 = vpack.c.bf16 %v77, %v76
    %v89 = vpack.c.bf16 %v79, %v78
    %v90 = vpack.c.bf16 %v81, %v80
    %v91 = vpack.c.bf16 %v83, %v82
    %92 = vmatprep.subr.bf16.mxu0 0
    %93 = vmatpush1.bf16.msra.mxu0 %v84
    %94 = vmatprep.subr.bf16.mxu0 0
    %95 = vmatpush1.bf16.msra.mxu0 %v85
    %96 = vmatprep.subr.bf16.mxu0 0
    %97 = vmatpush1.bf16.msra.mxu0 %v86
    %98 = vmatprep.subr.bf16.mxu0 0
    %99 = vmatpush1.bf16.msra.mxu0 %v87
    %100 = vmatprep.subr.bf16.mxu0 0
    %101 = vmatpush1.bf16.msra.mxu0 %v88
    %102 = vmatprep.subr.bf16.mxu0 0
    %103 = vmatpush1.bf16.msra.mxu0 %v89
    %104 = vmatprep.subr.bf16.mxu0 0
    %105 = vmatpush1.bf16.msra.mxu0 %v90
    %106 = vmatprep.subr.bf16.mxu0 0
    %107 = vmatpush1.bf16.msra.mxu0 %v91
    %108 = vmatprep.subr.bf16.mxu0 0
    %109 = vmatpush1.bf16.msra.mxu0 0
    %110 = vmatprep.subr.bf16.mxu0 0
    %111 = vmatpush1.bf16.msra.mxu0 0
    %112 = vmatprep.subr.bf16.mxu0 0
    %113 = vmatpush1.bf16.msra.mxu0 0
    %114 = vmatprep.subr.bf16.mxu0 0
    %115 = vmatpush1.bf16.msra.mxu0 0
    %116 = vmatprep.subr.bf16.mxu0 0
    %117 = vmatpush1.bf16.msra.mxu0 0
    %118 = vmatprep.subr.bf16.mxu0 0
    %119 = vmatpush1.bf16.msra.mxu0 0
    %120 = vmatprep.subr.bf16.mxu0 0
    %121 = vmatpush1.bf16.msra.mxu0 0
    %122 = vmatprep.subr.bf16.mxu0 0
    %123 = vmatpush1.bf16.msra.mxu0 0
    %124 = vmatprep.mubr.bf16.mxu0 0
    %125 = vmatmul.mubr.bf16.gmra.mrb[0].mxu0 %v60
    %v126 = vpop.f32.mrb[0].mxu0
    %v127 = vadd.f32 0.0, %v126
    %v128 = vpop.f32.mrb[0].mxu0
    %v129 = vpop.f32.mrb[0].mxu0
    %v130 = vadd.f32 0.0, %v129
    %v131 = vpop.f32.mrb[0].mxu0
    %132 = vmatprep.mubr.bf16.mxu0 0
    %133 = vmatmul.mubr.bf16.gmra.mrb[0].mxu0 %v61
    %v134 = vpop.f32.mrb[0].mxu0
    %v135 = vadd.f32 0.0, %v134
    %v136 = vpop.f32.mrb[0].mxu0
    %v137 = vpop.f32.mrb[0].mxu0
    %v138 = vadd.f32 0.0, %v137
    %v139 = vpop.f32.mrb[0].mxu0
    %140 = vmatprep.mubr.bf16.mxu0 0
    %141 = vmatmul.mubr.bf16.gmra.mrb[0].mxu0 %v62
    %v142 = vpop.f32.mrb[0].mxu0
    %v143 = vadd.f32 0.0, %v142
    %v144 = vpop.f32.mrb[0].mxu0
    %v145 = vpop.f32.mrb[0].mxu0
    %v146 = vadd.f32 0.0, %v145
    %v147 = vpop.f32.mrb[0].mxu0
    %148 = vmatprep.mubr.bf16.mxu0 0
    %149 = vmatmul.mubr.bf16.gmra.mrb[0].mxu0 %v63
    %v150 = vpop.f32.mrb[0].mxu0
    %v151 = vadd.f32 0.0, %v150
    %v152 = vpop.f32.mrb[0].mxu0
    %v153 = vpop.f32.mrb[0].mxu0
    %v154 = vadd.f32 0.0, %v153
    %v155 = vpop.f32.mrb[0].mxu0
    %156 = vmatprep.mubr.bf16.mxu0 0
    %157 = vmatmul.mubr.bf16.gmra.mrb[0].mxu0 %v64
    %v158 = vpop.f32.mrb[0].mxu0
    %v159 = vadd.f32 0.0, %v158
    %v160 = vpop.f32.mrb[0].mxu0
    %v161 = vpop.f32.mrb[0].mxu0
    %v162 = vadd.f32 0.0, %v161
    %v163 = vpop.f32.mrb[0].mxu0
    %164 = vmatprep.mubr.bf16.mxu0 0
    %165 = vmatmul.mubr.bf16.gmra.mrb[0].mxu0 %v65
    %v166 = vpop.f32.mrb[0].mxu0
    %v167 = vadd.f32 0.0, %v166
    %v168 = vpop.f32.mrb[0].mxu0
    %v169 = vpop.f32.mrb[0].mxu0
    %v170 = vadd.f32 0.0, %v169
    %v171 = vpop.f32.mrb[0].mxu0
    %172 = vmatprep.mubr.bf16.mxu0 0
    %173 = vmatmul.mubr.bf16.gmra.mrb[0].mxu0 %v66
    %v174 = vpop.f32.mrb[0].mxu0
    %v175 = vadd.f32 0.0, %v174
    %v176 = vpop.f32.mrb[0].mxu0
    %v177 = vpop.f32.mrb[0].mxu0
    %v178 = vadd.f32 0.0, %v177
    %v179 = vpop.f32.mrb[0].mxu0
    %180 = vmatprep.mubr.bf16.mxu0 0
    %181 = vmatmul.mubr.bf16.gmra.mrb[0].mxu0 %v67
    %v182 = vpop.f32.mrb[0].mxu0
    %v183 = vadd.f32 0.0, %v182
    %v184 = vpop.f32.mrb[0].mxu0
    %v185 = vpop.f32.mrb[0].mxu0
    %v186 = vadd.f32 0.0, %v185
    %v187 = vpop.f32.mrb[0].mxu0
    %188 = vdwg.mxu0
    %v189 = vld [vmem:[%s3] sm:$0x1]
    %v191 = vlaneseq
    %v192 = vshrl.u32 %v191, 7
    %v193 = vsub.s32 0, %v192
    %v194 = vrot.slane %v189, %v193
    %v196 = vadd.f32 %v127, %v194
    %v197 = vadd.f32 %v130, %v194
    %v198 = vadd.f32 %v135, %v194
    %v199 = vadd.f32 %v138, %v194
    %v200 = vadd.f32 %v143, %v194
    %v201 = vadd.f32 %v146, %v194
    %v202 = vadd.f32 %v151, %v194
    %v203 = vadd.f32 %v154, %v194
    %v204 = vadd.f32 %v159, %v194
    %v205 = vadd.f32 %v162, %v194
    %v206 = vadd.f32 %v167, %v194
    %v207 = vadd.f32 %v170, %v194
    %v208 = vadd.f32 %v175, %v194
    %v209 = vadd.f32 %v178, %v194
    %v210 = vadd.f32 %v183, %v194
    %v211 = vadd.f32 %v186, %v194
    %v212 = vpack.c.bf16 %v59, %v59
    %v213 = vld [vmem:[%s4] sm:$0xff]
    %v214 = vld [vmem:[%s4 + $0x8] sm:$0xff]
    %v215 = vld [vmem:[%s4 + $0x10] sm:$0xff]
    %v216 = vld [vmem:[%s4 + $0x18] sm:$0xff]
    %v217 = vld [vmem:[%s4 + $0x20] sm:$0xff]
    %v218 = vld [vmem:[%s4 + $0x28] sm:$0xff]
    %v219 = vld [vmem:[%s4 + $0x30] sm:$0xff]
    %v220 = vld [vmem:[%s4 + $0x38] sm:$0xff]
    %v221 = vld [vmem:[%s4 + $0x40] sm:$0xff]
    %v222 = vld [vmem:[%s4 + $0x48] sm:$0xff]
    %v223 = vld [vmem:[%s4 + $0x50] sm:$0xff]
    %v224 = vld [vmem:[%s4 + $0x58] sm:$0xff]
    %v225 = vld [vmem:[%s4 + $0x60] sm:$0xff]
    %v226 = vld [vmem:[%s4 + $0x68] sm:$0xff]
    %v227 = vld [vmem:[%s4 + $0x70] sm:$0xff]
    %v228 = vld [vmem:[%s4 + $0x78] sm:$0xff]
    %v229 = vpack.c.bf16 %v214, %v213
    %v230 = vpack.c.bf16 %v216, %v215
    %v231 = vpack.c.bf16 %v218, %v217
    %v232 = vpack.c.bf16 %v220, %v219
    %v233 = vpack.c.bf16 %v222, %v221
    %v234 = vpack.c.bf16 %v224, %v223
    %v235 = vpack.c.bf16 %v226, %v225
    %v236 = vpack.c.bf16 %v228, %v227
    %v237 = vld [vmem:[%s5] sm:$0x1]
    %v239 = vlaneseq
    %v240 = vshrl.u32 %v239, 7
    %v241 = vsub.s32 0, %v240
    %v242 = vrot.slane %v237, %v241
    %244 = vmatprep.subr.bf16.mxu0 0
    %245 = vmatpush1.bf16.msra.mxu0 %v229
    %246 = vmatprep.subr.bf16.mxu0 0
    %247 = vmatpush1.bf16.msra.mxu0 %v230
    %248 = vmatprep.subr.bf16.mxu0 0
    %249 = vmatpush1.bf16.msra.mxu0 %v231
    %250 = vmatprep.subr.bf16.mxu0 0
    %251 = vmatpush1.bf16.msra.mxu0 %v232
    %252 = vmatprep.subr.bf16.mxu0 0
    %253 = vmatpush1.bf16.msra.mxu0 %v233
    %254 = vmatprep.subr.bf16.mxu0 0
    %255 = vmatpush1.bf16.msra.mxu0 %v234
    %256 = vmatprep.subr.bf16.mxu0 0
    %257 = vmatpush1.bf16.msra.mxu0 %v235
    %258 = vmatprep.subr.bf16.mxu0 0
    %259 = vmatpush1.bf16.msra.mxu0 %v236
    %260 = vmatprep.subr.bf16.mxu0 0
    %261 = vmatpush1.bf16.msra.mxu0 0
    %262 = vmatprep.subr.bf16.mxu0 0
    %263 = vmatpush1.bf16.msra.mxu0 0
    %264 = vmatprep.subr.bf16.mxu0 0
    %265 = vmatpush1.bf16.msra.mxu0 0
    %266 = vmatprep.subr.bf16.mxu0 0
    %267 = vmatpush1.bf16.msra.mxu0 0
    %268 = vmatprep.subr.bf16.mxu0 0
    %269 = vmatpush1.bf16.msra.mxu0 0
    %270 = vmatprep.subr.bf16.mxu0 0
    %271 = vmatpush1.bf16.msra.mxu0 0
    %272 = vmatprep.subr.bf16.mxu0 0
    %273 = vmatpush1.bf16.msra.mxu0 0
    %274 = vmatprep.subr.bf16.mxu0 0
    %275 = vmatpush1.bf16.msra.mxu0 0
    %276 = vmatprep.mubr.bf16.mxu0 0
    %277 = vmatmul.mubr.bf16.gmra.mrb[0].mxu0 %v212
    %v278 = vpop.f32.mrb[0].mxu0
    %v279 = vadd.f32 %v242, %v278
    %v280 = vpop.f32.mrb[0].mxu0
    %v281 = vpop.f32.mrb[0].mxu0
    %v282 = vpop.f32.mrb[0].mxu0
    %283 = vdwg.mxu0
    %v285 = vcombine.high %v279, %v279
    %v287 = vunpack.c.l.s4 1966171168
    %v288 = vunpack.c.0.s8 %v287
    %v289 = vlaneseq
    %v290 = vshrl.u32 %v289, 7
    %v291 = vsub.s32 %v288, %v290
    %v292 = vrot.slane %v279, %v291
    %v294 = vunpack.c.l.s4 1966171168
    %v295 = vunpack.c.0.s8 %v294
    %v296 = vlaneseq
    %v297 = vshrl.u32 %v296, 7
    %v298 = vsub.s32 %v295, %v297
    %v299 = vrot.slane %v285, %v298
    %v300 = vcombine.high %v292, %v292
    %v301 = vcombine.high %v299, %v299
    %v303 = vunpack.c.l.s4 1966171168
    %v304 = vunpack.c.0.s8 %v303
    %v305 = vlaneseq
    %v306 = vshrl.u32 %v305, 7
    %v307 = vsub.s32 %v304, %v306
    %v308 = vrot.slane %v292, %v307
    %v310 = vunpack.c.l.s4 1966171168
    %v311 = vunpack.c.0.s8 %v310
    %v312 = vlaneseq
    %v313 = vshrl.u32 %v312, 7
    %v314 = vsub.s32 %v311, %v313
    %v315 = vrot.slane %v299, %v314
    %v317 = vunpack.c.l.s4 1966171168
    %v318 = vunpack.c.0.s8 %v317
    %v319 = vlaneseq
    %v320 = vshrl.u32 %v319, 7
    %v321 = vsub.s32 %v318, %v320
    %v322 = vrot.slane %v300, %v321
    %v324 = vunpack.c.l.s4 1966171168
    %v325 = vunpack.c.0.s8 %v324
    %v326 = vlaneseq
    %v327 = vshrl.u32 %v326, 7
    %v328 = vsub.s32 %v325, %v327
    %v329 = vrot.slane %v301, %v328
    %v330 = vcombine.high %v308, %v308
    %v331 = vcombine.high %v315, %v315
    %v332 = vcombine.high %v322, %v322
    %v333 = vcombine.high %v329, %v329
    %v334 = vlaneseq
    %v335 = vshrl.u32 %v334, 7
    %v336 = vsub.s32 0, %v335
    %v337 = vrot.slane %v308, %v336
    %v338 = vlaneseq
    %v339 = vshrl.u32 %v338, 7
    %v340 = vsub.s32 0, %v339
    %v341 = vrot.slane %v322, %v340
    %v342 = vlaneseq
    %v343 = vshrl.u32 %v342, 7
    %v344 = vsub.s32 0, %v343
    %v345 = vrot.slane %v330, %v344
    %v346 = vlaneseq
    %v347 = vshrl.u32 %v346, 7
    %v348 = vsub.s32 0, %v347
    %v349 = vrot.slane %v332, %v348
    %v350 = vlaneseq
    %v351 = vshrl.u32 %v350, 7
    %v352 = vsub.s32 0, %v351
    %v353 = vrot.slane %v315, %v352
    %v354 = vlaneseq
    %v355 = vshrl.u32 %v354, 7
    %v356 = vsub.s32 0, %v355
    %v357 = vrot.slane %v329, %v356
    %v358 = vlaneseq
    %v359 = vshrl.u32 %v358, 7
    %v360 = vsub.s32 0, %v359
    %v361 = vrot.slane %v331, %v360
    %v362 = vlaneseq
    %v363 = vshrl.u32 %v362, 7
    %v364 = vsub.s32 0, %v363
    %v365 = vrot.slane %v333, %v364
    %v374 = vadd.f32 %v196, %v337
    %v375 = vadd.f32 %v197, %v337
    %v376 = vadd.f32 %v198, %v341
    %v377 = vadd.f32 %v199, %v341
    %v378 = vadd.f32 %v200, %v345
    %v379 = vadd.f32 %v201, %v345
    %v380 = vadd.f32 %v202, %v349
    %v381 = vadd.f32 %v203, %v349
    %v382 = vadd.f32 %v204, %v353
    %v383 = vadd.f32 %v205, %v353
    %v384 = vadd.f32 %v206, %v357
    %v385 = vadd.f32 %v207, %v357
    %v386 = vadd.f32 %v208, %v361
    %v387 = vadd.f32 %v209, %v361
    %v388 = vadd.f32 %v210, %v365
    %v389 = vadd.f32 %v211, %v365
    %v390 = vtanh.pop %v374
    %v391 = vtanh.pop %v375
    %v392 = vtanh.pop %v376
    %v393 = vtanh.pop %v377
    %v394 = vtanh.pop %v378
    %v395 = vtanh.pop %v379
    %v396 = vtanh.pop %v380
    %v397 = vtanh.pop %v381
    %v398 = vtanh.pop %v382
    %v399 = vtanh.pop %v383
    %v400 = vtanh.pop %v384
    %v401 = vtanh.pop %v385
    %v402 = vtanh.pop %v386
    %v403 = vtanh.pop %v387
    %v404 = vtanh.pop %v388
    %v405 = vtanh.pop %v389
    %v406 = vld [vmem:[%s6] sm:$0x1]
    %v408 = vlaneseq
    %v409 = vshrl.u32 %v408, 7
    %v410 = vsub.s32 0, %v409
    %v411 = vrot.slane %v406, %v410
    %v413 = vmul.f32 %v390, %v411
    %v414 = vmul.f32 %v391, %v411
    %v415 = vmul.f32 %v392, %v411
    %v416 = vmul.f32 %v393, %v411
    %v417 = vmul.f32 %v394, %v411
    %v418 = vmul.f32 %v395, %v411
    %v419 = vmul.f32 %v396, %v411
    %v420 = vmul.f32 %v397, %v411
    %v421 = vmul.f32 %v398, %v411
    %v422 = vmul.f32 %v399, %v411
    %v423 = vmul.f32 %v400, %v411
    %v424 = vmul.f32 %v401, %v411
    %v425 = vmul.f32 %v402, %v411
    %v426 = vmul.f32 %v403, %v411
    %v427 = vmul.f32 %v404, %v411
    %v428 = vmul.f32 %v405, %v411
    %429 = vadd.xlane.f32.xlu0 %v413
    %v430 = vpop.xlane.xlu0 %429
    %431 = vadd.xlane.f32.xlu0 %v414
    %v432 = vpop.xlane.xlu0 %431
    %433 = vadd.xlane.f32.xlu0 %v415
    %v434 = vpop.xlane.xlu0 %433
    %435 = vadd.xlane.f32.xlu0 %v416
    %v436 = vpop.xlane.xlu0 %435
    %437 = vadd.xlane.f32.xlu0 %v417
    %v438 = vpop.xlane.xlu0 %437
    %439 = vadd.xlane.f32.xlu0 %v418
    %v440 = vpop.xlane.xlu0 %439
    %441 = vadd.xlane.f32.xlu0 %v419
    %v442 = vpop.xlane.xlu0 %441
    %443 = vadd.xlane.f32.xlu0 %v420
    %v444 = vpop.xlane.xlu0 %443
    %445 = vadd.xlane.f32.xlu0 %v421
    %v446 = vpop.xlane.xlu0 %445
    %447 = vadd.xlane.f32.xlu0 %v422
    %v448 = vpop.xlane.xlu0 %447
    %449 = vadd.xlane.f32.xlu0 %v423
    %v450 = vpop.xlane.xlu0 %449
    %451 = vadd.xlane.f32.xlu0 %v424
    %v452 = vpop.xlane.xlu0 %451
    %453 = vadd.xlane.f32.xlu0 %v425
    %v454 = vpop.xlane.xlu0 %453
    %455 = vadd.xlane.f32.xlu0 %v426
    %v456 = vpop.xlane.xlu0 %455
    %457 = vadd.xlane.f32.xlu0 %v427
    %v458 = vpop.xlane.xlu0 %457
    %459 = vadd.xlane.f32.xlu0 %v428
    %v460 = vpop.xlane.xlu0 %459
    %s461 = sld [smem:[#allocation2]]
    %v462 = vstv %s461
    %v463 = vadd.f32 %v430, %v462
    %v464 = vadd.f32 %v432, %v462
    %v465 = vadd.f32 %v434, %v462
    %v466 = vadd.f32 %v436, %v462
    %v467 = vadd.f32 %v438, %v462
    %v468 = vadd.f32 %v440, %v462
    %v469 = vadd.f32 %v442, %v462
    %v470 = vadd.f32 %v444, %v462
    %v471 = vadd.f32 %v446, %v462
    %v472 = vadd.f32 %v448, %v462
    %v473 = vadd.f32 %v450, %v462
    %v474 = vadd.f32 %v452, %v462
    %v475 = vadd.f32 %v454, %v462
    %v476 = vadd.f32 %v456, %v462
    %v477 = vadd.f32 %v458, %v462
    %v478 = vadd.f32 %v460, %v462
    %v495 = vlaneseq
    %v496 = vand.u32 %v495, 127
    %v497 = vlaneseq
    %v498 = vshrl.u32 %v497, 7
    %v499 = vsub.s32 %v496, %v498
    %v500 = vrot.slane %v463, %v499
    %v501 = vadd.s32 %v496, 4294967288
    %v502 = vlaneseq
    %v503 = vshrl.u32 %v502, 7
    %v504 = vsub.s32 %v501, %v503
    %v505 = vrot.slane %v464, %v504
    %vm506 = vcmask 130112
    %v507 = vsel %vm506, %v505, %v500
    %v508 = vlaneseq
    %v509 = vshrl.u32 %v508, 7
    %v510 = vsub.s32 %v496, %v509
    %v511 = vrot.slane %v465, %v510
    %v512 = vlaneseq
    %v513 = vshrl.u32 %v512, 7
    %v514 = vsub.s32 %v501, %v513
    %v515 = vrot.slane %v466, %v514
    %v516 = vsel %vm506, %v515, %v511
    %v517 = vlaneseq
    %v518 = vshrl.u32 %v517, 7
    %v519 = vsub.s32 %v496, %v518
    %v520 = vrot.slane %v467, %v519
    %v521 = vlaneseq
    %v522 = vshrl.u32 %v521, 7
    %v523 = vsub.s32 %v501, %v522
    %v524 = vrot.slane %v468, %v523
    %v525 = vsel %vm506, %v524, %v520
    %v526 = vlaneseq
    %v527 = vshrl.u32 %v526, 7
    %v528 = vsub.s32 %v496, %v527
    %v529 = vrot.slane %v469, %v528
    %v530 = vlaneseq
    %v531 = vshrl.u32 %v530, 7
    %v532 = vsub.s32 %v501, %v531
    %v533 = vrot.slane %v470, %v532
    %v534 = vsel %vm506, %v533, %v529
    %v535 = vlaneseq
    %v536 = vshrl.u32 %v535, 7
    %v537 = vsub.s32 %v496, %v536
    %v538 = vrot.slane %v471, %v537
    %v539 = vlaneseq
    %v540 = vshrl.u32 %v539, 7
    %v541 = vsub.s32 %v501, %v540
    %v542 = vrot.slane %v472, %v541
    %v543 = vsel %vm506, %v542, %v538
    %v544 = vlaneseq
    %v545 = vshrl.u32 %v544, 7
    %v546 = vsub.s32 %v496, %v545
    %v547 = vrot.slane %v473, %v546
    %v548 = vlaneseq
    %v549 = vshrl.u32 %v548, 7
    %v550 = vsub.s32 %v501, %v549
    %v551 = vrot.slane %v474, %v550
    %v552 = vsel %vm506, %v551, %v547
    %v553 = vlaneseq
    %v554 = vshrl.u32 %v553, 7
    %v555 = vsub.s32 %v496, %v554
    %v556 = vrot.slane %v475, %v555
    %v557 = vlaneseq
    %v558 = vshrl.u32 %v557, 7
    %v559 = vsub.s32 %v501, %v558
    %v560 = vrot.slane %v476, %v559
    %v561 = vsel %vm506, %v560, %v556
    %v562 = vlaneseq
    %v563 = vshrl.u32 %v562, 7
    %v564 = vsub.s32 %v496, %v563
    %v565 = vrot.slane %v477, %v564
    %v566 = vlaneseq
    %v567 = vshrl.u32 %v566, 7
    %v568 = vsub.s32 %v501, %v567
    %v569 = vrot.slane %v478, %v568
    %v570 = vsel %vm506, %v569, %v565
    %vm571 = vcmask 1041409
    %v572 = vsel %vm571, %v516, %v507
    %vm573 = vcmask 1042434
    %v574 = vsel %vm573, %v525, %v572
    %vm575 = vcmask 1043459
    %v576 = vsel %vm575, %v534, %v574
    %vm577 = vcmask 1044484
    %v578 = vsel %vm577, %v543, %v576
    %vm579 = vcmask 1045509
    %v580 = vsel %vm579, %v552, %v578
    %vm581 = vcmask 1046534
    %v582 = vsel %vm581, %v561, %v580
    %vm583 = vcmask 1047559
    %v584 = vsel %vm583, %v570, %v582
    %vm586 = vcmask 130048
    %v587 = vsel %vm586, %v584, -inf
    %588 = vmax.xlane.f32.xlu0 %v587
    %v589 = vpop.xlane.xlu0 %588
    %v591 = vlaneseq
    %v592 = vshrl.u32 %v591, 7
    %v593 = vsub.s32 0, %v592
    %v594 = vrot.slane %v589, %v593
    %v595 = vlaneseq
    %v596 = vshrl.u32 %v595, 7
    %v597 = vsub.s32 1, %v596
    %v598 = vrot.slane %v589, %v597
    %v599 = vlaneseq
    %v600 = vshrl.u32 %v599, 7
    %v601 = vsub.s32 2, %v600
    %v602 = vrot.slane %v589, %v601
    %v603 = vlaneseq
    %v604 = vshrl.u32 %v603, 7
    %v605 = vsub.s32 3, %v604
    %v606 = vrot.slane %v589, %v605
    %v607 = vlaneseq
    %v608 = vshrl.u32 %v607, 7
    %v609 = vsub.s32 4, %v608
    %v610 = vrot.slane %v589, %v609
    %v611 = vlaneseq
    %v612 = vshrl.u32 %v611, 7
    %v613 = vsub.s32 5, %v612
    %v614 = vrot.slane %v589, %v613
    %v615 = vlaneseq
    %v616 = vshrl.u32 %v615, 7
    %v617 = vsub.s32 6, %v616
    %v618 = vrot.slane %v589, %v617
    %v619 = vlaneseq
    %v620 = vshrl.u32 %v619, 7
    %v621 = vsub.s32 7, %v620
    %v622 = vrot.slane %v589, %v621
    %v631 = vsub.f32 %v463, %v594
    %v632 = vsub.f32 %v464, %v594
    %v633 = vsub.f32 %v465, %v598
    %v634 = vsub.f32 %v466, %v598
    %v635 = vsub.f32 %v467, %v602
    %v636 = vsub.f32 %v468, %v602
    %v637 = vsub.f32 %v469, %v606
    %v638 = vsub.f32 %v470, %v606
    %v639 = vsub.f32 %v471, %v610
    %v640 = vsub.f32 %v472, %v610
    %v641 = vsub.f32 %v473, %v614
    %v642 = vsub.f32 %v474, %v614
    %v643 = vsub.f32 %v475, %v618
    %v644 = vsub.f32 %v476, %v618
    %v645 = vsub.f32 %v477, %v622
    %v646 = vsub.f32 %v478, %v622
    %v647 = vmul.f32 %v631, 1.442695
    %v648 = vpow.pop %v647
    %v649 = vmul.f32 %v632, 1.442695
    %v650 = vpow.pop %v649
    %v651 = vmul.f32 %v633, 1.442695
    %v652 = vpow.pop %v651
    %v653 = vmul.f32 %v634, 1.442695
    %v654 = vpow.pop %v653
    %v655 = vmul.f32 %v635, 1.442695
    %v656 = vpow.pop %v655
    %v657 = vmul.f32 %v636, 1.442695
    %v658 = vpow.pop %v657
    %v659 = vmul.f32 %v637, 1.442695
    %v660 = vpow.pop %v659
    %v661 = vmul.f32 %v638, 1.442695
    %v662 = vpow.pop %v661
    %v663 = vmul.f32 %v639, 1.442695
    %v664 = vpow.pop %v663
    %v665 = vmul.f32 %v640, 1.442695
    %v666 = vpow.pop %v665
    %v667 = vmul.f32 %v641, 1.442695
    %v668 = vpow.pop %v667
    %v669 = vmul.f32 %v642, 1.442695
    %v670 = vpow.pop %v669
    %v671 = vmul.f32 %v643, 1.442695
    %v672 = vpow.pop %v671
    %v673 = vmul.f32 %v644, 1.442695
    %v674 = vpow.pop %v673
    %v675 = vmul.f32 %v645, 1.442695
    %v676 = vpow.pop %v675
    %v677 = vmul.f32 %v646, 1.442695
    %v678 = vpow.pop %v677
    %695 = vset.pattern.permute.xlu0 0
    %696 = vperm.xlu0 %695, %v648
    %v697 = vpop.permute.xlu0 %696
    %698 = vset.pattern.permute.xlu0 0
    %699 = vperm.xlu0 %698, %v650
    %v700 = vpop.permute.xlu0 %699
    %701 = vset.pattern.permute.xlu0 0
    %702 = vperm.xlu0 %701, %v652
    %v703 = vpop.permute.xlu0 %702
    %704 = vset.pattern.permute.xlu0 0
    %705 = vperm.xlu0 %704, %v654
    %v706 = vpop.permute.xlu0 %705
    %707 = vset.pattern.permute.xlu0 0
    %708 = vperm.xlu0 %707, %v656
    %v709 = vpop.permute.xlu0 %708
    %710 = vset.pattern.permute.xlu0 0
    %711 = vperm.xlu0 %710, %v658
    %v712 = vpop.permute.xlu0 %711
    %713 = vset.pattern.permute.xlu0 0
    %714 = vperm.xlu0 %713, %v660
    %v715 = vpop.permute.xlu0 %714
    %716 = vset.pattern.permute.xlu0 0
    %717 = vperm.xlu0 %716, %v662
    %v718 = vpop.permute.xlu0 %717
    %719 = vset.pattern.permute.xlu0 0
    %720 = vperm.xlu0 %719, %v664
    %v721 = vpop.permute.xlu0 %720
    %722 = vset.pattern.permute.xlu0 0
    %723 = vperm.xlu0 %722, %v666
    %v724 = vpop.permute.xlu0 %723
    %725 = vset.pattern.permute.xlu0 0
    %726 = vperm.xlu0 %725, %v668
    %v727 = vpop.permute.xlu0 %726
    %728 = vset.pattern.permute.xlu0 0
    %729 = vperm.xlu0 %728, %v670
    %v730 = vpop.permute.xlu0 %729
    %731 = vset.pattern.permute.xlu0 0
    %732 = vperm.xlu0 %731, %v672
    %v733 = vpop.permute.xlu0 %732
    %734 = vset.pattern.permute.xlu0 0
    %735 = vperm.xlu0 %734, %v674
    %v736 = vpop.permute.xlu0 %735
    %737 = vset.pattern.permute.xlu0 0
    %738 = vperm.xlu0 %737, %v676
    %v739 = vpop.permute.xlu0 %738
    %740 = vset.pattern.permute.xlu0 0
    %741 = vperm.xlu0 %740, %v678
    %v742 = vpop.permute.xlu0 %741
    %v743 = vlaneseq
    %v744 = vshrl.u32 %v743, 7
    %v745 = vsub.s32 %v496, %v744
    %v746 = vrot.slane %v697, %v745
    %v747 = vlaneseq
    %v748 = vshrl.u32 %v747, 7
    %v749 = vsub.s32 %v501, %v748
    %v750 = vrot.slane %v700, %v749
    %v751 = vsel %vm506, %v750, %v746
    %v752 = vlaneseq
    %v753 = vshrl.u32 %v752, 7
    %v754 = vsub.s32 %v496, %v753
    %v755 = vrot.slane %v703, %v754
    %v756 = vlaneseq
    %v757 = vshrl.u32 %v756, 7
    %v758 = vsub.s32 %v501, %v757
    %v759 = vrot.slane %v706, %v758
    %v760 = vsel %vm506, %v759, %v755
    %v761 = vlaneseq
    %v762 = vshrl.u32 %v761, 7
    %v763 = vsub.s32 %v496, %v762
    %v764 = vrot.slane %v709, %v763
    %v765 = vlaneseq
    %v766 = vshrl.u32 %v765, 7
    %v767 = vsub.s32 %v501, %v766
    %v768 = vrot.slane %v712, %v767
    %v769 = vsel %vm506, %v768, %v764
    %v770 = vlaneseq
    %v771 = vshrl.u32 %v770, 7
    %v772 = vsub.s32 %v496, %v771
    %v773 = vrot.slane %v715, %v772
    %v774 = vlaneseq
    %v775 = vshrl.u32 %v774, 7
    %v776 = vsub.s32 %v501, %v775
    %v777 = vrot.slane %v718, %v776
    %v778 = vsel %vm506, %v777, %v773
    %v779 = vlaneseq
    %v780 = vshrl.u32 %v779, 7
    %v781 = vsub.s32 %v496, %v780
    %v782 = vrot.slane %v721, %v781
    %v783 = vlaneseq
    %v784 = vshrl.u32 %v783, 7
    %v785 = vsub.s32 %v501, %v784
    %v786 = vrot.slane %v724, %v785
    %v787 = vsel %vm506, %v786, %v782
    %v788 = vlaneseq
    %v789 = vshrl.u32 %v788, 7
    %v790 = vsub.s32 %v496, %v789
    %v791 = vrot.slane %v727, %v790
    %v792 = vlaneseq
    %v793 = vshrl.u32 %v792, 7
    %v794 = vsub.s32 %v501, %v793
    %v795 = vrot.slane %v730, %v794
    %v796 = vsel %vm506, %v795, %v791
    %v797 = vlaneseq
    %v798 = vshrl.u32 %v797, 7
    %v799 = vsub.s32 %v496, %v798
    %v800 = vrot.slane %v733, %v799
    %v801 = vlaneseq
    %v802 = vshrl.u32 %v801, 7
    %v803 = vsub.s32 %v501, %v802
    %v804 = vrot.slane %v736, %v803
    %v805 = vsel %vm506, %v804, %v800
    %v806 = vlaneseq
    %v807 = vshrl.u32 %v806, 7
    %v808 = vsub.s32 %v496, %v807
    %v809 = vrot.slane %v739, %v808
    %v810 = vlaneseq
    %v811 = vshrl.u32 %v810, 7
    %v812 = vsub.s32 %v501, %v811
    %v813 = vrot.slane %v742, %v812
    %v814 = vsel %vm506, %v813, %v809
    %v815 = vsel %vm571, %v760, %v751
    %v816 = vsel %vm573, %v769, %v815
    %v817 = vsel %vm575, %v778, %v816
    %v818 = vsel %vm577, %v787, %v817
    %v819 = vsel %vm579, %v796, %v818
    %v820 = vsel %vm581, %v805, %v819
    %v821 = vsel %vm583, %v814, %v820
    %v823 = vsel %vm586, %v821, 0.0
    %824 = vadd.xlane.f32.xlu0 %v823
    %v825 = vpop.xlane.xlu0 %824
    %v827 = vlaneseq
    %v828 = vshrl.u32 %v827, 7
    %v829 = vsub.s32 0, %v828
    %v830 = vrot.slane %v825, %v829
    %v831 = vlaneseq
    %v832 = vshrl.u32 %v831, 7
    %v833 = vsub.s32 1, %v832
    %v834 = vrot.slane %v825, %v833
    %v835 = vlaneseq
    %v836 = vshrl.u32 %v835, 7
    %v837 = vsub.s32 2, %v836
    %v838 = vrot.slane %v825, %v837
    %v839 = vlaneseq
    %v840 = vshrl.u32 %v839, 7
    %v841 = vsub.s32 3, %v840
    %v842 = vrot.slane %v825, %v841
    %v843 = vlaneseq
    %v844 = vshrl.u32 %v843, 7
    %v845 = vsub.s32 4, %v844
    %v846 = vrot.slane %v825, %v845
    %v847 = vlaneseq
    %v848 = vshrl.u32 %v847, 7
    %v849 = vsub.s32 5, %v848
    %v850 = vrot.slane %v825, %v849
    %v851 = vlaneseq
    %v852 = vshrl.u32 %v851, 7
    %v853 = vsub.s32 6, %v852
    %v854 = vrot.slane %v825, %v853
    %v855 = vlaneseq
    %v856 = vshrl.u32 %v855, 7
    %v857 = vsub.s32 7, %v856
    %v858 = vrot.slane %v825, %v857
    %v867 = vrcp.pop %v830
    %v868 = vmul.f32 %v648, %v867
    %v869 = vmul.f32 %v650, %v867
    %v870 = vrcp.pop %v834
    %v871 = vmul.f32 %v652, %v870
    %v872 = vmul.f32 %v654, %v870
    %v873 = vrcp.pop %v838
    %v874 = vmul.f32 %v656, %v873
    %v875 = vmul.f32 %v658, %v873
    %v876 = vrcp.pop %v842
    %v877 = vmul.f32 %v660, %v876
    %v878 = vmul.f32 %v662, %v876
    %v879 = vrcp.pop %v846
    %v880 = vmul.f32 %v664, %v879
    %v881 = vmul.f32 %v666, %v879
    %v882 = vrcp.pop %v850
    %v883 = vmul.f32 %v668, %v882
    %v884 = vmul.f32 %v670, %v882
    %v885 = vrcp.pop %v854
    %v886 = vmul.f32 %v672, %v885
    %v887 = vmul.f32 %v674, %v885
    %v888 = vrcp.pop %v858
    %v889 = vmul.f32 %v676, %v888
    %v890 = vmul.f32 %v678, %v888
    %892 = vset.pattern.permute.xlu0 0
    %893 = vperm.xlu0 %892, %v868
    %v894 = vpop.permute.xlu0 %893
    %897 = vset.pattern.permute.xlu0 0
    %898 = vperm.xlu0 %897, %v869
    %v899 = vpop.permute.xlu0 %898
    %902 = vset.pattern.permute.xlu0 0
    %903 = vperm.xlu0 %902, %v871
    %v904 = vpop.permute.xlu0 %903
    %907 = vset.pattern.permute.xlu0 0
    %908 = vperm.xlu0 %907, %v872
    %v909 = vpop.permute.xlu0 %908
    %912 = vset.pattern.permute.xlu0 0
    %913 = vperm.xlu0 %912, %v874
    %v914 = vpop.permute.xlu0 %913
    %917 = vset.pattern.permute.xlu0 0
    %918 = vperm.xlu0 %917, %v875
    %v919 = vpop.permute.xlu0 %918
    %922 = vset.pattern.permute.xlu0 0
    %923 = vperm.xlu0 %922, %v877
    %v924 = vpop.permute.xlu0 %923
    %927 = vset.pattern.permute.xlu0 0
    %928 = vperm.xlu0 %927, %v878
    %v929 = vpop.permute.xlu0 %928
    %932 = vset.pattern.permute.xlu0 0
    %933 = vperm.xlu0 %932, %v880
    %v934 = vpop.permute.xlu0 %933
    %937 = vset.pattern.permute.xlu0 0
    %938 = vperm.xlu0 %937, %v881
    %v939 = vpop.permute.xlu0 %938
    %942 = vset.pattern.permute.xlu0 0
    %943 = vperm.xlu0 %942, %v883
    %v944 = vpop.permute.xlu0 %943
    %947 = vset.pattern.permute.xlu0 0
    %948 = vperm.xlu0 %947, %v884
    %v949 = vpop.permute.xlu0 %948
    %952 = vset.pattern.permute.xlu0 0
    %953 = vperm.xlu0 %952, %v886
    %v954 = vpop.permute.xlu0 %953
    %957 = vset.pattern.permute.xlu0 0
    %958 = vperm.xlu0 %957, %v887
    %v959 = vpop.permute.xlu0 %958
    %962 = vset.pattern.permute.xlu0 0
    %963 = vperm.xlu0 %962, %v889
    %v964 = vpop.permute.xlu0 %963
    %967 = vset.pattern.permute.xlu0 0
    %968 = vperm.xlu0 %967, %v890
    %v969 = vpop.permute.xlu0 %968
    %v971 = vmul.f32 %v894, %v43
    %v972 = vmul.f32 %v899, %v44
    %v973 = vmul.f32 %v904, %v45
    %v974 = vmul.f32 %v909, %v46
    %v975 = vmul.f32 %v914, %v47
    %v976 = vmul.f32 %v919, %v48
    %v977 = vmul.f32 %v924, %v49
    %v978 = vmul.f32 %v929, %v50
    %v979 = vmul.f32 %v934, %v51
    %v980 = vmul.f32 %v939, %v52
    %v981 = vmul.f32 %v944, %v53
    %v982 = vmul.f32 %v949, %v54
    %v983 = vmul.f32 %v954, %v55
    %v984 = vmul.f32 %v959, %v56
    %v985 = vmul.f32 %v964, %v57
    %v986 = vmul.f32 %v969, %v58
    %v987 = vadd.f32 %v971, %v972
    %v988 = vrot.slane %v987, 4
    %v989 = vadd.f32 %v987, %v988
    %v990 = vrot.slane %v989, 2
    %v991 = vadd.f32 %v989, %v990
    %v992 = vrot.slane %v991, 1
    %v993 = vadd.f32 %v991, %v992
    %v994 = vadd.f32 %v973, %v974
    %v995 = vrot.slane %v994, 4
    %v996 = vadd.f32 %v994, %v995
    %v997 = vrot.slane %v996, 2
    %v998 = vadd.f32 %v996, %v997
    %v999 = vrot.slane %v998, 1
    %v1000 = vadd.f32 %v998, %v999
    %v1001 = vadd.f32 %v975, %v976
    %v1002 = vrot.slane %v1001, 4
    %v1003 = vadd.f32 %v1001, %v1002
    %v1004 = vrot.slane %v1003, 2
    %v1005 = vadd.f32 %v1003, %v1004
    %v1006 = vrot.slane %v1005, 1
    %v1007 = vadd.f32 %v1005, %v1006
    %v1008 = vadd.f32 %v977, %v978
    %v1009 = vrot.slane %v1008, 4
    %v1010 = vadd.f32 %v1008, %v1009
    %v1011 = vrot.slane %v1010, 2
    %v1012 = vadd.f32 %v1010, %v1011
    %v1013 = vrot.slane %v1012, 1
    %v1014 = vadd.f32 %v1012, %v1013
    %v1015 = vadd.f32 %v979, %v980
    %v1016 = vrot.slane %v1015, 4
    %v1017 = vadd.f32 %v1015, %v1016
    %v1018 = vrot.slane %v1017, 2
    %v1019 = vadd.f32 %v1017, %v1018
    %v1020 = vrot.slane %v1019, 1
    %v1021 = vadd.f32 %v1019, %v1020
    %v1022 = vadd.f32 %v981, %v982
    %v1023 = vrot.slane %v1022, 4
    %v1024 = vadd.f32 %v1022, %v1023
    %v1025 = vrot.slane %v1024, 2
    %v1026 = vadd.f32 %v1024, %v1025
    %v1027 = vrot.slane %v1026, 1
    %v1028 = vadd.f32 %v1026, %v1027
    %v1029 = vadd.f32 %v983, %v984
    %v1030 = vrot.slane %v1029, 4
    %v1031 = vadd.f32 %v1029, %v1030
    %v1032 = vrot.slane %v1031, 2
    %v1033 = vadd.f32 %v1031, %v1032
    %v1034 = vrot.slane %v1033, 1
    %v1035 = vadd.f32 %v1033, %v1034
    %v1036 = vadd.f32 %v985, %v986
    %v1037 = vrot.slane %v1036, 4
    %v1038 = vadd.f32 %v1036, %v1037
    %v1039 = vrot.slane %v1038, 2
    %v1040 = vadd.f32 %v1038, %v1039
    %v1041 = vrot.slane %v1040, 1
    %v1042 = vadd.f32 %v1040, %v1041
    %v1044 = vrot.slane %v59, 1
    %v1045 = vrot.slane %v59, 2
    %v1046 = vrot.slane %v59, 3
    %v1047 = vrot.slane %v59, 4
    %v1048 = vrot.slane %v59, 5
    %v1049 = vrot.slane %v59, 6
    %v1050 = vrot.slane %v59, 7
    %v1059 = vadd.f32 %v993, %v59
    %v1060 = vadd.f32 %v1000, %v1044
    %v1061 = vadd.f32 %v1007, %v1045
    %v1062 = vadd.f32 %v1014, %v1046
    %v1063 = vadd.f32 %v1021, %v1047
    %v1064 = vadd.f32 %v1028, %v1048
    %v1065 = vadd.f32 %v1035, %v1049
    %v1066 = vadd.f32 %v1042, %v1050
    %s1067 = scalar_lea.vmem %s2, 128
    %v1068 = vld [vmem:[%s1067] sm:$0xff]
    %v1069 = vld [vmem:[%s1067 + $0x8] sm:$0xff]
    %v1070 = vld [vmem:[%s1067 + $0x10] sm:$0xff]
    %v1071 = vld [vmem:[%s1067 + $0x18] sm:$0xff]
    %v1072 = vld [vmem:[%s1067 + $0x20] sm:$0xff]
    %v1073 = vld [vmem:[%s1067 + $0x28] sm:$0xff]
    %v1074 = vld [vmem:[%s1067 + $0x30] sm:$0xff]
    %v1075 = vld [vmem:[%s1067 + $0x38] sm:$0xff]
    %v1076 = vld [vmem:[%s1067 + $0x40] sm:$0xff]
    %v1077 = vld [vmem:[%s1067 + $0x48] sm:$0xff]
    %v1078 = vld [vmem:[%s1067 + $0x50] sm:$0xff]
    %v1079 = vld [vmem:[%s1067 + $0x58] sm:$0xff]
    %v1080 = vld [vmem:[%s1067 + $0x60] sm:$0xff]
    %v1081 = vld [vmem:[%s1067 + $0x68] sm:$0xff]
    %v1082 = vld [vmem:[%s1067 + $0x70] sm:$0xff]
    %v1083 = vld [vmem:[%s1067 + $0x78] sm:$0xff]
    %v1084 = vpack.c.bf16 %v1069, %v1068
    %v1085 = vpack.c.bf16 %v1071, %v1070
    %v1086 = vpack.c.bf16 %v1073, %v1072
    %v1087 = vpack.c.bf16 %v1075, %v1074
    %v1088 = vpack.c.bf16 %v1077, %v1076
    %v1089 = vpack.c.bf16 %v1079, %v1078
    %v1090 = vpack.c.bf16 %v1081, %v1080
    %v1091 = vpack.c.bf16 %v1083, %v1082
    %1092 = vmatprep.subr.bf16.mxu0 0
    %1093 = vmatpush1.bf16.msra.mxu0 %v1084
    %1094 = vmatprep.subr.bf16.mxu0 0
    %1095 = vmatpush1.bf16.msra.mxu0 %v1085
    %1096 = vmatprep.subr.bf16.mxu0 0
    %1097 = vmatpush1.bf16.msra.mxu0 %v1086
    %1098 = vmatprep.subr.bf16.mxu0 0
    %1099 = vmatpush1.bf16.msra.mxu0 %v1087
    %1100 = vmatprep.subr.bf16.mxu0 0
    %1101 = vmatpush1.bf16.msra.mxu0 %v1088
    %1102 = vmatprep.subr.bf16.mxu0 0
    %1103 = vmatpush1.bf16.msra.mxu0 %v1089
    %1104 = vmatprep.subr.bf16.mxu0 0
    %1105 = vmatpush1.bf16.msra.mxu0 %v1090
    %1106 = vmatprep.subr.bf16.mxu0 0
    %1107 = vmatpush1.bf16.msra.mxu0 %v1091
    %1108 = vmatprep.subr.bf16.mxu0 0
    %1109 = vmatpush1.bf16.msra.mxu0 0
    %1110 = vmatprep.subr.bf16.mxu0 0
    %1111 = vmatpush1.bf16.msra.mxu0 0
    %1112 = vmatprep.subr.bf16.mxu0 0
    %1113 = vmatpush1.bf16.msra.mxu0 0
    %1114 = vmatprep.subr.bf16.mxu0 0
    %1115 = vmatpush1.bf16.msra.mxu0 0
    %1116 = vmatprep.subr.bf16.mxu0 0
    %1117 = vmatpush1.bf16.msra.mxu0 0
    %1118 = vmatprep.subr.bf16.mxu0 0
    %1119 = vmatpush1.bf16.msra.mxu0 0
    %1120 = vmatprep.subr.bf16.mxu0 0
    %1121 = vmatpush1.bf16.msra.mxu0 0
    %1122 = vmatprep.subr.bf16.mxu0 0
    %1123 = vmatpush1.bf16.msra.mxu0 0
    %1124 = vmatprep.mubr.bf16.mxu0 0
    %1125 = vmatmul.mubr.bf16.gmra.mrb[0].mxu0 %v60
    %v1126 = vpop.f32.mrb[0].mxu0
    %v1127 = vadd.f32 0.0, %v1126
    %v1128 = vpop.f32.mrb[0].mxu0
    %v1129 = vpop.f32.mrb[0].mxu0
    %v1130 = vadd.f32 0.0, %v1129
    %v1131 = vpop.f32.mrb[0].mxu0
    %1132 = vmatprep.mubr.bf16.mxu0 0
    %1133 = vmatmul.mubr.bf16.gmra.mrb[0].mxu0 %v61
    %v1134 = vpop.f32.mrb[0].mxu0
    %v1135 = vadd.f32 0.0, %v1134
    %v1136 = vpop.f32.mrb[0].mxu0
    %v1137 = vpop.f32.mrb[0].mxu0
    %v1138 = vadd.f32 0.0, %v1137
    %v1139 = vpop.f32.mrb[0].mxu0
    %1140 = vmatprep.mubr.bf16.mxu0 0
    %1141 = vmatmul.mubr.bf16.gmra.mrb[0].mxu0 %v62
    %v1142 = vpop.f32.mrb[0].mxu0
    %v1143 = vadd.f32 0.0, %v1142
    %v1144 = vpop.f32.mrb[0].mxu0
    %v1145 = vpop.f32.mrb[0].mxu0
    %v1146 = vadd.f32 0.0, %v1145
    %v1147 = vpop.f32.mrb[0].mxu0
    %1148 = vmatprep.mubr.bf16.mxu0 0
    %1149 = vmatmul.mubr.bf16.gmra.mrb[0].mxu0 %v63
    %v1150 = vpop.f32.mrb[0].mxu0
    %v1151 = vadd.f32 0.0, %v1150
    %v1152 = vpop.f32.mrb[0].mxu0
    %v1153 = vpop.f32.mrb[0].mxu0
    %v1154 = vadd.f32 0.0, %v1153
    %v1155 = vpop.f32.mrb[0].mxu0
    %1156 = vmatprep.mubr.bf16.mxu0 0
    %1157 = vmatmul.mubr.bf16.gmra.mrb[0].mxu0 %v64
    %v1158 = vpop.f32.mrb[0].mxu0
    %v1159 = vadd.f32 0.0, %v1158
    %v1160 = vpop.f32.mrb[0].mxu0
    %v1161 = vpop.f32.mrb[0].mxu0
    %v1162 = vadd.f32 0.0, %v1161
    %v1163 = vpop.f32.mrb[0].mxu0
    %1164 = vmatprep.mubr.bf16.mxu0 0
    %1165 = vmatmul.mubr.bf16.gmra.mrb[0].mxu0 %v65
    %v1166 = vpop.f32.mrb[0].mxu0
    %v1167 = vadd.f32 0.0, %v1166
    %v1168 = vpop.f32.mrb[0].mxu0
    %v1169 = vpop.f32.mrb[0].mxu0
    %v1170 = vadd.f32 0.0, %v1169
    %v1171 = vpop.f32.mrb[0].mxu0
    %1172 = vmatprep.mubr.bf16.mxu0 0
    %1173 = vmatmul.mubr.bf16.gmra.mrb[0].mxu0 %v66
    %v1174 = vpop.f32.mrb[0].mxu0
    %v1175 = vadd.f32 0.0, %v1174
    %v1176 = vpop.f32.mrb[0].mxu0
    %v1177 = vpop.f32.mrb[0].mxu0
    %v1178 = vadd.f32 0.0, %v1177
    %v1179 = vpop.f32.mrb[0].mxu0
    %1180 = vmatprep.mubr.bf16.mxu0 0
    %1181 = vmatmul.mubr.bf16.gmra.mrb[0].mxu0 %v67
    %v1182 = vpop.f32.mrb[0].mxu0
    %v1183 = vadd.f32 0.0, %v1182
    %v1184 = vpop.f32.mrb[0].mxu0
    %v1185 = vpop.f32.mrb[0].mxu0
    %v1186 = vadd.f32 0.0, %v1185
    %v1187 = vpop.f32.mrb[0].mxu0
    %1188 = vdwg.mxu0
    %s1189 = scalar_lea.vmem %s3, 1
    %v1190 = vld [vmem:[%s1189] sm:$0x1]
    %v1192 = vlaneseq
    %v1193 = vshrl.u32 %v1192, 7
    %v1194 = vsub.s32 0, %v1193
    %v1195 = vrot.slane %v1190, %v1194
    %v1197 = vadd.f32 %v1127, %v1195
    %v1198 = vadd.f32 %v1130, %v1195
    %v1199 = vadd.f32 %v1135, %v1195
    %v1200 = vadd.f32 %v1138, %v1195
    %v1201 = vadd.f32 %v1143, %v1195
    %v1202 = vadd.f32 %v1146, %v1195
    %v1203 = vadd.f32 %v1151, %v1195
    %v1204 = vadd.f32 %v1154, %v1195
    %v1205 = vadd.f32 %v1159, %v1195
    %v1206 = vadd.f32 %v1162, %v1195
    %v1207 = vadd.f32 %v1167, %v1195
    %v1208 = vadd.f32 %v1170, %v1195
    %v1209 = vadd.f32 %v1175, %v1195
    %v1210 = vadd.f32 %v1178, %v1195
    %v1211 = vadd.f32 %v1183, %v1195
    %v1212 = vadd.f32 %v1186, %v1195
    %v1213 = vpack.c.bf16 %v1059, %v1059
    %v1214 = vpack.c.bf16 %v1060, %v1060
    %v1215 = vpack.c.bf16 %v1061, %v1061
    %v1216 = vpack.c.bf16 %v1062, %v1062
    %v1217 = vpack.c.bf16 %v1063, %v1063
    %v1218 = vpack.c.bf16 %v1064, %v1064
    %v1219 = vpack.c.bf16 %v1065, %v1065
    %v1220 = vpack.c.bf16 %v1066, %v1066
    %s1221 = scalar_lea.vmem %s4, 128
    %v1222 = vld [vmem:[%s1221] sm:$0xff]
    %v1223 = vld [vmem:[%s1221 + $0x8] sm:$0xff]
    %v1224 = vld [vmem:[%s1221 + $0x10] sm:$0xff]
    %v1225 = vld [vmem:[%s1221 + $0x18] sm:$0xff]
    %v1226 = vld [vmem:[%s1221 + $0x20] sm:$0xff]
    %v1227 = vld [vmem:[%s1221 + $0x28] sm:$0xff]
    %v1228 = vld [vmem:[%s1221 + $0x30] sm:$0xff]
    %v1229 = vld [vmem:[%s1221 + $0x38] sm:$0xff]
    %v1230 = vld [vmem:[%s1221 + $0x40] sm:$0xff]
    %v1231 = vld [vmem:[%s1221 + $0x48] sm:$0xff]
    %v1232 = vld [vmem:[%s1221 + $0x50] sm:$0xff]
    %v1233 = vld [vmem:[%s1221 + $0x58] sm:$0xff]
    %v1234 = vld [vmem:[%s1221 + $0x60] sm:$0xff]
    %v1235 = vld [vmem:[%s1221 + $0x68] sm:$0xff]
    %v1236 = vld [vmem:[%s1221 + $0x70] sm:$0xff]
    %v1237 = vld [vmem:[%s1221 + $0x78] sm:$0xff]
    %v1238 = vpack.c.bf16 %v1223, %v1222
    %v1239 = vpack.c.bf16 %v1225, %v1224
    %v1240 = vpack.c.bf16 %v1227, %v1226
    %v1241 = vpack.c.bf16 %v1229, %v1228
    %v1242 = vpack.c.bf16 %v1231, %v1230
    %v1243 = vpack.c.bf16 %v1233, %v1232
    %v1244 = vpack.c.bf16 %v1235, %v1234
    %v1245 = vpack.c.bf16 %v1237, %v1236
    %s1246 = scalar_lea.vmem %s5, 1
    %v1247 = vld [vmem:[%s1246] sm:$0x1]
    %v1249 = vlaneseq
    %v1250 = vshrl.u32 %v1249, 7
    %v1251 = vsub.s32 0, %v1250
    %v1252 = vrot.slane %v1247, %v1251
    %v1262 = vunpack.c.l.b16 %v1213
    %v1263 = vunpack.c.l.b16 %v1214
    %v1264 = vunpack.c.l.b16 %v1215
    %v1265 = vunpack.c.l.b16 %v1216
    %v1266 = vunpack.c.l.b16 %v1217
    %v1267 = vunpack.c.l.b16 %v1218
    %v1268 = vunpack.c.l.b16 %v1219
    %v1269 = vunpack.c.l.b16 %v1220
    %v1270 = vrot.slane %v1263, 7
    %v1271 = vsel %vm571, %v1270, %v1262
    %v1272 = vrot.slane %v1264, 6
    %v1273 = vsel %vm573, %v1272, %v1271
    %v1274 = vrot.slane %v1265, 5
    %v1275 = vsel %vm575, %v1274, %v1273
    %v1276 = vrot.slane %v1266, 4
    %v1277 = vsel %vm577, %v1276, %v1275
    %v1278 = vrot.slane %v1267, 3
    %v1279 = vsel %vm579, %v1278, %v1277
    %v1280 = vrot.slane %v1268, 2
    %v1281 = vsel %vm581, %v1280, %v1279
    %v1282 = vrot.slane %v1269, 1
    %v1283 = vsel %vm583, %v1282, %v1281
    %v1284 = vpack.c.b16 %v1283, %v1283
    %1286 = vmatprep.subr.bf16.mxu0 0
    %1287 = vmatpush1.bf16.msra.mxu0 %v1238
    %1288 = vmatprep.subr.bf16.mxu0 0
    %1289 = vmatpush1.bf16.msra.mxu0 %v1239
    %1290 = vmatprep.subr.bf16.mxu0 0
    %1291 = vmatpush1.bf16.msra.mxu0 %v1240
    %1292 = vmatprep.subr.bf16.mxu0 0
    %1293 = vmatpush1.bf16.msra.mxu0 %v1241
    %1294 = vmatprep.subr.bf16.mxu0 0
    %1295 = vmatpush1.bf16.msra.mxu0 %v1242
    %1296 = vmatprep.subr.bf16.mxu0 0
    %1297 = vmatpush1.bf16.msra.mxu0 %v1243
    %1298 = vmatprep.subr.bf16.mxu0 0
    %1299 = vmatpush1.bf16.msra.mxu0 %v1244
    %1300 = vmatprep.subr.bf16.mxu0 0
    %1301 = vmatpush1.bf16.msra.mxu0 %v1245
    %1302 = vmatprep.subr.bf16.mxu0 0
    %1303 = vmatpush1.bf16.msra.mxu0 0
    %1304 = vmatprep.subr.bf16.mxu0 0
    %1305 = vmatpush1.bf16.msra.mxu0 0
    %1306 = vmatprep.subr.bf16.mxu0 0
    %1307 = vmatpush1.bf16.msra.mxu0 0
    %1308 = vmatprep.subr.bf16.mxu0 0
    %1309 = vmatpush1.bf16.msra.mxu0 0
    %1310 = vmatprep.subr.bf16.mxu0 0
    %1311 = vmatpush1.bf16.msra.mxu0 0
    %1312 = vmatprep.subr.bf16.mxu0 0
    %1313 = vmatpush1.bf16.msra.mxu0 0
    %1314 = vmatprep.subr.bf16.mxu0 0
    %1315 = vmatpush1.bf16.msra.mxu0 0
    %1316 = vmatprep.subr.bf16.mxu0 0
    %1317 = vmatpush1.bf16.msra.mxu0 0
    %1318 = vmatprep.mubr.bf16.mxu0 0
    %1319 = vmatmul.mubr.bf16.gmra.mrb[0].mxu0 %v1284
    %v1320 = vpop.f32.mrb[0].mxu0
    %v1321 = vadd.f32 %v1252, %v1320
    %v1322 = vpop.f32.mrb[0].mxu0
    %v1323 = vpop.f32.mrb[0].mxu0
    %v1324 = vpop.f32.mrb[0].mxu0
    %1325 = vdwg.mxu0
    %v1327 = vcombine.high %v1321, %v1321
    %v1329 = vunpack.c.l.s4 1966171168
    %v1330 = vunpack.c.0.s8 %v1329
    %v1331 = vlaneseq
    %v1332 = vshrl.u32 %v1331, 7
    %v1333 = vsub.s32 %v1330, %v1332
    %v1334 = vrot.slane %v1321, %v1333
    %v1336 = vunpack.c.l.s4 1966171168
    %v1337 = vunpack.c.0.s8 %v1336
    %v1338 = vlaneseq
    %v1339 = vshrl.u32 %v1338, 7
    %v1340 = vsub.s32 %v1337, %v1339
    %v1341 = vrot.slane %v1327, %v1340
    %v1342 = vcombine.high %v1334, %v1334
    %v1343 = vcombine.high %v1341, %v1341
    %v1345 = vunpack.c.l.s4 1966171168
    %v1346 = vunpack.c.0.s8 %v1345
    %v1347 = vlaneseq
    %v1348 = vshrl.u32 %v1347, 7
    %v1349 = vsub.s32 %v1346, %v1348
    %v1350 = vrot.slane %v1334, %v1349
    %v1352 = vunpack.c.l.s4 1966171168
    %v1353 = vunpack.c.0.s8 %v1352
    %v1354 = vlaneseq
    %v1355 = vshrl.u32 %v1354, 7
    %v1356 = vsub.s32 %v1353, %v1355
    %v1357 = vrot.slane %v1341, %v1356
    %v1359 = vunpack.c.l.s4 1966171168
    %v1360 = vunpack.c.0.s8 %v1359
    %v1361 = vlaneseq
    %v1362 = vshrl.u32 %v1361, 7
    %v1363 = vsub.s32 %v1360, %v1362
    %v1364 = vrot.slane %v1342, %v1363
    %v1366 = vunpack.c.l.s4 1966171168
    %v1367 = vunpack.c.0.s8 %v1366
    %v1368 = vlaneseq
    %v1369 = vshrl.u32 %v1368, 7
    %v1370 = vsub.s32 %v1367, %v1369
    %v1371 = vrot.slane %v1343, %v1370
    %v1372 = vcombine.high %v1350, %v1350
    %v1373 = vcombine.high %v1357, %v1357
    %v1374 = vcombine.high %v1364, %v1364
    %v1375 = vcombine.high %v1371, %v1371
    %v1376 = vlaneseq
    %v1377 = vshrl.u32 %v1376, 7
    %v1378 = vsub.s32 0, %v1377
    %v1379 = vrot.slane %v1350, %v1378
    %v1380 = vlaneseq
    %v1381 = vshrl.u32 %v1380, 7
    %v1382 = vsub.s32 0, %v1381
    %v1383 = vrot.slane %v1364, %v1382
    %v1384 = vlaneseq
    %v1385 = vshrl.u32 %v1384, 7
    %v1386 = vsub.s32 0, %v1385
    %v1387 = vrot.slane %v1372, %v1386
    %v1388 = vlaneseq
    %v1389 = vshrl.u32 %v1388, 7
    %v1390 = vsub.s32 0, %v1389
    %v1391 = vrot.slane %v1374, %v1390
    %v1392 = vlaneseq
    %v1393 = vshrl.u32 %v1392, 7
    %v1394 = vsub.s32 0, %v1393
    %v1395 = vrot.slane %v1357, %v1394
    %v1396 = vlaneseq
    %v1397 = vshrl.u32 %v1396, 7
    %v1398 = vsub.s32 0, %v1397
    %v1399 = vrot.slane %v1371, %v1398
    %v1400 = vlaneseq
    %v1401 = vshrl.u32 %v1400, 7
    %v1402 = vsub.s32 0, %v1401
    %v1403 = vrot.slane %v1373, %v1402
    %v1404 = vlaneseq
    %v1405 = vshrl.u32 %v1404, 7
    %v1406 = vsub.s32 0, %v1405
    %v1407 = vrot.slane %v1375, %v1406
    %v1416 = vadd.f32 %v1197, %v1379
    %v1417 = vadd.f32 %v1198, %v1379
    %v1418 = vadd.f32 %v1199, %v1383
    %v1419 = vadd.f32 %v1200, %v1383
    %v1420 = vadd.f32 %v1201, %v1387
    %v1421 = vadd.f32 %v1202, %v1387
    %v1422 = vadd.f32 %v1203, %v1391
    %v1423 = vadd.f32 %v1204, %v1391
    %v1424 = vadd.f32 %v1205, %v1395
    %v1425 = vadd.f32 %v1206, %v1395
    %v1426 = vadd.f32 %v1207, %v1399
    %v1427 = vadd.f32 %v1208, %v1399
    %v1428 = vadd.f32 %v1209, %v1403
    %v1429 = vadd.f32 %v1210, %v1403
    %v1430 = vadd.f32 %v1211, %v1407
    %v1431 = vadd.f32 %v1212, %v1407
    %v1432 = vtanh.pop %v1416
    %v1433 = vtanh.pop %v1417
    %v1434 = vtanh.pop %v1418
    %v1435 = vtanh.pop %v1419
    %v1436 = vtanh.pop %v1420
    %v1437 = vtanh.pop %v1421
    %v1438 = vtanh.pop %v1422
    %v1439 = vtanh.pop %v1423
    %v1440 = vtanh.pop %v1424
    %v1441 = vtanh.pop %v1425
    %v1442 = vtanh.pop %v1426
    %v1443 = vtanh.pop %v1427
    %v1444 = vtanh.pop %v1428
    %v1445 = vtanh.pop %v1429
    %v1446 = vtanh.pop %v1430
    %v1447 = vtanh.pop %v1431
    %s1448 = scalar_lea.vmem %s6, 1
    %v1449 = vld [vmem:[%s1448] sm:$0x1]
    %v1451 = vlaneseq
    %v1452 = vshrl.u32 %v1451, 7
    %v1453 = vsub.s32 0, %v1452
    %v1454 = vrot.slane %v1449, %v1453
    %v1456 = vmul.f32 %v1432, %v1454
    %v1457 = vmul.f32 %v1433, %v1454
    %v1458 = vmul.f32 %v1434, %v1454
    %v1459 = vmul.f32 %v1435, %v1454
    %v1460 = vmul.f32 %v1436, %v1454
    %v1461 = vmul.f32 %v1437, %v1454
    %v1462 = vmul.f32 %v1438, %v1454
    %v1463 = vmul.f32 %v1439, %v1454
    %v1464 = vmul.f32 %v1440, %v1454
    %v1465 = vmul.f32 %v1441, %v1454
    %v1466 = vmul.f32 %v1442, %v1454
    %v1467 = vmul.f32 %v1443, %v1454
    %v1468 = vmul.f32 %v1444, %v1454
    %v1469 = vmul.f32 %v1445, %v1454
    %v1470 = vmul.f32 %v1446, %v1454
    %v1471 = vmul.f32 %v1447, %v1454
    %1472 = vadd.xlane.f32.xlu0 %v1456
    %v1473 = vpop.xlane.xlu0 %1472
    %1474 = vadd.xlane.f32.xlu0 %v1457
    %v1475 = vpop.xlane.xlu0 %1474
    %1476 = vadd.xlane.f32.xlu0 %v1458
    %v1477 = vpop.xlane.xlu0 %1476
    %1478 = vadd.xlane.f32.xlu0 %v1459
    %v1479 = vpop.xlane.xlu0 %1478
    %1480 = vadd.xlane.f32.xlu0 %v1460
    %v1481 = vpop.xlane.xlu0 %1480
    %1482 = vadd.xlane.f32.xlu0 %v1461
    %v1483 = vpop.xlane.xlu0 %1482
    %1484 = vadd.xlane.f32.xlu0 %v1462
    %v1485 = vpop.xlane.xlu0 %1484
    %1486 = vadd.xlane.f32.xlu0 %v1463
    %v1487 = vpop.xlane.xlu0 %1486
    %1488 = vadd.xlane.f32.xlu0 %v1464
    %v1489 = vpop.xlane.xlu0 %1488
    %1490 = vadd.xlane.f32.xlu0 %v1465
    %v1491 = vpop.xlane.xlu0 %1490
    %1492 = vadd.xlane.f32.xlu0 %v1466
    %v1493 = vpop.xlane.xlu0 %1492
    %1494 = vadd.xlane.f32.xlu0 %v1467
    %v1495 = vpop.xlane.xlu0 %1494
    %1496 = vadd.xlane.f32.xlu0 %v1468
    %v1497 = vpop.xlane.xlu0 %1496
    %1498 = vadd.xlane.f32.xlu0 %v1469
    %v1499 = vpop.xlane.xlu0 %1498
    %1500 = vadd.xlane.f32.xlu0 %v1470
    %v1501 = vpop.xlane.xlu0 %1500
    %1502 = vadd.xlane.f32.xlu0 %v1471
    %v1503 = vpop.xlane.xlu0 %1502
    %s1504 = sld [smem:[#allocation2 + $0x1]]
    %v1505 = vstv %s1504
    %v1506 = vadd.f32 %v1473, %v1505
    %v1507 = vadd.f32 %v1475, %v1505
    %v1508 = vadd.f32 %v1477, %v1505
    %v1509 = vadd.f32 %v1479, %v1505
    %v1510 = vadd.f32 %v1481, %v1505
    %v1511 = vadd.f32 %v1483, %v1505
    %v1512 = vadd.f32 %v1485, %v1505
    %v1513 = vadd.f32 %v1487, %v1505
    %v1514 = vadd.f32 %v1489, %v1505
    %v1515 = vadd.f32 %v1491, %v1505
    %v1516 = vadd.f32 %v1493, %v1505
    %v1517 = vadd.f32 %v1495, %v1505
    %v1518 = vadd.f32 %v1497, %v1505
    %v1519 = vadd.f32 %v1499, %v1505
    %v1520 = vadd.f32 %v1501, %v1505
    %v1521 = vadd.f32 %v1503, %v1505
    %v1538 = vlaneseq
    %v1539 = vshrl.u32 %v1538, 7
    %v1540 = vsub.s32 %v496, %v1539
    %v1541 = vrot.slane %v1506, %v1540
    %v1542 = vlaneseq
    %v1543 = vshrl.u32 %v1542, 7
    %v1544 = vsub.s32 %v501, %v1543
    %v1545 = vrot.slane %v1507, %v1544
    %v1546 = vsel %vm506, %v1545, %v1541
    %v1547 = vlaneseq
    %v1548 = vshrl.u32 %v1547, 7
    %v1549 = vsub.s32 %v496, %v1548
    %v1550 = vrot.slane %v1508, %v1549
    %v1551 = vlaneseq
    %v1552 = vshrl.u32 %v1551, 7
    %v1553 = vsub.s32 %v501, %v1552
    %v1554 = vrot.slane %v1509, %v1553
    %v1555 = vsel %vm506, %v1554, %v1550
    %v1556 = vlaneseq
    %v1557 = vshrl.u32 %v1556, 7
    %v1558 = vsub.s32 %v496, %v1557
    %v1559 = vrot.slane %v1510, %v1558
    %v1560 = vlaneseq
    %v1561 = vshrl.u32 %v1560, 7
    %v1562 = vsub.s32 %v501, %v1561
    %v1563 = vrot.slane %v1511, %v1562
    %v1564 = vsel %vm506, %v1563, %v1559
    %v1565 = vlaneseq
    %v1566 = vshrl.u32 %v1565, 7
    %v1567 = vsub.s32 %v496, %v1566
    %v1568 = vrot.slane %v1512, %v1567
    %v1569 = vlaneseq
    %v1570 = vshrl.u32 %v1569, 7
    %v1571 = vsub.s32 %v501, %v1570
    %v1572 = vrot.slane %v1513, %v1571
    %v1573 = vsel %vm506, %v1572, %v1568
    %v1574 = vlaneseq
    %v1575 = vshrl.u32 %v1574, 7
    %v1576 = vsub.s32 %v496, %v1575
    %v1577 = vrot.slane %v1514, %v1576
    %v1578 = vlaneseq
    %v1579 = vshrl.u32 %v1578, 7
    %v1580 = vsub.s32 %v501, %v1579
    %v1581 = vrot.slane %v1515, %v1580
    %v1582 = vsel %vm506, %v1581, %v1577
    %v1583 = vlaneseq
    %v1584 = vshrl.u32 %v1583, 7
    %v1585 = vsub.s32 %v496, %v1584
    %v1586 = vrot.slane %v1516, %v1585
    %v1587 = vlaneseq
    %v1588 = vshrl.u32 %v1587, 7
    %v1589 = vsub.s32 %v501, %v1588
    %v1590 = vrot.slane %v1517, %v1589
    %v1591 = vsel %vm506, %v1590, %v1586
    %v1592 = vlaneseq
    %v1593 = vshrl.u32 %v1592, 7
    %v1594 = vsub.s32 %v496, %v1593
    %v1595 = vrot.slane %v1518, %v1594
    %v1596 = vlaneseq
    %v1597 = vshrl.u32 %v1596, 7
    %v1598 = vsub.s32 %v501, %v1597
    %v1599 = vrot.slane %v1519, %v1598
    %v1600 = vsel %vm506, %v1599, %v1595
    %v1601 = vlaneseq
    %v1602 = vshrl.u32 %v1601, 7
    %v1603 = vsub.s32 %v496, %v1602
    %v1604 = vrot.slane %v1520, %v1603
    %v1605 = vlaneseq
    %v1606 = vshrl.u32 %v1605, 7
    %v1607 = vsub.s32 %v501, %v1606
    %v1608 = vrot.slane %v1521, %v1607
    %v1609 = vsel %vm506, %v1608, %v1604
    %v1610 = vsel %vm571, %v1555, %v1546
    %v1611 = vsel %vm573, %v1564, %v1610
    %v1612 = vsel %vm575, %v1573, %v1611
    %v1613 = vsel %vm577, %v1582, %v1612
    %v1614 = vsel %vm579, %v1591, %v1613
    %v1615 = vsel %vm581, %v1600, %v1614
    %v1616 = vsel %vm583, %v1609, %v1615
    %v1618 = vsel %vm586, %v1616, -inf
    %1619 = vmax.xlane.f32.xlu0 %v1618
    %v1620 = vpop.xlane.xlu0 %1619
    %v1622 = vlaneseq
    %v1623 = vshrl.u32 %v1622, 7
    %v1624 = vsub.s32 0, %v1623
    %v1625 = vrot.slane %v1620, %v1624
    %v1626 = vlaneseq
    %v1627 = vshrl.u32 %v1626, 7
    %v1628 = vsub.s32 1, %v1627
    %v1629 = vrot.slane %v1620, %v1628
    %v1630 = vlaneseq
    %v1631 = vshrl.u32 %v1630, 7
    %v1632 = vsub.s32 2, %v1631
    %v1633 = vrot.slane %v1620, %v1632
    %v1634 = vlaneseq
    %v1635 = vshrl.u32 %v1634, 7
    %v1636 = vsub.s32 3, %v1635
    %v1637 = vrot.slane %v1620, %v1636
    %v1638 = vlaneseq
    %v1639 = vshrl.u32 %v1638, 7
    %v1640 = vsub.s32 4, %v1639
    %v1641 = vrot.slane %v1620, %v1640
    %v1642 = vlaneseq
    %v1643 = vshrl.u32 %v1642, 7
    %v1644 = vsub.s32 5, %v1643
    %v1645 = vrot.slane %v1620, %v1644
    %v1646 = vlaneseq
    %v1647 = vshrl.u32 %v1646, 7
    %v1648 = vsub.s32 6, %v1647
    %v1649 = vrot.slane %v1620, %v1648
    %v1650 = vlaneseq
    %v1651 = vshrl.u32 %v1650, 7
    %v1652 = vsub.s32 7, %v1651
    %v1653 = vrot.slane %v1620, %v1652
    %v1662 = vsub.f32 %v1506, %v1625
    %v1663 = vsub.f32 %v1507, %v1625
    %v1664 = vsub.f32 %v1508, %v1629
    %v1665 = vsub.f32 %v1509, %v1629
    %v1666 = vsub.f32 %v1510, %v1633
    %v1667 = vsub.f32 %v1511, %v1633
    %v1668 = vsub.f32 %v1512, %v1637
    %v1669 = vsub.f32 %v1513, %v1637
    %v1670 = vsub.f32 %v1514, %v1641
    %v1671 = vsub.f32 %v1515, %v1641
    %v1672 = vsub.f32 %v1516, %v1645
    %v1673 = vsub.f32 %v1517, %v1645
    %v1674 = vsub.f32 %v1518, %v1649
    %v1675 = vsub.f32 %v1519, %v1649
    %v1676 = vsub.f32 %v1520, %v1653
    %v1677 = vsub.f32 %v1521, %v1653
    %v1678 = vmul.f32 %v1662, 1.442695
    %v1679 = vpow.pop %v1678
    %v1680 = vmul.f32 %v1663, 1.442695
    %v1681 = vpow.pop %v1680
    %v1682 = vmul.f32 %v1664, 1.442695
    %v1683 = vpow.pop %v1682
    %v1684 = vmul.f32 %v1665, 1.442695
    %v1685 = vpow.pop %v1684
    %v1686 = vmul.f32 %v1666, 1.442695
    %v1687 = vpow.pop %v1686
    %v1688 = vmul.f32 %v1667, 1.442695
    %v1689 = vpow.pop %v1688
    %v1690 = vmul.f32 %v1668, 1.442695
    %v1691 = vpow.pop %v1690
    %v1692 = vmul.f32 %v1669, 1.442695
    %v1693 = vpow.pop %v1692
    %v1694 = vmul.f32 %v1670, 1.442695
    %v1695 = vpow.pop %v1694
    %v1696 = vmul.f32 %v1671, 1.442695
    %v1697 = vpow.pop %v1696
    %v1698 = vmul.f32 %v1672, 1.442695
    %v1699 = vpow.pop %v1698
    %v1700 = vmul.f32 %v1673, 1.442695
    %v1701 = vpow.pop %v1700
    %v1702 = vmul.f32 %v1674, 1.442695
    %v1703 = vpow.pop %v1702
    %v1704 = vmul.f32 %v1675, 1.442695
    %v1705 = vpow.pop %v1704
    %v1706 = vmul.f32 %v1676, 1.442695
    %v1707 = vpow.pop %v1706
    %v1708 = vmul.f32 %v1677, 1.442695
    %v1709 = vpow.pop %v1708
    %1726 = vset.pattern.permute.xlu0 0
    %1727 = vperm.xlu0 %1726, %v1679
    %v1728 = vpop.permute.xlu0 %1727
    %1729 = vset.pattern.permute.xlu0 0
    %1730 = vperm.xlu0 %1729, %v1681
    %v1731 = vpop.permute.xlu0 %1730
    %1732 = vset.pattern.permute.xlu0 0
    %1733 = vperm.xlu0 %1732, %v1683
    %v1734 = vpop.permute.xlu0 %1733
    %1735 = vset.pattern.permute.xlu0 0
    %1736 = vperm.xlu0 %1735, %v1685
    %v1737 = vpop.permute.xlu0 %1736
    %1738 = vset.pattern.permute.xlu0 0
    %1739 = vperm.xlu0 %1738, %v1687
    %v1740 = vpop.permute.xlu0 %1739
    %1741 = vset.pattern.permute.xlu0 0
    %1742 = vperm.xlu0 %1741, %v1689
    %v1743 = vpop.permute.xlu0 %1742
    %1744 = vset.pattern.permute.xlu0 0
    %1745 = vperm.xlu0 %1744, %v1691
    %v1746 = vpop.permute.xlu0 %1745
    %1747 = vset.pattern.permute.xlu0 0
    %1748 = vperm.xlu0 %1747, %v1693
    %v1749 = vpop.permute.xlu0 %1748
    %1750 = vset.pattern.permute.xlu0 0
    %1751 = vperm.xlu0 %1750, %v1695
    %v1752 = vpop.permute.xlu0 %1751
    %1753 = vset.pattern.permute.xlu0 0
    %1754 = vperm.xlu0 %1753, %v1697
    %v1755 = vpop.permute.xlu0 %1754
    %1756 = vset.pattern.permute.xlu0 0
    %1757 = vperm.xlu0 %1756, %v1699
    %v1758 = vpop.permute.xlu0 %1757
    %1759 = vset.pattern.permute.xlu0 0
    %1760 = vperm.xlu0 %1759, %v1701
    %v1761 = vpop.permute.xlu0 %1760
    %1762 = vset.pattern.permute.xlu0 0
    %1763 = vperm.xlu0 %1762, %v1703
    %v1764 = vpop.permute.xlu0 %1763
    %1765 = vset.pattern.permute.xlu0 0
    %1766 = vperm.xlu0 %1765, %v1705
    %v1767 = vpop.permute.xlu0 %1766
    %1768 = vset.pattern.permute.xlu0 0
    %1769 = vperm.xlu0 %1768, %v1707
    %v1770 = vpop.permute.xlu0 %1769
    %1771 = vset.pattern.permute.xlu0 0
    %1772 = vperm.xlu0 %1771, %v1709
    %v1773 = vpop.permute.xlu0 %1772
    %v1774 = vlaneseq
    %v1775 = vshrl.u32 %v1774, 7
    %v1776 = vsub.s32 %v496, %v1775
    %v1777 = vrot.slane %v1728, %v1776
    %v1778 = vlaneseq
    %v1779 = vshrl.u32 %v1778, 7
    %v1780 = vsub.s32 %v501, %v1779
    %v1781 = vrot.slane %v1731, %v1780
    %v1782 = vsel %vm506, %v1781, %v1777
    %v1783 = vlaneseq
    %v1784 = vshrl.u32 %v1783, 7
    %v1785 = vsub.s32 %v496, %v1784
    %v1786 = vrot.slane %v1734, %v1785
    %v1787 = vlaneseq
    %v1788 = vshrl.u32 %v1787, 7
    %v1789 = vsub.s32 %v501, %v1788
    %v1790 = vrot.slane %v1737, %v1789
    %v1791 = vsel %vm506, %v1790, %v1786
    %v1792 = vlaneseq
    %v1793 = vshrl.u32 %v1792, 7
    %v1794 = vsub.s32 %v496, %v1793
    %v1795 = vrot.slane %v1740, %v1794
    %v1796 = vlaneseq
    %v1797 = vshrl.u32 %v1796, 7
    %v1798 = vsub.s32 %v501, %v1797
    %v1799 = vrot.slane %v1743, %v1798
    %v1800 = vsel %vm506, %v1799, %v1795
    %v1801 = vlaneseq
    %v1802 = vshrl.u32 %v1801, 7
    %v1803 = vsub.s32 %v496, %v1802
    %v1804 = vrot.slane %v1746, %v1803
    %v1805 = vlaneseq
    %v1806 = vshrl.u32 %v1805, 7
    %v1807 = vsub.s32 %v501, %v1806
    %v1808 = vrot.slane %v1749, %v1807
    %v1809 = vsel %vm506, %v1808, %v1804
    %v1810 = vlaneseq
    %v1811 = vshrl.u32 %v1810, 7
    %v1812 = vsub.s32 %v496, %v1811
    %v1813 = vrot.slane %v1752, %v1812
    %v1814 = vlaneseq
    %v1815 = vshrl.u32 %v1814, 7
    %v1816 = vsub.s32 %v501, %v1815
    %v1817 = vrot.slane %v1755, %v1816
    %v1818 = vsel %vm506, %v1817, %v1813
    %v1819 = vlaneseq
    %v1820 = vshrl.u32 %v1819, 7
    %v1821 = vsub.s32 %v496, %v1820
    %v1822 = vrot.slane %v1758, %v1821
    %v1823 = vlaneseq
    %v1824 = vshrl.u32 %v1823, 7
    %v1825 = vsub.s32 %v501, %v1824
    %v1826 = vrot.slane %v1761, %v1825
    %v1827 = vsel %vm506, %v1826, %v1822
    %v1828 = vlaneseq
    %v1829 = vshrl.u32 %v1828, 7
    %v1830 = vsub.s32 %v496, %v1829
    %v1831 = vrot.slane %v1764, %v1830
    %v1832 = vlaneseq
    %v1833 = vshrl.u32 %v1832, 7
    %v1834 = vsub.s32 %v501, %v1833
    %v1835 = vrot.slane %v1767, %v1834
    %v1836 = vsel %vm506, %v1835, %v1831
    %v1837 = vlaneseq
    %v1838 = vshrl.u32 %v1837, 7
    %v1839 = vsub.s32 %v496, %v1838
    %v1840 = vrot.slane %v1770, %v1839
    %v1841 = vlaneseq
    %v1842 = vshrl.u32 %v1841, 7
    %v1843 = vsub.s32 %v501, %v1842
    %v1844 = vrot.slane %v1773, %v1843
    %v1845 = vsel %vm506, %v1844, %v1840
    %v1846 = vsel %vm571, %v1791, %v1782
    %v1847 = vsel %vm573, %v1800, %v1846
    %v1848 = vsel %vm575, %v1809, %v1847
    %v1849 = vsel %vm577, %v1818, %v1848
    %v1850 = vsel %vm579, %v1827, %v1849
    %v1851 = vsel %vm581, %v1836, %v1850
    %v1852 = vsel %vm583, %v1845, %v1851
    %v1854 = vsel %vm586, %v1852, 0.0
    %1855 = vadd.xlane.f32.xlu0 %v1854
    %v1856 = vpop.xlane.xlu0 %1855
    %v1858 = vlaneseq
    %v1859 = vshrl.u32 %v1858, 7
    %v1860 = vsub.s32 0, %v1859
    %v1861 = vrot.slane %v1856, %v1860
    %v1862 = vlaneseq
    %v1863 = vshrl.u32 %v1862, 7
    %v1864 = vsub.s32 1, %v1863
    %v1865 = vrot.slane %v1856, %v1864
    %v1866 = vlaneseq
    %v1867 = vshrl.u32 %v1866, 7
    %v1868 = vsub.s32 2, %v1867
    %v1869 = vrot.slane %v1856, %v1868
    %v1870 = vlaneseq
    %v1871 = vshrl.u32 %v1870, 7
    %v1872 = vsub.s32 3, %v1871
    %v1873 = vrot.slane %v1856, %v1872
    %v1874 = vlaneseq
    %v1875 = vshrl.u32 %v1874, 7
    %v1876 = vsub.s32 4, %v1875
    %v1877 = vrot.slane %v1856, %v1876
    %v1878 = vlaneseq
    %v1879 = vshrl.u32 %v1878, 7
    %v1880 = vsub.s32 5, %v1879
    %v1881 = vrot.slane %v1856, %v1880
    %v1882 = vlaneseq
    %v1883 = vshrl.u32 %v1882, 7
    %v1884 = vsub.s32 6, %v1883
    %v1885 = vrot.slane %v1856, %v1884
    %v1886 = vlaneseq
    %v1887 = vshrl.u32 %v1886, 7
    %v1888 = vsub.s32 7, %v1887
    %v1889 = vrot.slane %v1856, %v1888
    %v1898 = vrcp.pop %v1861
    %v1899 = vmul.f32 %v1679, %v1898
    %v1900 = vmul.f32 %v1681, %v1898
    %v1901 = vrcp.pop %v1865
    %v1902 = vmul.f32 %v1683, %v1901
    %v1903 = vmul.f32 %v1685, %v1901
    %v1904 = vrcp.pop %v1869
    %v1905 = vmul.f32 %v1687, %v1904
    %v1906 = vmul.f32 %v1689, %v1904
    %v1907 = vrcp.pop %v1873
    %v1908 = vmul.f32 %v1691, %v1907
    %v1909 = vmul.f32 %v1693, %v1907
    %v1910 = vrcp.pop %v1877
    %v1911 = vmul.f32 %v1695, %v1910
    %v1912 = vmul.f32 %v1697, %v1910
    %v1913 = vrcp.pop %v1881
    %v1914 = vmul.f32 %v1699, %v1913
    %v1915 = vmul.f32 %v1701, %v1913
    %v1916 = vrcp.pop %v1885
    %v1917 = vmul.f32 %v1703, %v1916
    %v1918 = vmul.f32 %v1705, %v1916
    %v1919 = vrcp.pop %v1889
    %v1920 = vmul.f32 %v1707, %v1919
    %v1921 = vmul.f32 %v1709, %v1919
    %1923 = vset.pattern.permute.xlu0 0
    %1924 = vperm.xlu0 %1923, %v1899
    %v1925 = vpop.permute.xlu0 %1924
    %1928 = vset.pattern.permute.xlu0 0
    %1929 = vperm.xlu0 %1928, %v1900
    %v1930 = vpop.permute.xlu0 %1929
    %1933 = vset.pattern.permute.xlu0 0
    %1934 = vperm.xlu0 %1933, %v1902
    %v1935 = vpop.permute.xlu0 %1934
    %1938 = vset.pattern.permute.xlu0 0
    %1939 = vperm.xlu0 %1938, %v1903
    %v1940 = vpop.permute.xlu0 %1939
    %1943 = vset.pattern.permute.xlu0 0
    %1944 = vperm.xlu0 %1943, %v1905
    %v1945 = vpop.permute.xlu0 %1944
    %1948 = vset.pattern.permute.xlu0 0
    %1949 = vperm.xlu0 %1948, %v1906
    %v1950 = vpop.permute.xlu0 %1949
    %1953 = vset.pattern.permute.xlu0 0
    %1954 = vperm.xlu0 %1953, %v1908
    %v1955 = vpop.permute.xlu0 %1954
    %1958 = vset.pattern.permute.xlu0 0
    %1959 = vperm.xlu0 %1958, %v1909
    %v1960 = vpop.permute.xlu0 %1959
    %1963 = vset.pattern.permute.xlu0 0
    %1964 = vperm.xlu0 %1963, %v1911
    %v1965 = vpop.permute.xlu0 %1964
    %1968 = vset.pattern.permute.xlu0 0
    %1969 = vperm.xlu0 %1968, %v1912
    %v1970 = vpop.permute.xlu0 %1969
    %1973 = vset.pattern.permute.xlu0 0
    %1974 = vperm.xlu0 %1973, %v1914
    %v1975 = vpop.permute.xlu0 %1974
    %1978 = vset.pattern.permute.xlu0 0
    %1979 = vperm.xlu0 %1978, %v1915
    %v1980 = vpop.permute.xlu0 %1979
    %1983 = vset.pattern.permute.xlu0 0
    %1984 = vperm.xlu0 %1983, %v1917
    %v1985 = vpop.permute.xlu0 %1984
    %1988 = vset.pattern.permute.xlu0 0
    %1989 = vperm.xlu0 %1988, %v1918
    %v1990 = vpop.permute.xlu0 %1989
    %1993 = vset.pattern.permute.xlu0 0
    %1994 = vperm.xlu0 %1993, %v1920
    %v1995 = vpop.permute.xlu0 %1994
    %1998 = vset.pattern.permute.xlu0 0
    %1999 = vperm.xlu0 %1998, %v1921
    %v2000 = vpop.permute.xlu0 %1999
    %v2002 = vmul.f32 %v1925, %v43
    %v2003 = vmul.f32 %v1930, %v44
    %v2004 = vmul.f32 %v1935, %v45
    %v2005 = vmul.f32 %v1940, %v46
    %v2006 = vmul.f32 %v1945, %v47
    %v2007 = vmul.f32 %v1950, %v48
    %v2008 = vmul.f32 %v1955, %v49
    %v2009 = vmul.f32 %v1960, %v50
    %v2010 = vmul.f32 %v1965, %v51
    %v2011 = vmul.f32 %v1970, %v52
    %v2012 = vmul.f32 %v1975, %v53
    %v2013 = vmul.f32 %v1980, %v54
    %v2014 = vmul.f32 %v1985, %v55
    %v2015 = vmul.f32 %v1990, %v56
    %v2016 = vmul.f32 %v1995, %v57
    %v2017 = vmul.f32 %v2000, %v58
    %v2018 = vadd.f32 %v2002, %v2003
    %v2019 = vrot.slane %v2018, 4
    %v2020 = vadd.f32 %v2018, %v2019
    %v2021 = vrot.slane %v2020, 2
    %v2022 = vadd.f32 %v2020, %v2021
    %v2023 = vrot.slane %v2022, 1
    %v2024 = vadd.f32 %v2022, %v2023
    %v2025 = vadd.f32 %v2004, %v2005
    %v2026 = vrot.slane %v2025, 4
    %v2027 = vadd.f32 %v2025, %v2026
    %v2028 = vrot.slane %v2027, 2
    %v2029 = vadd.f32 %v2027, %v2028
    %v2030 = vrot.slane %v2029, 1
    %v2031 = vadd.f32 %v2029, %v2030
    %v2032 = vadd.f32 %v2006, %v2007
    %v2033 = vrot.slane %v2032, 4
    %v2034 = vadd.f32 %v2032, %v2033
    %v2035 = vrot.slane %v2034, 2
    %v2036 = vadd.f32 %v2034, %v2035
    %v2037 = vrot.slane %v2036, 1
    %v2038 = vadd.f32 %v2036, %v2037
    %v2039 = vadd.f32 %v2008, %v2009
    %v2040 = vrot.slane %v2039, 4
    %v2041 = vadd.f32 %v2039, %v2040
    %v2042 = vrot.slane %v2041, 2
    %v2043 = vadd.f32 %v2041, %v2042
    %v2044 = vrot.slane %v2043, 1
    %v2045 = vadd.f32 %v2043, %v2044
    %v2046 = vadd.f32 %v2010, %v2011
    %v2047 = vrot.slane %v2046, 4
    %v2048 = vadd.f32 %v2046, %v2047
    %v2049 = vrot.slane %v2048, 2
    %v2050 = vadd.f32 %v2048, %v2049
    %v2051 = vrot.slane %v2050, 1
    %v2052 = vadd.f32 %v2050, %v2051
    %v2053 = vadd.f32 %v2012, %v2013
    %v2054 = vrot.slane %v2053, 4
    %v2055 = vadd.f32 %v2053, %v2054
    %v2056 = vrot.slane %v2055, 2
    %v2057 = vadd.f32 %v2055, %v2056
    %v2058 = vrot.slane %v2057, 1
    %v2059 = vadd.f32 %v2057, %v2058
    %v2060 = vadd.f32 %v2014, %v2015
    %v2061 = vrot.slane %v2060, 4
    %v2062 = vadd.f32 %v2060, %v2061
    %v2063 = vrot.slane %v2062, 2
    %v2064 = vadd.f32 %v2062, %v2063
    %v2065 = vrot.slane %v2064, 1
    %v2066 = vadd.f32 %v2064, %v2065
    %v2067 = vadd.f32 %v2016, %v2017
    %v2068 = vrot.slane %v2067, 4
    %v2069 = vadd.f32 %v2067, %v2068
    %v2070 = vrot.slane %v2069, 2
    %v2071 = vadd.f32 %v2069, %v2070
    %v2072 = vrot.slane %v2071, 1
    %v2073 = vadd.f32 %v2071, %v2072
    %v2074 = vadd.f32 %v2024, %v1059
    %v2075 = vadd.f32 %v2031, %v1060
    %v2076 = vadd.f32 %v2038, %v1061
    %v2077 = vadd.f32 %v2045, %v1062
    %v2078 = vadd.f32 %v2052, %v1063
    %v2079 = vadd.f32 %v2059, %v1064
    %v2080 = vadd.f32 %v2066, %v1065
    %v2081 = vadd.f32 %v2073, %v1066
    %v2090 = vrot.slane %v2075, 7
    %v2091 = vsel %vm571, %v2090, %v2074
    %v2092 = vrot.slane %v2076, 6
    %v2093 = vsel %vm573, %v2092, %v2091
    %v2094 = vrot.slane %v2077, 5
    %v2095 = vsel %vm575, %v2094, %v2093
    %v2096 = vrot.slane %v2078, 4
    %v2097 = vsel %vm577, %v2096, %v2095
    %v2098 = vrot.slane %v2079, 3
    %v2099 = vsel %vm579, %v2098, %v2097
    %v2100 = vrot.slane %v2080, 2
    %v2101 = vsel %vm581, %v2100, %v2099
    %v2102 = vrot.slane %v2081, 1
    %v2103 = vsel %vm583, %v2102, %v2101
    %2105 = vst [vmem:[%s8] sm:$0xff] %v2103
    // Predicated region
    $region38: #{san_forward.8} parent=1 // pred_check
      _
    $region39: #{san_forward.8} parent=1 // pred_check_branch
      %2107 = sbr.rel (0) target = $region41
    $region40: #{san_forward.8} parent=1 // pred_region
      _
    $region41: #{san_forward.8} parent=1 // pred_fallthru
      _
    // Predicated region
    $region42: #{san_forward.8} parent=1 // pred_check
      _
    $region43: #{san_forward.8} parent=1 // pred_check_branch
      %2109 = sbr.rel (0) target = $region45
    $region44: #{san_forward.8} parent=1 // pred_region
      _
    $region45: #{san_forward.8} parent=1 // pred_fallthru
      _
    %2110 = vsyncpa [#allocation3], 1

</llo_original>
